<compile_context>
chip_gen: v6e
topology: v6e:2x2x1
jax: 0.10.0
libtpu: 0.0.40
codegen_flags: <defaults>
</compile_context>

<pallas_src>
import jax
import jax.numpy as jnp
from jax.experimental import pallas as pl
from jax.experimental.pallas import tpu as pltpu


B = 2                 # batch
H = W = 8             # spatial dims of the smashed activation
C_IN = 8              # channels arriving at the server
C1, C2, C3 = 16, 16, 8
PO = 3                # MaxPool(3, stride=2) on 8x8 -> 3x3 (floor mode)
F_IN = C3 * PO * PO   # 72
N1, N2, N_OUT = 32, 32, 10


# ----------------------------------------------------------------------------
# Fused Pallas kernel: conv1 -> conv2 -> conv3 -> maxpool -> flatten -> fc1/2/3
# ----------------------------------------------------------------------------
def fused_server_kernel(x_ref,
                        w1_ref, b1_ref, w2_ref, b2_ref, w3_ref, b3_ref,
                        fw1_ref, fb1_ref, fw2_ref, fb2_ref, fw3_ref, fb3_ref,
                        o_ref,
                        pad8_ref, pad16_ref):
    """x_ref: [B,H,W,C_IN] NHWC.  conv weights: im2col [9*cin, cout].
    fc weights: [fin, fout] (fc1 rows pre-permuted to (h,w,c) order).
    biases: [1, cout].  o_ref: [B, 10].  pad*_ref: [B,H+2,W+2,c] halo scratch.
    """
    # Zero the halo buffers once; interiors are fully overwritten before every
    # conv and the 1-pixel halo ring is never touched again, so it stays zero.
    pad8_ref[...] = jnp.zeros_like(pad8_ref)
    pad16_ref[...] = jnp.zeros_like(pad16_ref)

    def conv3x3_relu(pad_ref, act, w_ref, b_ref):
        cin = act.shape[-1]
        # Write interior of the padded scratch (same padding = 1).
        pad_ref[:, 1:H + 1, 1:W + 1, :] = act
        # im2col: 9 shifted views -> one [B*H*W, 9*cin] LHS, one MXU matmul.
        taps = []
        for dy in range(3):
            for dx in range(3):
                taps.append(
                    pad_ref[:, dy:dy + H, dx:dx + W, :].reshape(B * H * W, cin))
        patches = jnp.concatenate(taps, axis=1)              # [128, 9*cin]
        y = jnp.dot(patches, w_ref[...],
                    preferred_element_type=jnp.float32) + b_ref[...]
        y = jnp.maximum(y, 0.0)                              # ReLU
        return y.reshape(B, H, W, -1)

    a = x_ref[...]                                           # [B, 8, 8, 8]
    a = conv3x3_relu(pad8_ref, a, w1_ref, b1_ref)            # [B, 8, 8, 16]
    a = conv3x3_relu(pad16_ref, a, w2_ref, b2_ref)           # [B, 8, 8, 16]
    a = conv3x3_relu(pad16_ref, a, w3_ref, b3_ref)           # [B, 8, 8, 8]

    # MaxPool2d(kernel_size=3, stride=2): 8x8 -> 3x3, flattened in (h, w, c)
    # order; the fc1 weight rows were pre-permuted to match PyTorch's NCHW
    # (c, h, w) flatten order, so no in-kernel transpose is required.
    cells = []
    for i in range(PO):
        for j in range(PO):
            win = a[:, 2 * i:2 * i + 3, 2 * j:2 * j + 3, :]  # [B, 3, 3, C3]
            cells.append(jnp.max(win, axis=(1, 2)))          # [B, C3]
    flat = jnp.concatenate(cells, axis=1)                    # [B, 72]

    # classifier
    # TODO(synk): nn.Dropout layers are identity in eval mode; training-mode
    # stochastic dropout is intentionally not modeled here.
    h = jnp.dot(flat, fw1_ref[...], preferred_element_type=jnp.float32) + fb1_ref[...]
    h = jnp.maximum(h, 0.0)
    h = jnp.dot(h, fw2_ref[...], preferred_element_type=jnp.float32) + fb2_ref[...]
    h = jnp.maximum(h, 0.0)
    o_ref[...] = (jnp.dot(h, fw3_ref[...], preferred_element_type=jnp.float32)
                  + fb3_ref[...])


# ----------------------------------------------------------------------------
# Wrapper: single pallas_call, no grid (whole problem fits one invocation)
# ----------------------------------------------------------------------------
def server_model_forward(x_nchw, params):
    # NCHW -> NHWC (channels on the lane axis); the only wrapper-side op.
    x = jnp.transpose(x_nchw, (0, 2, 3, 1)).astype(jnp.float32)
    return pl.pallas_call(
        fused_server_kernel,
        out_shape=jax.ShapeDtypeStruct((B, N_OUT), jnp.float32),
        scratch_shapes=[
            pltpu.VMEM((B, H + 2, W + 2, C_IN), jnp.float32),  # conv1 halo buf
            pltpu.VMEM((B, H + 2, W + 2, C1), jnp.float32),    # conv2/3 halo buf
        ],
    )(x,
      params["conv1_w"], params["conv1_b"],
      params["conv2_w"], params["conv2_b"],
      params["conv3_w"], params["conv3_b"],
      params["fc1_w"], params["fc1_b"],
      params["fc2_w"], params["fc2_b"],
      params["fc3_w"], params["fc3_b"])


# ----------------------------------------------------------------------------
# Deterministic parameter construction (PyTorch layouts -> kernel layouts)
# ----------------------------------------------------------------------------
def init_params(key):
    def conv_w(k, cin, cout):
        # PyTorch layout [cout, cin, 3, 3] -> im2col layout [9*cin, cout]
        # with row index (dy*3 + dx)*cin + ci (matches the kernel's tap order).
        w = jax.random.normal(k, (cout, cin, 3, 3), jnp.float32) * 0.1
        return jnp.transpose(w, (2, 3, 1, 0)).reshape(9 * cin, cout)

    def lin_w(k, fin, fout):
        # PyTorch Linear stores [fout, fin]; kernel uses [fin, fout].
        w = jax.random.normal(k, (fout, fin), jnp.float32) * 0.1
        return jnp.transpose(w, (1, 0))

    ks = jax.random.split(key, 12)

    # fc1: rows are in PyTorch NCHW-flatten order (c*9 + i*3 + j); permute to
    # the kernel's (h, w, c) flatten order ((i*3 + j)*C3 + c). Trace-time only.
    fc1 = lin_w(ks[6], F_IN, N1)
    fc1 = fc1.reshape(C3, PO, PO, N1).transpose(1, 2, 0, 3).reshape(F_IN, N1)

    return {
        "conv1_w": conv_w(ks[0], C_IN, C1),
        "conv1_b": jax.random.normal(ks[1], (1, C1), jnp.float32) * 0.1,
        "conv2_w": conv_w(ks[2], C1, C2),
        "conv2_b": jax.random.normal(ks[3], (1, C2), jnp.float32) * 0.1,
        "conv3_w": conv_w(ks[4], C2, C3),
        "conv3_b": jax.random.normal(ks[5], (1, C3), jnp.float32) * 0.1,
        "fc1_w": fc1,
        "fc1_b": jax.random.normal(ks[7], (1, N1), jnp.float32) * 0.1,
        "fc2_w": lin_w(ks[8], N1, N2),
        "fc2_b": jax.random.normal(ks[9], (1, N2), jnp.float32) * 0.1,
        "fc3_w": lin_w(ks[10], N2, N_OUT),
        "fc3_b": jax.random.normal(ks[11], (1, N_OUT), jnp.float32) * 0.1,
    }


if __name__ == "__main__":
    key = jax.random.PRNGKey(0)
    k_x, k_p = jax.random.split(key)

    # Smashed activations arriving at the server: NCHW [B=2, C=8, H=8, W=8].
    x = jax.random.normal(k_x, (B, C_IN, H, W), jnp.float32)
    params = init_params(k_p)

    out = jax.jit(server_model_forward)(x, params)
    out = jax.block_until_ready(out)
    assert out.shape == (B, N_OUT), out.shape
    assert bool(jnp.all(jnp.isfinite(out)))
    print("KERNEL_OK")
</pallas_src>

<mosaic_0001>
module attributes {stable_mosaic.version = 11 : i64} {
  func.func @fused_server_kernel(%arg0: memref<2x8x8x8xf32, #tpu.memory_space<vmem>>, %arg1: memref<72x16xf32, #tpu.memory_space<vmem>>, %arg2: memref<1x16xf32, #tpu.memory_space<vmem>>, %arg3: memref<144x16xf32, #tpu.memory_space<vmem>>, %arg4: memref<1x16xf32, #tpu.memory_space<vmem>>, %arg5: memref<144x8xf32, #tpu.memory_space<vmem>>, %arg6: memref<1x8xf32, #tpu.memory_space<vmem>>, %arg7: memref<72x32xf32, #tpu.memory_space<vmem>>, %arg8: memref<1x32xf32, #tpu.memory_space<vmem>>, %arg9: memref<32x32xf32, #tpu.memory_space<vmem>>, %arg10: memref<1x32xf32, #tpu.memory_space<vmem>>, %arg11: memref<32x10xf32, #tpu.memory_space<vmem>>, %arg12: memref<1x10xf32, #tpu.memory_space<vmem>>, %arg13: memref<2x10xf32, #tpu.memory_space<vmem>>, %arg14: memref<2x10x10x8xf32, #tpu.memory_space<vmem>>, %arg15: memref<2x10x10x16xf32, #tpu.memory_space<vmem>>) attributes {dimension_semantics = [], scalar_prefetch = 0 : i64, scratch_operands = 2 : i64, tpu.core_type = #tpu.core_type<tc>} {
    %cst = arith.constant 0.000000e+00 : f32
    %0 = vector.broadcast %cst : f32 to vector<2x10x10x8xf32>
    %c0 = arith.constant 0 : index
    %c0_0 = arith.constant 0 : index
    %c0_1 = arith.constant 0 : index
    %c0_2 = arith.constant 0 : index
    %1 = vector.load %arg14[%c0, %c0_0, %c0_1, %c0_2] : memref<2x10x10x8xf32, #tpu.memory_space<vmem>>, vector<2x10x10x8xf32>
    tpu.vector_store %arg14[%c0, %c0_0, %c0_1, %c0_2], %0 {strides = array<i32>} : memref<2x10x10x8xf32, #tpu.memory_space<vmem>>, vector<2x10x10x8xf32>,
    %cst_3 = arith.constant 0.000000e+00 : f32
    %2 = vector.broadcast %cst_3 : f32 to vector<2x10x10x16xf32>
    %c0_4 = arith.constant 0 : index
    %c0_5 = arith.constant 0 : index
    %c0_6 = arith.constant 0 : index
    %c0_7 = arith.constant 0 : index
    %3 = vector.load %arg15[%c0_4, %c0_5, %c0_6, %c0_7] : memref<2x10x10x16xf32, #tpu.memory_space<vmem>>, vector<2x10x10x16xf32>
    tpu.vector_store %arg15[%c0_4, %c0_5, %c0_6, %c0_7], %2 {strides = array<i32>} : memref<2x10x10x16xf32, #tpu.memory_space<vmem>>, vector<2x10x10x16xf32>,
    %c0_8 = arith.constant 0 : index
    %c0_9 = arith.constant 0 : index
    %c0_10 = arith.constant 0 : index
    %c0_11 = arith.constant 0 : index
    %4 = vector.load %arg0[%c0_8, %c0_9, %c0_10, %c0_11] : memref<2x8x8x8xf32, #tpu.memory_space<vmem>>, vector<2x8x8x8xf32>
    %c0_12 = arith.constant 0 : index
    %c1 = arith.constant 1 : index
    %c1_13 = arith.constant 1 : index
    %c0_14 = arith.constant 0 : index
    %5 = vector.load %arg14[%c0_12, %c1, %c1_13, %c0_14] : memref<2x10x10x8xf32, #tpu.memory_space<vmem>>, vector<2x8x8x8xf32>
    tpu.vector_store %arg14[%c0_12, %c1, %c1_13, %c0_14], %4 {strides = array<i32>} : memref<2x10x10x8xf32, #tpu.memory_space<vmem>>, vector<2x8x8x8xf32>,
    %c0_15 = arith.constant 0 : index
    %c0_16 = arith.constant 0 : index
    %c0_17 = arith.constant 0 : index
    %c0_18 = arith.constant 0 : index
    %6 = vector.load %arg14[%c0_15, %c0_16, %c0_17, %c0_18] : memref<2x10x10x8xf32, #tpu.memory_space<vmem>>, vector<2x8x8x8xf32>
    %7 = vector.shape_cast %6 : vector<2x8x8x8xf32> to vector<128x8xf32>
    %c0_19 = arith.constant 0 : index
    %c0_20 = arith.constant 0 : index
    %c1_21 = arith.constant 1 : index
    %c0_22 = arith.constant 0 : index
    %8 = vector.load %arg14[%c0_19, %c0_20, %c1_21, %c0_22] : memref<2x10x10x8xf32, #tpu.memory_space<vmem>>, vector<2x8x8x8xf32>
    %9 = vector.shape_cast %8 : vector<2x8x8x8xf32> to vector<128x8xf32>
    %c0_23 = arith.constant 0 : index
    %c0_24 = arith.constant 0 : index
    %c2 = arith.constant 2 : index
    %c0_25 = arith.constant 0 : index
    %10 = vector.load %arg14[%c0_23, %c0_24, %c2, %c0_25] : memref<2x10x10x8xf32, #tpu.memory_space<vmem>>, vector<2x8x8x8xf32>
    %11 = vector.shape_cast %10 : vector<2x8x8x8xf32> to vector<128x8xf32>
    %c0_26 = arith.constant 0 : index
    %c1_27 = arith.constant 1 : index
    %c0_28 = arith.constant 0 : index
    %c0_29 = arith.constant 0 : index
    %12 = vector.load %arg14[%c0_26, %c1_27, %c0_28, %c0_29] : memref<2x10x10x8xf32, #tpu.memory_space<vmem>>, vector<2x8x8x8xf32>
    %13 = vector.shape_cast %12 : vector<2x8x8x8xf32> to vector<128x8xf32>
    %c0_30 = arith.constant 0 : index
    %c1_31 = arith.constant 1 : index
    %c1_32 = arith.constant 1 : index
    %c0_33 = arith.constant 0 : index
    %14 = vector.load %arg14[%c0_30, %c1_31, %c1_32, %c0_33] : memref<2x10x10x8xf32, #tpu.memory_space<vmem>>, vector<2x8x8x8xf32>
    %15 = vector.shape_cast %14 : vector<2x8x8x8xf32> to vector<128x8xf32>
    %c0_34 = arith.constant 0 : index
    %c1_35 = arith.constant 1 : index
    %c2_36 = arith.constant 2 : index
    %c0_37 = arith.constant 0 : index
    %16 = vector.load %arg14[%c0_34, %c1_35, %c2_36, %c0_37] : memref<2x10x10x8xf32, #tpu.memory_space<vmem>>, vector<2x8x8x8xf32>
    %17 = vector.shape_cast %16 : vector<2x8x8x8xf32> to vector<128x8xf32>
    %c0_38 = arith.constant 0 : index
    %c2_39 = arith.constant 2 : index
    %c0_40 = arith.constant 0 : index
    %c0_41 = arith.constant 0 : index
    %18 = vector.load %arg14[%c0_38, %c2_39, %c0_40, %c0_41] : memref<2x10x10x8xf32, #tpu.memory_space<vmem>>, vector<2x8x8x8xf32>
    %19 = vector.shape_cast %18 : vector<2x8x8x8xf32> to vector<128x8xf32>
    %c0_42 = arith.constant 0 : index
    %c2_43 = arith.constant 2 : index
    %c1_44 = arith.constant 1 : index
    %c0_45 = arith.constant 0 : index
    %20 = vector.load %arg14[%c0_42, %c2_43, %c1_44, %c0_45] : memref<2x10x10x8xf32, #tpu.memory_space<vmem>>, vector<2x8x8x8xf32>
    %21 = vector.shape_cast %20 : vector<2x8x8x8xf32> to vector<128x8xf32>
    %c0_46 = arith.constant 0 : index
    %c2_47 = arith.constant 2 : index
    %c2_48 = arith.constant 2 : index
    %c0_49 = arith.constant 0 : index
    %22 = vector.load %arg14[%c0_46, %c2_47, %c2_48, %c0_49] : memref<2x10x10x8xf32, #tpu.memory_space<vmem>>, vector<2x8x8x8xf32>
    %23 = vector.shape_cast %22 : vector<2x8x8x8xf32> to vector<128x8xf32>
    %24 = tpu.concatenate %7, %9, %11, %13, %15, %17, %19, %21, %23 in 1 : vector<128x8xf32>, vector<128x8xf32>, vector<128x8xf32>, vector<128x8xf32>, vector<128x8xf32>, vector<128x8xf32>, vector<128x8xf32>, vector<128x8xf32>, vector<128x8xf32> -> vector<128x72xf32>
    %c0_50 = arith.constant 0 : index
    %c0_51 = arith.constant 0 : index
    %25 = vector.load %arg1[%c0_50, %c0_51] : memref<72x16xf32, #tpu.memory_space<vmem>>, vector<72x16xf32>
    %cst_52 = arith.constant dense<0.000000e+00> : vector<128x16xf32>
    %26 = tpu.matmul %24, %25, %cst_52 {dimension_numbers = #tpu.dot_dimension_numbers<[1], [0], [0], [1], [0, 0, 1, 1], [], []>} : vector<128x72xf32>, vector<72x16xf32>, vector<128x16xf32> -> vector<128x16xf32>
    %c0_53 = arith.constant 0 : index
    %c0_54 = arith.constant 0 : index
    %27 = vector.load %arg2[%c0_53, %c0_54] : memref<1x16xf32, #tpu.memory_space<vmem>>, vector<1x16xf32>
    %28 = vector.broadcast %27 : vector<1x16xf32> to vector<128x16xf32>
    %29 = arith.addf %26, %28 : vector<128x16xf32>
    %cst_55 = arith.constant 0.000000e+00 : f32
    %30 = vector.broadcast %cst_55 : f32 to vector<128x16xf32>
    %31 = arith.maximumf %29, %30 : vector<128x16xf32>
    %32 = vector.shape_cast %31 : vector<128x16xf32> to vector<2x8x8x16xf32>
    %c0_56 = arith.constant 0 : index
    %c1_57 = arith.constant 1 : index
    %c1_58 = arith.constant 1 : index
    %c0_59 = arith.constant 0 : index
    %33 = vector.load %arg15[%c0_56, %c1_57, %c1_58, %c0_59] : memref<2x10x10x16xf32, #tpu.memory_space<vmem>>, vector<2x8x8x16xf32>
    tpu.vector_store %arg15[%c0_56, %c1_57, %c1_58, %c0_59], %32 {strides = array<i32>} : memref<2x10x10x16xf32, #tpu.memory_space<vmem>>, vector<2x8x8x16xf32>,
    %c0_60 = arith.constant 0 : index
    %c0_61 = arith.constant 0 : index
    %c0_62 = arith.constant 0 : index
    %c0_63 = arith.constant 0 : index
    %34 = vector.load %arg15[%c0_60, %c0_61, %c0_62, %c0_63] : memref<2x10x10x16xf32, #tpu.memory_space<vmem>>, vector<2x8x8x16xf32>
    %35 = vector.shape_cast %34 : vector<2x8x8x16xf32> to vector<128x16xf32>
    %c0_64 = arith.constant 0 : index
    %c0_65 = arith.constant 0 : index
    %c1_66 = arith.constant 1 : index
    %c0_67 = arith.constant 0 : index
    %36 = vector.load %arg15[%c0_64, %c0_65, %c1_66, %c0_67] : memref<2x10x10x16xf32, #tpu.memory_space<vmem>>, vector<2x8x8x16xf32>
    %37 = vector.shape_cast %36 : vector<2x8x8x16xf32> to vector<128x16xf32>
    %c0_68 = arith.constant 0 : index
    %c0_69 = arith.constant 0 : index
    %c2_70 = arith.constant 2 : index
    %c0_71 = arith.constant 0 : index
    %38 = vector.load %arg15[%c0_68, %c0_69, %c2_70, %c0_71] : memref<2x10x10x16xf32, #tpu.memory_space<vmem>>, vector<2x8x8x16xf32>
    %39 = vector.shape_cast %38 : vector<2x8x8x16xf32> to vector<128x16xf32>
    %c0_72 = arith.constant 0 : index
    %c1_73 = arith.constant 1 : index
    %c0_74 = arith.constant 0 : index
    %c0_75 = arith.constant 0 : index
    %40 = vector.load %arg15[%c0_72, %c1_73, %c0_74, %c0_75] : memref<2x10x10x16xf32, #tpu.memory_space<vmem>>, vector<2x8x8x16xf32>
    %41 = vector.shape_cast %40 : vector<2x8x8x16xf32> to vector<128x16xf32>
    %c0_76 = arith.constant 0 : index
    %c1_77 = arith.constant 1 : index
    %c1_78 = arith.constant 1 : index
    %c0_79 = arith.constant 0 : index
    %42 = vector.load %arg15[%c0_76, %c1_77, %c1_78, %c0_79] : memref<2x10x10x16xf32, #tpu.memory_space<vmem>>, vector<2x8x8x16xf32>
    %43 = vector.shape_cast %42 : vector<2x8x8x16xf32> to vector<128x16xf32>
    %c0_80 = arith.constant 0 : index
    %c1_81 = arith.constant 1 : index
    %c2_82 = arith.constant 2 : index
    %c0_83 = arith.constant 0 : index
    %44 = vector.load %arg15[%c0_80, %c1_81, %c2_82, %c0_83] : memref<2x10x10x16xf32, #tpu.memory_space<vmem>>, vector<2x8x8x16xf32>
    %45 = vector.shape_cast %44 : vector<2x8x8x16xf32> to vector<128x16xf32>
    %c0_84 = arith.constant 0 : index
    %c2_85 = arith.constant 2 : index
    %c0_86 = arith.constant 0 : index
    %c0_87 = arith.constant 0 : index
    %46 = vector.load %arg15[%c0_84, %c2_85, %c0_86, %c0_87] : memref<2x10x10x16xf32, #tpu.memory_space<vmem>>, vector<2x8x8x16xf32>
    %47 = vector.shape_cast %46 : vector<2x8x8x16xf32> to vector<128x16xf32>
    %c0_88 = arith.constant 0 : index
    %c2_89 = arith.constant 2 : index
    %c1_90 = arith.constant 1 : index
    %c0_91 = arith.constant 0 : index
    %48 = vector.load %arg15[%c0_88, %c2_89, %c1_90, %c0_91] : memref<2x10x10x16xf32, #tpu.memory_space<vmem>>, vector<2x8x8x16xf32>
    %49 = vector.shape_cast %48 : vector<2x8x8x16xf32> to vector<128x16xf32>
    %c0_92 = arith.constant 0 : index
    %c2_93 = arith.constant 2 : index
    %c2_94 = arith.constant 2 : index
    %c0_95 = arith.constant 0 : index
    %50 = vector.load %arg15[%c0_92, %c2_93, %c2_94, %c0_95] : memref<2x10x10x16xf32, #tpu.memory_space<vmem>>, vector<2x8x8x16xf32>
    %51 = vector.shape_cast %50 : vector<2x8x8x16xf32> to vector<128x16xf32>
    %52 = tpu.concatenate %35, %37, %39, %41, %43, %45, %47, %49, %51 in 1 : vector<128x16xf32>, vector<128x16xf32>, vector<128x16xf32>, vector<128x16xf32>, vector<128x16xf32>, vector<128x16xf32>, vector<128x16xf32>, vector<128x16xf32>, vector<128x16xf32> -> vector<128x144xf32>
    %c0_96 = arith.constant 0 : index
    %c0_97 = arith.constant 0 : index
    %53 = vector.load %arg3[%c0_96, %c0_97] : memref<144x16xf32, #tpu.memory_space<vmem>>, vector<144x16xf32>
    %cst_98 = arith.constant dense<0.000000e+00> : vector<128x16xf32>
    %54 = tpu.matmul %52, %53, %cst_98 {dimension_numbers = #tpu.dot_dimension_numbers<[1], [0], [0], [1], [0, 0, 1, 1], [], []>} : vector<128x144xf32>, vector<144x16xf32>, vector<128x16xf32> -> vector<128x16xf32>
    %c0_99 = arith.constant 0 : index
    %c0_100 = arith.constant 0 : index
    %55 = vector.load %arg4[%c0_99, %c0_100] : memref<1x16xf32, #tpu.memory_space<vmem>>, vector<1x16xf32>
    %56 = vector.broadcast %55 : vector<1x16xf32> to vector<128x16xf32>
    %57 = arith.addf %54, %56 : vector<128x16xf32>
    %cst_101 = arith.constant 0.000000e+00 : f32
    %58 = vector.broadcast %cst_101 : f32 to vector<128x16xf32>
    %59 = arith.maximumf %57, %58 : vector<128x16xf32>
    %60 = vector.shape_cast %59 : vector<128x16xf32> to vector<2x8x8x16xf32>
    %c0_102 = arith.constant 0 : index
    %c1_103 = arith.constant 1 : index
    %c1_104 = arith.constant 1 : index
    %c0_105 = arith.constant 0 : index
    %61 = vector.load %arg15[%c0_102, %c1_103, %c1_104, %c0_105] : memref<2x10x10x16xf32, #tpu.memory_space<vmem>>, vector<2x8x8x16xf32>
    tpu.vector_store %arg15[%c0_102, %c1_103, %c1_104, %c0_105], %60 {strides = array<i32>} : memref<2x10x10x16xf32, #tpu.memory_space<vmem>>, vector<2x8x8x16xf32>,
    %c0_106 = arith.constant 0 : index
    %c0_107 = arith.constant 0 : index
    %c0_108 = arith.constant 0 : index
    %c0_109 = arith.constant 0 : index
    %62 = vector.load %arg15[%c0_106, %c0_107, %c0_108, %c0_109] : memref<2x10x10x16xf32, #tpu.memory_space<vmem>>, vector<2x8x8x16xf32>
    %63 = vector.shape_cast %62 : vector<2x8x8x16xf32> to vector<128x16xf32>
    %c0_110 = arith.constant 0 : index
    %c0_111 = arith.constant 0 : index
    %c1_112 = arith.constant 1 : index
    %c0_113 = arith.constant 0 : index
    %64 = vector.load %arg15[%c0_110, %c0_111, %c1_112, %c0_113] : memref<2x10x10x16xf32, #tpu.memory_space<vmem>>, vector<2x8x8x16xf32>
    %65 = vector.shape_cast %64 : vector<2x8x8x16xf32> to vector<128x16xf32>
    %c0_114 = arith.constant 0 : index
    %c0_115 = arith.constant 0 : index
    %c2_116 = arith.constant 2 : index
    %c0_117 = arith.constant 0 : index
    %66 = vector.load %arg15[%c0_114, %c0_115, %c2_116, %c0_117] : memref<2x10x10x16xf32, #tpu.memory_space<vmem>>, vector<2x8x8x16xf32>
    %67 = vector.shape_cast %66 : vector<2x8x8x16xf32> to vector<128x16xf32>
    %c0_118 = arith.constant 0 : index
    %c1_119 = arith.constant 1 : index
    %c0_120 = arith.constant 0 : index
    %c0_121 = arith.constant 0 : index
    %68 = vector.load %arg15[%c0_118, %c1_119, %c0_120, %c0_121] : memref<2x10x10x16xf32, #tpu.memory_space<vmem>>, vector<2x8x8x16xf32>
    %69 = vector.shape_cast %68 : vector<2x8x8x16xf32> to vector<128x16xf32>
    %c0_122 = arith.constant 0 : index
    %c1_123 = arith.constant 1 : index
    %c1_124 = arith.constant 1 : index
    %c0_125 = arith.constant 0 : index
    %70 = vector.load %arg15[%c0_122, %c1_123, %c1_124, %c0_125] : memref<2x10x10x16xf32, #tpu.memory_space<vmem>>, vector<2x8x8x16xf32>
    %71 = vector.shape_cast %70 : vector<2x8x8x16xf32> to vector<128x16xf32>
    %c0_126 = arith.constant 0 : index
    %c1_127 = arith.constant 1 : index
    %c2_128 = arith.constant 2 : index
    %c0_129 = arith.constant 0 : index
    %72 = vector.load %arg15[%c0_126, %c1_127, %c2_128, %c0_129] : memref<2x10x10x16xf32, #tpu.memory_space<vmem>>, vector<2x8x8x16xf32>
    %73 = vector.shape_cast %72 : vector<2x8x8x16xf32> to vector<128x16xf32>
    %c0_130 = arith.constant 0 : index
    %c2_131 = arith.constant 2 : index
    %c0_132 = arith.constant 0 : index
    %c0_133 = arith.constant 0 : index
    %74 = vector.load %arg15[%c0_130, %c2_131, %c0_132, %c0_133] : memref<2x10x10x16xf32, #tpu.memory_space<vmem>>, vector<2x8x8x16xf32>
    %75 = vector.shape_cast %74 : vector<2x8x8x16xf32> to vector<128x16xf32>
    %c0_134 = arith.constant 0 : index
    %c2_135 = arith.constant 2 : index
    %c1_136 = arith.constant 1 : index
    %c0_137 = arith.constant 0 : index
    %76 = vector.load %arg15[%c0_134, %c2_135, %c1_136, %c0_137] : memref<2x10x10x16xf32, #tpu.memory_space<vmem>>, vector<2x8x8x16xf32>
    %77 = vector.shape_cast %76 : vector<2x8x8x16xf32> to vector<128x16xf32>
    %c0_138 = arith.constant 0 : index
    %c2_139 = arith.constant 2 : index
    %c2_140 = arith.constant 2 : index
    %c0_141 = arith.constant 0 : index
    %78 = vector.load %arg15[%c0_138, %c2_139, %c2_140, %c0_141] : memref<2x10x10x16xf32, #tpu.memory_space<vmem>>, vector<2x8x8x16xf32>
    %79 = vector.shape_cast %78 : vector<2x8x8x16xf32> to vector<128x16xf32>
    %80 = tpu.concatenate %63, %65, %67, %69, %71, %73, %75, %77, %79 in 1 : vector<128x16xf32>, vector<128x16xf32>, vector<128x16xf32>, vector<128x16xf32>, vector<128x16xf32>, vector<128x16xf32>, vector<128x16xf32>, vector<128x16xf32>, vector<128x16xf32> -> vector<128x144xf32>
    %c0_142 = arith.constant 0 : index
    %c0_143 = arith.constant 0 : index
    %81 = vector.load %arg5[%c0_142, %c0_143] : memref<144x8xf32, #tpu.memory_space<vmem>>, vector<144x8xf32>
    %cst_144 = arith.constant dense<0.000000e+00> : vector<128x8xf32>
    %82 = tpu.matmul %80, %81, %cst_144 {dimension_numbers = #tpu.dot_dimension_numbers<[1], [0], [0], [1], [0, 0, 1, 1], [], []>} : vector<128x144xf32>, vector<144x8xf32>, vector<128x8xf32> -> vector<128x8xf32>
    %c0_145 = arith.constant 0 : index
    %c0_146 = arith.constant 0 : index
    %83 = vector.load %arg6[%c0_145, %c0_146] : memref<1x8xf32, #tpu.memory_space<vmem>>, vector<1x8xf32>
    %84 = vector.broadcast %83 : vector<1x8xf32> to vector<128x8xf32>
    %85 = arith.addf %82, %84 : vector<128x8xf32>
    %cst_147 = arith.constant 0.000000e+00 : f32
    %86 = vector.broadcast %cst_147 : f32 to vector<128x8xf32>
    %87 = arith.maximumf %85, %86 : vector<128x8xf32>
    %88 = vector.shape_cast %87 : vector<128x8xf32> to vector<2x8x8x8xf32>
    %89 = vector.extract_strided_slice %88 {offsets = [0, 0, 0, 0], sizes = [2, 3, 3, 8], strides = [1, 1, 1, 1]} : vector<2x8x8x8xf32> to vector<2x3x3x8xf32>
    %cst_148 = arith.constant dense<0xFF800000> : vector<2x8xf32>
    %90 = vector.multi_reduction <maximumf>, %89, %cst_148 [1, 2] : vector<2x3x3x8xf32> to vector<2x8xf32>
    %91 = vector.extract_strided_slice %88 {offsets = [0, 0, 2, 0], sizes = [2, 3, 3, 8], strides = [1, 1, 1, 1]} : vector<2x8x8x8xf32> to vector<2x3x3x8xf32>
    %cst_149 = arith.constant dense<0xFF800000> : vector<2x8xf32>
    %92 = vector.multi_reduction <maximumf>, %91, %cst_149 [1, 2] : vector<2x3x3x8xf32> to vector<2x8xf32>
    %93 = vector.extract_strided_slice %88 {offsets = [0, 0, 4, 0], sizes = [2, 3, 3, 8], strides = [1, 1, 1, 1]} : vector<2x8x8x8xf32> to vector<2x3x3x8xf32>
    %cst_150 = arith.constant dense<0xFF800000> : vector<2x8xf32>
    %94 = vector.multi_reduction <maximumf>, %93, %cst_150 [1, 2] : vector<2x3x3x8xf32> to vector<2x8xf32>
    %95 = vector.extract_strided_slice %88 {offsets = [0, 2, 0, 0], sizes = [2, 3, 3, 8], strides = [1, 1, 1, 1]} : vector<2x8x8x8xf32> to vector<2x3x3x8xf32>
    %cst_151 = arith.constant dense<0xFF800000> : vector<2x8xf32>
    %96 = vector.multi_reduction <maximumf>, %95, %cst_151 [1, 2] : vector<2x3x3x8xf32> to vector<2x8xf32>
    %97 = vector.extract_strided_slice %88 {offsets = [0, 2, 2, 0], sizes = [2, 3, 3, 8], strides = [1, 1, 1, 1]} : vector<2x8x8x8xf32> to vector<2x3x3x8xf32>
    %cst_152 = arith.constant dense<0xFF800000> : vector<2x8xf32>
    %98 = vector.multi_reduction <maximumf>, %97, %cst_152 [1, 2] : vector<2x3x3x8xf32> to vector<2x8xf32>
    %99 = vector.extract_strided_slice %88 {offsets = [0, 2, 4, 0], sizes = [2, 3, 3, 8], strides = [1, 1, 1, 1]} : vector<2x8x8x8xf32> to vector<2x3x3x8xf32>
    %cst_153 = arith.constant dense<0xFF800000> : vector<2x8xf32>
    %100 = vector.multi_reduction <maximumf>, %99, %cst_153 [1, 2] : vector<2x3x3x8xf32> to vector<2x8xf32>
    %101 = vector.extract_strided_slice %88 {offsets = [0, 4, 0, 0], sizes = [2, 3, 3, 8], strides = [1, 1, 1, 1]} : vector<2x8x8x8xf32> to vector<2x3x3x8xf32>
    %cst_154 = arith.constant dense<0xFF800000> : vector<2x8xf32>
    %102 = vector.multi_reduction <maximumf>, %101, %cst_154 [1, 2] : vector<2x3x3x8xf32> to vector<2x8xf32>
    %103 = vector.extract_strided_slice %88 {offsets = [0, 4, 2, 0], sizes = [2, 3, 3, 8], strides = [1, 1, 1, 1]} : vector<2x8x8x8xf32> to vector<2x3x3x8xf32>
    %cst_155 = arith.constant dense<0xFF800000> : vector<2x8xf32>
    %104 = vector.multi_reduction <maximumf>, %103, %cst_155 [1, 2] : vector<2x3x3x8xf32> to vector<2x8xf32>
    %105 = vector.extract_strided_slice %88 {offsets = [0, 4, 4, 0], sizes = [2, 3, 3, 8], strides = [1, 1, 1, 1]} : vector<2x8x8x8xf32> to vector<2x3x3x8xf32>
    %cst_156 = arith.constant dense<0xFF800000> : vector<2x8xf32>
    %106 = vector.multi_reduction <maximumf>, %105, %cst_156 [1, 2] : vector<2x3x3x8xf32> to vector<2x8xf32>
    %107 = tpu.concatenate %90, %92, %94, %96, %98, %100, %102, %104, %106 in 1 : vector<2x8xf32>, vector<2x8xf32>, vector<2x8xf32>, vector<2x8xf32>, vector<2x8xf32>, vector<2x8xf32>, vector<2x8xf32>, vector<2x8xf32>, vector<2x8xf32> -> vector<2x72xf32>
    %c0_157 = arith.constant 0 : index
    %c0_158 = arith.constant 0 : index
    %108 = vector.load %arg7[%c0_157, %c0_158] : memref<72x32xf32, #tpu.memory_space<vmem>>, vector<72x32xf32>
    %cst_159 = arith.constant dense<0.000000e+00> : vector<2x32xf32>
    %109 = tpu.matmul %107, %108, %cst_159 {dimension_numbers = #tpu.dot_dimension_numbers<[1], [0], [0], [1], [0, 0, 1, 1], [], []>} : vector<2x72xf32>, vector<72x32xf32>, vector<2x32xf32> -> vector<2x32xf32>
    %c0_160 = arith.constant 0 : index
    %c0_161 = arith.constant 0 : index
    %110 = vector.load %arg8[%c0_160, %c0_161] : memref<1x32xf32, #tpu.memory_space<vmem>>, vector<1x32xf32>
    %111 = vector.broadcast %110 : vector<1x32xf32> to vector<2x32xf32>
    %112 = arith.addf %109, %111 : vector<2x32xf32>
    %cst_162 = arith.constant 0.000000e+00 : f32
    %113 = vector.broadcast %cst_162 : f32 to vector<2x32xf32>
    %114 = arith.maximumf %112, %113 : vector<2x32xf32>
    %c0_163 = arith.constant 0 : index
    %c0_164 = arith.constant 0 : index
    %115 = vector.load %arg9[%c0_163, %c0_164] : memref<32x32xf32, #tpu.memory_space<vmem>>, vector<32x32xf32>
    %cst_165 = arith.constant dense<0.000000e+00> : vector<2x32xf32>
    %116 = tpu.matmul %114, %115, %cst_165 {dimension_numbers = #tpu.dot_dimension_numbers<[1], [0], [0], [1], [0, 0, 1, 1], [], []>} : vector<2x32xf32>, vector<32x32xf32>, vector<2x32xf32> -> vector<2x32xf32>
    %c0_166 = arith.constant 0 : index
    %c0_167 = arith.constant 0 : index
    %117 = vector.load %arg10[%c0_166, %c0_167] : memref<1x32xf32, #tpu.memory_space<vmem>>, vector<1x32xf32>
    %118 = vector.broadcast %117 : vector<1x32xf32> to vector<2x32xf32>
    %119 = arith.addf %116, %118 : vector<2x32xf32>
    %cst_168 = arith.constant 0.000000e+00 : f32
    %120 = vector.broadcast %cst_168 : f32 to vector<2x32xf32>
    %121 = arith.maximumf %119, %120 : vector<2x32xf32>
    %c0_169 = arith.constant 0 : index
    %c0_170 = arith.constant 0 : index
    %122 = vector.load %arg11[%c0_169, %c0_170] : memref<32x10xf32, #tpu.memory_space<vmem>>, vector<32x10xf32>
    %cst_171 = arith.constant dense<0.000000e+00> : vector<2x10xf32>
    %123 = tpu.matmul %121, %122, %cst_171 {dimension_numbers = #tpu.dot_dimension_numbers<[1], [0], [0], [1], [0, 0, 1, 1], [], []>} : vector<2x32xf32>, vector<32x10xf32>, vector<2x10xf32> -> vector<2x10xf32>
    %c0_172 = arith.constant 0 : index
    %c0_173 = arith.constant 0 : index
    %124 = vector.load %arg12[%c0_172, %c0_173] : memref<1x10xf32, #tpu.memory_space<vmem>>, vector<1x10xf32>
    %125 = vector.broadcast %124 : vector<1x10xf32> to vector<2x10xf32>
    %126 = arith.addf %123, %125 : vector<2x10xf32>
    %c0_174 = arith.constant 0 : index
    %c0_175 = arith.constant 0 : index
    %127 = vector.load %arg13[%c0_174, %c0_175] : memref<2x10xf32, #tpu.memory_space<vmem>>, vector<2x10xf32>
    tpu.vector_store %arg13[%c0_174, %c0_175], %126 {strides = array<i32>} : memref<2x10xf32, #tpu.memory_space<vmem>>, vector<2x10xf32>,
    return
  }
}

</mosaic_0001>

<llo_original>
// kernel: server_model_forward.1
$region0: #{server_model_forward.1}
  #allocation0 [shape = 'u32[]', space=smem, size = 0x4, offset = 0x4, fixed_abs, tag = 'smem constant byte address 0x4 - core index']
  #allocation1 [shape = 'u32[144,128]{1,0:T(1,128)}', space=vmem, size = 0x12000, scoped, tag = 'internal scratch']
  #allocation2 [shape = 'f32[2,10,10,8]{3,2,1,0:T(8,128)}', space=vmem, size = 0x28000, scoped, tag = 'scratch operand']
  #allocation3 [shape = 'f32[2,10,10,16]{3,2,1,0:T(8,128)}', space=vmem, size = 0x28000, scoped, tag = 'scratch operand']
  %s0 = inlined_call_operand.vmem [shape: f32[2,8,8,8], index: 0, kind: input, shape index: {}]
  %s1 = inlined_call_operand.vmem [shape: f32[72,16], index: 1, kind: input, shape index: {}]
  %s2 = inlined_call_operand.vmem [shape: f32[1,16], index: 2, kind: input, shape index: {}]
  %s3 = inlined_call_operand.vmem [shape: f32[144,16], index: 3, kind: input, shape index: {}]
  %s4 = inlined_call_operand.vmem [shape: f32[1,16], index: 4, kind: input, shape index: {}]
  %s5 = inlined_call_operand.vmem [shape: f32[144,8], index: 5, kind: input, shape index: {}]
  %s6 = inlined_call_operand.vmem [shape: f32[1,8], index: 6, kind: input, shape index: {}]
  %s7 = inlined_call_operand.vmem [shape: f32[72,32], index: 7, kind: input, shape index: {}]
  %s8 = inlined_call_operand.vmem [shape: f32[1,32], index: 8, kind: input, shape index: {}]
  %s9 = inlined_call_operand.vmem [shape: f32[32,32], index: 9, kind: input, shape index: {}]
  %s10 = inlined_call_operand.vmem [shape: f32[1,32], index: 10, kind: input, shape index: {}]
  %s11 = inlined_call_operand.vmem [shape: f32[32,10], index: 11, kind: input, shape index: {}]
  %s12 = inlined_call_operand.vmem [shape: f32[1,10], index: 12, kind: input, shape index: {}]
  %s13 = inlined_call_operand.hbm [shape: f32[2,10], index: 13, kind: output, shape index: {}]
  %s14 = sld [smem:[#allocation0]]
  $region62: #{server_model_forward.1} parent=0
    _
  %s16 = ssub.s32 1, %s14
  %s17 = scalar_select 0, %s16, %s14
  $region1: #{server_model_forward.1} parent=0
    #allocation4 [shape = 'u8[1024]{0}', space=vmem, size = 0x400, scoped, tag = 'output window, operand 0, single buffered']
    #allocation5 [shape = 's32[1]{0}', space=sflag, size = 0x4, scoped, tag = 'scoped memory for server_model_forward.1']
    %18 = vsyncpa [#allocation5], 0
    // Predicated region
    $region2: #{server_model_forward.1} parent=1 // pred_check
      _
    $region3: #{server_model_forward.1} parent=1 // pred_check_branch
      %20 = sbr.rel (0) target = $region5
    $region4: #{server_model_forward.1} parent=1 // pred_region
      _
    $region5: #{server_model_forward.1} parent=1 // pred_fallthru
      _
    // Predicated region
    $region6: #{server_model_forward.1} parent=1 // pred_check
      _
    $region7: #{server_model_forward.1} parent=1 // pred_check_branch
      %22 = sbr.rel (0) target = $region9
    $region8: #{server_model_forward.1} parent=1 // pred_region
      _
    $region9: #{server_model_forward.1} parent=1 // pred_fallthru
      _
    // Predicated region
    $region10: #{server_model_forward.1} parent=1 // pred_check
      _
    $region11: #{server_model_forward.1} parent=1 // pred_check_branch
      %24 = sbr.rel (0) target = $region13
    $region12: #{server_model_forward.1} parent=1 // pred_region
      _
    $region13: #{server_model_forward.1} parent=1 // pred_fallthru
      _
    // Predicated region
    $region14: #{server_model_forward.1} parent=1 // pred_check
      _
    $region15: #{server_model_forward.1} parent=1 // pred_check_branch
      %26 = sbr.rel (0) target = $region17
    $region16: #{server_model_forward.1} parent=1 // pred_region
      _
    $region17: #{server_model_forward.1} parent=1 // pred_fallthru
      _
    // Predicated region
    $region18: #{server_model_forward.1} parent=1 // pred_check
      _
    $region19: #{server_model_forward.1} parent=1 // pred_check_branch
      %28 = sbr.rel (0) target = $region21
    $region20: #{server_model_forward.1} parent=1 // pred_region
      _
    $region21: #{server_model_forward.1} parent=1 // pred_fallthru
      _
    // Predicated region
    $region22: #{server_model_forward.1} parent=1 // pred_check
      _
    $region23: #{server_model_forward.1} parent=1 // pred_check_branch
      %30 = sbr.rel (0) target = $region25
    $region24: #{server_model_forward.1} parent=1 // pred_region
      _
    $region25: #{server_model_forward.1} parent=1 // pred_fallthru
      _
    // Predicated region
    $region26: #{server_model_forward.1} parent=1 // pred_check
      _
    $region27: #{server_model_forward.1} parent=1 // pred_check_branch
      %32 = sbr.rel (0) target = $region29
    $region28: #{server_model_forward.1} parent=1 // pred_region
      _
    $region29: #{server_model_forward.1} parent=1 // pred_fallthru
      _
    // Predicated region
    $region30: #{server_model_forward.1} parent=1 // pred_check
      _
    $region31: #{server_model_forward.1} parent=1 // pred_check_branch
      %34 = sbr.rel (0) target = $region33
    $region32: #{server_model_forward.1} parent=1 // pred_region
      _
    $region33: #{server_model_forward.1} parent=1 // pred_fallthru
      _
    // Predicated region
    $region34: #{server_model_forward.1} parent=1 // pred_check
      _
    $region35: #{server_model_forward.1} parent=1 // pred_check_branch
      %36 = sbr.rel (0) target = $region37
    $region36: #{server_model_forward.1} parent=1 // pred_region
      _
    $region37: #{server_model_forward.1} parent=1 // pred_fallthru
      _
    // Predicated region
    $region38: #{server_model_forward.1} parent=1 // pred_check
      _
    $region39: #{server_model_forward.1} parent=1 // pred_check_branch
      %38 = sbr.rel (0) target = $region41
    $region40: #{server_model_forward.1} parent=1 // pred_region
      _
    $region41: #{server_model_forward.1} parent=1 // pred_fallthru
      _
    // Predicated region
    $region42: #{server_model_forward.1} parent=1 // pred_check
      _
    $region43: #{server_model_forward.1} parent=1 // pred_check_branch
      %40 = sbr.rel (0) target = $region45
    $region44: #{server_model_forward.1} parent=1 // pred_region
      _
    $region45: #{server_model_forward.1} parent=1 // pred_fallthru
      _
    // Predicated region
    $region46: #{server_model_forward.1} parent=1 // pred_check
      _
    $region47: #{server_model_forward.1} parent=1 // pred_check_branch
      %42 = sbr.rel (0) target = $region49
    $region48: #{server_model_forward.1} parent=1 // pred_region
      _
    $region49: #{server_model_forward.1} parent=1 // pred_fallthru
      _
    // Predicated region
    $region50: #{server_model_forward.1} parent=1 // pred_check
      _
    $region51: #{server_model_forward.1} parent=1 // pred_check_branch
      %44 = sbr.rel (0) target = $region53
    $region52: #{server_model_forward.1} parent=1 // pred_region
      _
    $region53: #{server_model_forward.1} parent=1 // pred_fallthru
      _
    %vm45 = vcmask 64512
    %46 = vst.msk [vmem:[#allocation2] sm:$0xff] %vm45, 0.0
    %vm47 = vcmask 58368
    %48 = vst.msk [vmem:[#allocation2 + $0x8] sm:$0x3] %vm47, 0.0
    %49 = vst.msk [vmem:[#allocation2 + $0x10] sm:$0xff] %vm45, 0.0
    %50 = vst.msk [vmem:[#allocation2 + $0x18] sm:$0x3] %vm47, 0.0
    %51 = vst.msk [vmem:[#allocation2 + $0x20] sm:$0xff] %vm45, 0.0
    %52 = vst.msk [vmem:[#allocation2 + $0x28] sm:$0x3] %vm47, 0.0
    %53 = vst.msk [vmem:[#allocation2 + $0x30] sm:$0xff] %vm45, 0.0
    %54 = vst.msk [vmem:[#allocation2 + $0x38] sm:$0x3] %vm47, 0.0
    %55 = vst.msk [vmem:[#allocation2 + $0x40] sm:$0xff] %vm45, 0.0
    %56 = vst.msk [vmem:[#allocation2 + $0x48] sm:$0x3] %vm47, 0.0
    %57 = vst.msk [vmem:[#allocation2 + $0x50] sm:$0xff] %vm45, 0.0
    %58 = vst.msk [vmem:[#allocation2 + $0x58] sm:$0x3] %vm47, 0.0
    %59 = vst.msk [vmem:[#allocation2 + $0x60] sm:$0xff] %vm45, 0.0
    %60 = vst.msk [vmem:[#allocation2 + $0x68] sm:$0x3] %vm47, 0.0
    %61 = vst.msk [vmem:[#allocation2 + $0x70] sm:$0xff] %vm45, 0.0
    %62 = vst.msk [vmem:[#allocation2 + $0x78] sm:$0x3] %vm47, 0.0
    %63 = vst.msk [vmem:[#allocation2 + $0x80] sm:$0xff] %vm45, 0.0
    %64 = vst.msk [vmem:[#allocation2 + $0x88] sm:$0x3] %vm47, 0.0
    %65 = vst.msk [vmem:[#allocation2 + $0x90] sm:$0xff] %vm45, 0.0
    %66 = vst.msk [vmem:[#allocation2 + $0x98] sm:$0x3] %vm47, 0.0
    %67 = vst.msk [vmem:[#allocation2 + $0xa0] sm:$0xff] %vm45, 0.0
    %68 = vst.msk [vmem:[#allocation2 + $0xa8] sm:$0x3] %vm47, 0.0
    %69 = vst.msk [vmem:[#allocation2 + $0xb0] sm:$0xff] %vm45, 0.0
    %70 = vst.msk [vmem:[#allocation2 + $0xb8] sm:$0x3] %vm47, 0.0
    %71 = vst.msk [vmem:[#allocation2 + $0xc0] sm:$0xff] %vm45, 0.0
    %72 = vst.msk [vmem:[#allocation2 + $0xc8] sm:$0x3] %vm47, 0.0
    %73 = vst.msk [vmem:[#allocation2 + $0xd0] sm:$0xff] %vm45, 0.0
    %74 = vst.msk [vmem:[#allocation2 + $0xd8] sm:$0x3] %vm47, 0.0
    %75 = vst.msk [vmem:[#allocation2 + $0xe0] sm:$0xff] %vm45, 0.0
    %76 = vst.msk [vmem:[#allocation2 + $0xe8] sm:$0x3] %vm47, 0.0
    %77 = vst.msk [vmem:[#allocation2 + $0xf0] sm:$0xff] %vm45, 0.0
    %78 = vst.msk [vmem:[#allocation2 + $0xf8] sm:$0x3] %vm47, 0.0
    %79 = vst.msk [vmem:[#allocation2 + $0x100] sm:$0xff] %vm45, 0.0
    %80 = vst.msk [vmem:[#allocation2 + $0x108] sm:$0x3] %vm47, 0.0
    %81 = vst.msk [vmem:[#allocation2 + $0x110] sm:$0xff] %vm45, 0.0
    %82 = vst.msk [vmem:[#allocation2 + $0x118] sm:$0x3] %vm47, 0.0
    %83 = vst.msk [vmem:[#allocation2 + $0x120] sm:$0xff] %vm45, 0.0
    %84 = vst.msk [vmem:[#allocation2 + $0x128] sm:$0x3] %vm47, 0.0
    %85 = vst.msk [vmem:[#allocation2 + $0x130] sm:$0xff] %vm45, 0.0
    %86 = vst.msk [vmem:[#allocation2 + $0x138] sm:$0x3] %vm47, 0.0
    %vm87 = vcmask 130048
    %88 = vst.msk [vmem:[#allocation3] sm:$0xff] %vm87, 0.0
    %vm89 = vcmask 123904
    %90 = vst.msk [vmem:[#allocation3 + $0x8] sm:$0x3] %vm89, 0.0
    %91 = vst.msk [vmem:[#allocation3 + $0x10] sm:$0xff] %vm87, 0.0
    %92 = vst.msk [vmem:[#allocation3 + $0x18] sm:$0x3] %vm89, 0.0
    %93 = vst.msk [vmem:[#allocation3 + $0x20] sm:$0xff] %vm87, 0.0
    %94 = vst.msk [vmem:[#allocation3 + $0x28] sm:$0x3] %vm89, 0.0
    %95 = vst.msk [vmem:[#allocation3 + $0x30] sm:$0xff] %vm87, 0.0
    %96 = vst.msk [vmem:[#allocation3 + $0x38] sm:$0x3] %vm89, 0.0
    %97 = vst.msk [vmem:[#allocation3 + $0x40] sm:$0xff] %vm87, 0.0
    %98 = vst.msk [vmem:[#allocation3 + $0x48] sm:$0x3] %vm89, 0.0
    %99 = vst.msk [vmem:[#allocation3 + $0x50] sm:$0xff] %vm87, 0.0
    %100 = vst.msk [vmem:[#allocation3 + $0x58] sm:$0x3] %vm89, 0.0
    %101 = vst.msk [vmem:[#allocation3 + $0x60] sm:$0xff] %vm87, 0.0
    %102 = vst.msk [vmem:[#allocation3 + $0x68] sm:$0x3] %vm89, 0.0
    %103 = vst.msk [vmem:[#allocation3 + $0x70] sm:$0xff] %vm87, 0.0
    %104 = vst.msk [vmem:[#allocation3 + $0x78] sm:$0x3] %vm89, 0.0
    %105 = vst.msk [vmem:[#allocation3 + $0x80] sm:$0xff] %vm87, 0.0
    %106 = vst.msk [vmem:[#allocation3 + $0x88] sm:$0x3] %vm89, 0.0
    %107 = vst.msk [vmem:[#allocation3 + $0x90] sm:$0xff] %vm87, 0.0
    %108 = vst.msk [vmem:[#allocation3 + $0x98] sm:$0x3] %vm89, 0.0
    %109 = vst.msk [vmem:[#allocation3 + $0xa0] sm:$0xff] %vm87, 0.0
    %110 = vst.msk [vmem:[#allocation3 + $0xa8] sm:$0x3] %vm89, 0.0
    %111 = vst.msk [vmem:[#allocation3 + $0xb0] sm:$0xff] %vm87, 0.0
    %112 = vst.msk [vmem:[#allocation3 + $0xb8] sm:$0x3] %vm89, 0.0
    %113 = vst.msk [vmem:[#allocation3 + $0xc0] sm:$0xff] %vm87, 0.0
    %114 = vst.msk [vmem:[#allocation3 + $0xc8] sm:$0x3] %vm89, 0.0
    %115 = vst.msk [vmem:[#allocation3 + $0xd0] sm:$0xff] %vm87, 0.0
    %116 = vst.msk [vmem:[#allocation3 + $0xd8] sm:$0x3] %vm89, 0.0
    %117 = vst.msk [vmem:[#allocation3 + $0xe0] sm:$0xff] %vm87, 0.0
    %118 = vst.msk [vmem:[#allocation3 + $0xe8] sm:$0x3] %vm89, 0.0
    %119 = vst.msk [vmem:[#allocation3 + $0xf0] sm:$0xff] %vm87, 0.0
    %120 = vst.msk [vmem:[#allocation3 + $0xf8] sm:$0x3] %vm89, 0.0
    %121 = vst.msk [vmem:[#allocation3 + $0x100] sm:$0xff] %vm87, 0.0
    %122 = vst.msk [vmem:[#allocation3 + $0x108] sm:$0x3] %vm89, 0.0
    %123 = vst.msk [vmem:[#allocation3 + $0x110] sm:$0xff] %vm87, 0.0
    %124 = vst.msk [vmem:[#allocation3 + $0x118] sm:$0x3] %vm89, 0.0
    %125 = vst.msk [vmem:[#allocation3 + $0x120] sm:$0xff] %vm87, 0.0
    %126 = vst.msk [vmem:[#allocation3 + $0x128] sm:$0x3] %vm89, 0.0
    %127 = vst.msk [vmem:[#allocation3 + $0x130] sm:$0xff] %vm87, 0.0
    %128 = vst.msk [vmem:[#allocation3 + $0x138] sm:$0x3] %vm89, 0.0
    %v129 = vld [vmem:[%s0] sm:$0xff]
    %v130 = vld [vmem:[%s0 + $0x8] sm:$0xff]
    %v131 = vld [vmem:[%s0 + $0x10] sm:$0xff]
    %v132 = vld [vmem:[%s0 + $0x18] sm:$0xff]
    %v133 = vld [vmem:[%s0 + $0x20] sm:$0xff]
    %v134 = vld [vmem:[%s0 + $0x28] sm:$0xff]
    %v135 = vld [vmem:[%s0 + $0x30] sm:$0xff]
    %v136 = vld [vmem:[%s0 + $0x38] sm:$0xff]
    %v137 = vld [vmem:[%s0 + $0x40] sm:$0xff]
    %v138 = vld [vmem:[%s0 + $0x48] sm:$0xff]
    %v139 = vld [vmem:[%s0 + $0x50] sm:$0xff]
    %v140 = vld [vmem:[%s0 + $0x58] sm:$0xff]
    %v141 = vld [vmem:[%s0 + $0x60] sm:$0xff]
    %v142 = vld [vmem:[%s0 + $0x68] sm:$0xff]
    %v143 = vld [vmem:[%s0 + $0x70] sm:$0xff]
    %v144 = vld [vmem:[%s0 + $0x78] sm:$0xff]
    %s145 = scalar_lea.vmem [#allocation2], 16
    %146 = vst.msk [vmem:[%s145 + $0x1] sm:$0xff] %vm45, %v129
    %147 = vst.msk [vmem:[%s145 + $0x11] sm:$0xff] %vm45, %v130
    %148 = vst.msk [vmem:[%s145 + $0x21] sm:$0xff] %vm45, %v131
    %149 = vst.msk [vmem:[%s145 + $0x31] sm:$0xff] %vm45, %v132
    %150 = vst.msk [vmem:[%s145 + $0x41] sm:$0xff] %vm45, %v133
    %151 = vst.msk [vmem:[%s145 + $0x51] sm:$0xff] %vm45, %v134
    %152 = vst.msk [vmem:[%s145 + $0x61] sm:$0xff] %vm45, %v135
    %153 = vst.msk [vmem:[%s145 + $0x71] sm:$0xff] %vm45, %v136
    %154 = vst.msk [vmem:[%s145 + $0xa1] sm:$0xff] %vm45, %v137
    %155 = vst.msk [vmem:[%s145 + $0xb1] sm:$0xff] %vm45, %v138
    %156 = vst.msk [vmem:[%s145 + $0xc1] sm:$0xff] %vm45, %v139
    %157 = vst.msk [vmem:[%s145 + $0xd1] sm:$0xff] %vm45, %v140
    %158 = vst.msk [vmem:[%s145 + $0xe1] sm:$0xff] %vm45, %v141
    %159 = vst.msk [vmem:[%s145 + $0xf1] sm:$0xff] %vm45, %v142
    %160 = vst.msk [vmem:[%s145 + $0x101] sm:$0xff] %vm45, %v143
    %161 = vst.msk [vmem:[%s145 + $0x111] sm:$0xff] %vm45, %v144
    %v162 = vld [vmem:[#allocation2] sm:$0xff]
    %v163 = vld [vmem:[#allocation2 + $0x10] sm:$0xff]
    %v164 = vld [vmem:[#allocation2 + $0x20] sm:$0xff]
    %v165 = vld [vmem:[#allocation2 + $0x30] sm:$0xff]
    %v166 = vld [vmem:[#allocation2 + $0x40] sm:$0xff]
    %v167 = vld [vmem:[#allocation2 + $0x50] sm:$0xff]
    %v168 = vld [vmem:[#allocation2 + $0x60] sm:$0xff]
    %v169 = vld [vmem:[#allocation2 + $0x70] sm:$0xff]
    %v170 = vld [vmem:[#allocation2 + $0xa0] sm:$0xff]
    %v171 = vld [vmem:[#allocation2 + $0xb0] sm:$0xff]
    %v172 = vld [vmem:[#allocation2 + $0xc0] sm:$0xff]
    %v173 = vld [vmem:[#allocation2 + $0xd0] sm:$0xff]
    %v174 = vld [vmem:[#allocation2 + $0xe0] sm:$0xff]
    %v175 = vld [vmem:[#allocation2 + $0xf0] sm:$0xff]
    %v176 = vld [vmem:[#allocation2 + $0x100] sm:$0xff]
    %v177 = vld [vmem:[#allocation2 + $0x110] sm:$0xff]
    %v178 = vld [vmem:[#allocation2 + $0x1] sm:$0xff]
    %v179 = vld [vmem:[#allocation2 + $0x11] sm:$0xff]
    %v180 = vld [vmem:[#allocation2 + $0x21] sm:$0xff]
    %v181 = vld [vmem:[#allocation2 + $0x31] sm:$0xff]
    %v182 = vld [vmem:[#allocation2 + $0x41] sm:$0xff]
    %v183 = vld [vmem:[#allocation2 + $0x51] sm:$0xff]
    %v184 = vld [vmem:[#allocation2 + $0x61] sm:$0xff]
    %v185 = vld [vmem:[#allocation2 + $0x71] sm:$0xff]
    %v186 = vld [vmem:[#allocation2 + $0xa1] sm:$0xff]
    %v187 = vld [vmem:[#allocation2 + $0xb1] sm:$0xff]
    %v188 = vld [vmem:[#allocation2 + $0xc1] sm:$0xff]
    %v189 = vld [vmem:[#allocation2 + $0xd1] sm:$0xff]
    %v190 = vld [vmem:[#allocation2 + $0xe1] sm:$0xff]
    %v191 = vld [vmem:[#allocation2 + $0xf1] sm:$0xff]
    %v192 = vld [vmem:[#allocation2 + $0x101] sm:$0xff]
    %v193 = vld [vmem:[#allocation2 + $0x111] sm:$0xff]
    %v194 = vld [vmem:[#allocation2 + $0x2] sm:$0xff]
    %v195 = vld [vmem:[#allocation2 + $0x12] sm:$0xff]
    %v196 = vld [vmem:[#allocation2 + $0x22] sm:$0xff]
    %v197 = vld [vmem:[#allocation2 + $0x32] sm:$0xff]
    %v198 = vld [vmem:[#allocation2 + $0x42] sm:$0xff]
    %v199 = vld [vmem:[#allocation2 + $0x52] sm:$0xff]
    %v200 = vld [vmem:[#allocation2 + $0x62] sm:$0xff]
    %v201 = vld [vmem:[#allocation2 + $0x72] sm:$0xff]
    %v202 = vld [vmem:[#allocation2 + $0xa2] sm:$0xff]
    %v203 = vld [vmem:[#allocation2 + $0xb2] sm:$0xff]
    %v204 = vld [vmem:[#allocation2 + $0xc2] sm:$0xff]
    %v205 = vld [vmem:[#allocation2 + $0xd2] sm:$0xff]
    %v206 = vld [vmem:[#allocation2 + $0xe2] sm:$0xff]
    %v207 = vld [vmem:[#allocation2 + $0xf2] sm:$0xff]
    %v208 = vld [vmem:[#allocation2 + $0x102] sm:$0xff]
    %v209 = vld [vmem:[#allocation2 + $0x112] sm:$0xff]
    %v210 = vld [vmem:[%s145] sm:$0xff]
    %v211 = vld [vmem:[%s145 + $0x10] sm:$0xff]
    %v212 = vld [vmem:[%s145 + $0x20] sm:$0xff]
    %v213 = vld [vmem:[%s145 + $0x30] sm:$0xff]
    %v214 = vld [vmem:[%s145 + $0x40] sm:$0xff]
    %v215 = vld [vmem:[%s145 + $0x50] sm:$0xff]
    %v216 = vld [vmem:[%s145 + $0x60] sm:$0xff]
    %v217 = vld [vmem:[%s145 + $0x70] sm:$0xff]
    %v218 = vld [vmem:[%s145 + $0xa0] sm:$0xff]
    %v219 = vld [vmem:[%s145 + $0xb0] sm:$0xff]
    %v220 = vld [vmem:[%s145 + $0xc0] sm:$0xff]
    %v221 = vld [vmem:[%s145 + $0xd0] sm:$0xff]
    %v222 = vld [vmem:[%s145 + $0xe0] sm:$0xff]
    %v223 = vld [vmem:[%s145 + $0xf0] sm:$0xff]
    %v224 = vld [vmem:[%s145 + $0x100] sm:$0xff]
    %v225 = vld [vmem:[%s145 + $0x110] sm:$0xff]
    %v226 = vld [vmem:[%s145 + $0x1] sm:$0xff]
    %v227 = vld [vmem:[%s145 + $0x11] sm:$0xff]
    %v228 = vld [vmem:[%s145 + $0x21] sm:$0xff]
    %v229 = vld [vmem:[%s145 + $0x31] sm:$0xff]
    %v230 = vld [vmem:[%s145 + $0x41] sm:$0xff]
    %v231 = vld [vmem:[%s145 + $0x51] sm:$0xff]
    %v232 = vld [vmem:[%s145 + $0x61] sm:$0xff]
    %v233 = vld [vmem:[%s145 + $0x71] sm:$0xff]
    %v234 = vld [vmem:[%s145 + $0xa1] sm:$0xff]
    %v235 = vld [vmem:[%s145 + $0xb1] sm:$0xff]
    %v236 = vld [vmem:[%s145 + $0xc1] sm:$0xff]
    %v237 = vld [vmem:[%s145 + $0xd1] sm:$0xff]
    %v238 = vld [vmem:[%s145 + $0xe1] sm:$0xff]
    %v239 = vld [vmem:[%s145 + $0xf1] sm:$0xff]
    %v240 = vld [vmem:[%s145 + $0x101] sm:$0xff]
    %v241 = vld [vmem:[%s145 + $0x111] sm:$0xff]
    %v242 = vld [vmem:[%s145 + $0x2] sm:$0xff]
    %v243 = vld [vmem:[%s145 + $0x12] sm:$0xff]
    %v244 = vld [vmem:[%s145 + $0x22] sm:$0xff]
    %v245 = vld [vmem:[%s145 + $0x32] sm:$0xff]
    %v246 = vld [vmem:[%s145 + $0x42] sm:$0xff]
    %v247 = vld [vmem:[%s145 + $0x52] sm:$0xff]
    %v248 = vld [vmem:[%s145 + $0x62] sm:$0xff]
    %v249 = vld [vmem:[%s145 + $0x72] sm:$0xff]
    %v250 = vld [vmem:[%s145 + $0xa2] sm:$0xff]
    %v251 = vld [vmem:[%s145 + $0xb2] sm:$0xff]
    %v252 = vld [vmem:[%s145 + $0xc2] sm:$0xff]
    %v253 = vld [vmem:[%s145 + $0xd2] sm:$0xff]
    %v254 = vld [vmem:[%s145 + $0xe2] sm:$0xff]
    %v255 = vld [vmem:[%s145 + $0xf2] sm:$0xff]
    %v256 = vld [vmem:[%s145 + $0x102] sm:$0xff]
    %v257 = vld [vmem:[%s145 + $0x112] sm:$0xff]
    %s258 = scalar_lea.vmem [#allocation2], 32
    %v259 = vld [vmem:[%s258] sm:$0xff]
    %v260 = vld [vmem:[%s258 + $0x10] sm:$0xff]
    %v261 = vld [vmem:[%s258 + $0x20] sm:$0xff]
    %v262 = vld [vmem:[%s258 + $0x30] sm:$0xff]
    %v263 = vld [vmem:[%s258 + $0x40] sm:$0xff]
    %v264 = vld [vmem:[%s258 + $0x50] sm:$0xff]
    %v265 = vld [vmem:[%s258 + $0x60] sm:$0xff]
    %v266 = vld [vmem:[%s258 + $0x70] sm:$0xff]
    %v267 = vld [vmem:[%s258 + $0xa0] sm:$0xff]
    %v268 = vld [vmem:[%s258 + $0xb0] sm:$0xff]
    %v269 = vld [vmem:[%s258 + $0xc0] sm:$0xff]
    %v270 = vld [vmem:[%s258 + $0xd0] sm:$0xff]
    %v271 = vld [vmem:[%s258 + $0xe0] sm:$0xff]
    %v272 = vld [vmem:[%s258 + $0xf0] sm:$0xff]
    %v273 = vld [vmem:[%s258 + $0x100] sm:$0xff]
    %v274 = vld [vmem:[%s258 + $0x110] sm:$0xff]
    %v275 = vld [vmem:[%s258 + $0x1] sm:$0xff]
    %v276 = vld [vmem:[%s258 + $0x11] sm:$0xff]
    %v277 = vld [vmem:[%s258 + $0x21] sm:$0xff]
    %v278 = vld [vmem:[%s258 + $0x31] sm:$0xff]
    %v279 = vld [vmem:[%s258 + $0x41] sm:$0xff]
    %v280 = vld [vmem:[%s258 + $0x51] sm:$0xff]
    %v281 = vld [vmem:[%s258 + $0x61] sm:$0xff]
    %v282 = vld [vmem:[%s258 + $0x71] sm:$0xff]
    %v283 = vld [vmem:[%s258 + $0xa1] sm:$0xff]
    %v284 = vld [vmem:[%s258 + $0xb1] sm:$0xff]
    %v285 = vld [vmem:[%s258 + $0xc1] sm:$0xff]
    %v286 = vld [vmem:[%s258 + $0xd1] sm:$0xff]
    %v287 = vld [vmem:[%s258 + $0xe1] sm:$0xff]
    %v288 = vld [vmem:[%s258 + $0xf1] sm:$0xff]
    %v289 = vld [vmem:[%s258 + $0x101] sm:$0xff]
    %v290 = vld [vmem:[%s258 + $0x111] sm:$0xff]
    %v291 = vld [vmem:[%s258 + $0x2] sm:$0xff]
    %v292 = vld [vmem:[%s258 + $0x12] sm:$0xff]
    %v293 = vld [vmem:[%s258 + $0x22] sm:$0xff]
    %v294 = vld [vmem:[%s258 + $0x32] sm:$0xff]
    %v295 = vld [vmem:[%s258 + $0x42] sm:$0xff]
    %v296 = vld [vmem:[%s258 + $0x52] sm:$0xff]
    %v297 = vld [vmem:[%s258 + $0x62] sm:$0xff]
    %v298 = vld [vmem:[%s258 + $0x72] sm:$0xff]
    %v299 = vld [vmem:[%s258 + $0xa2] sm:$0xff]
    %v300 = vld [vmem:[%s258 + $0xb2] sm:$0xff]
    %v301 = vld [vmem:[%s258 + $0xc2] sm:$0xff]
    %v302 = vld [vmem:[%s258 + $0xd2] sm:$0xff]
    %v303 = vld [vmem:[%s258 + $0xe2] sm:$0xff]
    %v304 = vld [vmem:[%s258 + $0xf2] sm:$0xff]
    %v305 = vld [vmem:[%s258 + $0x102] sm:$0xff]
    %v306 = vld [vmem:[%s258 + $0x112] sm:$0xff]
    %323 = vrot.lane.b32.xlu0 %v178, 8
    %v324 = vpop.permute.xlu0 %323
    %325 = vrot.lane.b32.xlu0 %v179, 8
    %v326 = vpop.permute.xlu0 %325
    %327 = vrot.lane.b32.xlu0 %v180, 8
    %v328 = vpop.permute.xlu0 %327
    %329 = vrot.lane.b32.xlu0 %v181, 8
    %v330 = vpop.permute.xlu0 %329
    %331 = vrot.lane.b32.xlu0 %v182, 8
    %v332 = vpop.permute.xlu0 %331
    %333 = vrot.lane.b32.xlu0 %v183, 8
    %v334 = vpop.permute.xlu0 %333
    %335 = vrot.lane.b32.xlu0 %v184, 8
    %v336 = vpop.permute.xlu0 %335
    %337 = vrot.lane.b32.xlu0 %v185, 8
    %v338 = vpop.permute.xlu0 %337
    %339 = vrot.lane.b32.xlu0 %v186, 8
    %v340 = vpop.permute.xlu0 %339
    %341 = vrot.lane.b32.xlu0 %v187, 8
    %v342 = vpop.permute.xlu0 %341
    %343 = vrot.lane.b32.xlu0 %v188, 8
    %v344 = vpop.permute.xlu0 %343
    %345 = vrot.lane.b32.xlu0 %v189, 8
    %v346 = vpop.permute.xlu0 %345
    %347 = vrot.lane.b32.xlu0 %v190, 8
    %v348 = vpop.permute.xlu0 %347
    %349 = vrot.lane.b32.xlu0 %v191, 8
    %v350 = vpop.permute.xlu0 %349
    %351 = vrot.lane.b32.xlu0 %v192, 8
    %v352 = vpop.permute.xlu0 %351
    %353 = vrot.lane.b32.xlu0 %v193, 8
    %v354 = vpop.permute.xlu0 %353
    %387 = vrot.lane.b32.xlu0 %v194, 16
    %v388 = vpop.permute.xlu0 %387
    %389 = vrot.lane.b32.xlu0 %v195, 16
    %v390 = vpop.permute.xlu0 %389
    %391 = vrot.lane.b32.xlu0 %v196, 16
    %v392 = vpop.permute.xlu0 %391
    %393 = vrot.lane.b32.xlu0 %v197, 16
    %v394 = vpop.permute.xlu0 %393
    %395 = vrot.lane.b32.xlu0 %v198, 16
    %v396 = vpop.permute.xlu0 %395
    %397 = vrot.lane.b32.xlu0 %v199, 16
    %v398 = vpop.permute.xlu0 %397
    %399 = vrot.lane.b32.xlu0 %v200, 16
    %v400 = vpop.permute.xlu0 %399
    %401 = vrot.lane.b32.xlu0 %v201, 16
    %v402 = vpop.permute.xlu0 %401
    %403 = vrot.lane.b32.xlu0 %v202, 16
    %v404 = vpop.permute.xlu0 %403
    %405 = vrot.lane.b32.xlu0 %v203, 16
    %v406 = vpop.permute.xlu0 %405
    %407 = vrot.lane.b32.xlu0 %v204, 16
    %v408 = vpop.permute.xlu0 %407
    %409 = vrot.lane.b32.xlu0 %v205, 16
    %v410 = vpop.permute.xlu0 %409
    %411 = vrot.lane.b32.xlu0 %v206, 16
    %v412 = vpop.permute.xlu0 %411
    %413 = vrot.lane.b32.xlu0 %v207, 16
    %v414 = vpop.permute.xlu0 %413
    %415 = vrot.lane.b32.xlu0 %v208, 16
    %v416 = vpop.permute.xlu0 %415
    %417 = vrot.lane.b32.xlu0 %v209, 16
    %v418 = vpop.permute.xlu0 %417
    %451 = vrot.lane.b32.xlu0 %v210, 24
    %v452 = vpop.permute.xlu0 %451
    %453 = vrot.lane.b32.xlu0 %v211, 24
    %v454 = vpop.permute.xlu0 %453
    %455 = vrot.lane.b32.xlu0 %v212, 24
    %v456 = vpop.permute.xlu0 %455
    %457 = vrot.lane.b32.xlu0 %v213, 24
    %v458 = vpop.permute.xlu0 %457
    %459 = vrot.lane.b32.xlu0 %v214, 24
    %v460 = vpop.permute.xlu0 %459
    %461 = vrot.lane.b32.xlu0 %v215, 24
    %v462 = vpop.permute.xlu0 %461
    %463 = vrot.lane.b32.xlu0 %v216, 24
    %v464 = vpop.permute.xlu0 %463
    %465 = vrot.lane.b32.xlu0 %v217, 24
    %v466 = vpop.permute.xlu0 %465
    %467 = vrot.lane.b32.xlu0 %v218, 24
    %v468 = vpop.permute.xlu0 %467
    %469 = vrot.lane.b32.xlu0 %v219, 24
    %v470 = vpop.permute.xlu0 %469
    %471 = vrot.lane.b32.xlu0 %v220, 24
    %v472 = vpop.permute.xlu0 %471
    %473 = vrot.lane.b32.xlu0 %v221, 24
    %v474 = vpop.permute.xlu0 %473
    %475 = vrot.lane.b32.xlu0 %v222, 24
    %v476 = vpop.permute.xlu0 %475
    %477 = vrot.lane.b32.xlu0 %v223, 24
    %v478 = vpop.permute.xlu0 %477
    %479 = vrot.lane.b32.xlu0 %v224, 24
    %v480 = vpop.permute.xlu0 %479
    %481 = vrot.lane.b32.xlu0 %v225, 24
    %v482 = vpop.permute.xlu0 %481
    %515 = vrot.lane.b32.xlu0 %v226, 32
    %v516 = vpop.permute.xlu0 %515
    %517 = vrot.lane.b32.xlu0 %v227, 32
    %v518 = vpop.permute.xlu0 %517
    %519 = vrot.lane.b32.xlu0 %v228, 32
    %v520 = vpop.permute.xlu0 %519
    %521 = vrot.lane.b32.xlu0 %v229, 32
    %v522 = vpop.permute.xlu0 %521
    %523 = vrot.lane.b32.xlu0 %v230, 32
    %v524 = vpop.permute.xlu0 %523
    %525 = vrot.lane.b32.xlu0 %v231, 32
    %v526 = vpop.permute.xlu0 %525
    %527 = vrot.lane.b32.xlu0 %v232, 32
    %v528 = vpop.permute.xlu0 %527
    %529 = vrot.lane.b32.xlu0 %v233, 32
    %v530 = vpop.permute.xlu0 %529
    %531 = vrot.lane.b32.xlu0 %v234, 32
    %v532 = vpop.permute.xlu0 %531
    %533 = vrot.lane.b32.xlu0 %v235, 32
    %v534 = vpop.permute.xlu0 %533
    %535 = vrot.lane.b32.xlu0 %v236, 32
    %v536 = vpop.permute.xlu0 %535
    %537 = vrot.lane.b32.xlu0 %v237, 32
    %v538 = vpop.permute.xlu0 %537
    %539 = vrot.lane.b32.xlu0 %v238, 32
    %v540 = vpop.permute.xlu0 %539
    %541 = vrot.lane.b32.xlu0 %v239, 32
    %v542 = vpop.permute.xlu0 %541
    %543 = vrot.lane.b32.xlu0 %v240, 32
    %v544 = vpop.permute.xlu0 %543
    %545 = vrot.lane.b32.xlu0 %v241, 32
    %v546 = vpop.permute.xlu0 %545
    %579 = vrot.lane.b32.xlu0 %v242, 40
    %v580 = vpop.permute.xlu0 %579
    %581 = vrot.lane.b32.xlu0 %v243, 40
    %v582 = vpop.permute.xlu0 %581
    %583 = vrot.lane.b32.xlu0 %v244, 40
    %v584 = vpop.permute.xlu0 %583
    %585 = vrot.lane.b32.xlu0 %v245, 40
    %v586 = vpop.permute.xlu0 %585
    %587 = vrot.lane.b32.xlu0 %v246, 40
    %v588 = vpop.permute.xlu0 %587
    %589 = vrot.lane.b32.xlu0 %v247, 40
    %v590 = vpop.permute.xlu0 %589
    %591 = vrot.lane.b32.xlu0 %v248, 40
    %v592 = vpop.permute.xlu0 %591
    %593 = vrot.lane.b32.xlu0 %v249, 40
    %v594 = vpop.permute.xlu0 %593
    %595 = vrot.lane.b32.xlu0 %v250, 40
    %v596 = vpop.permute.xlu0 %595
    %597 = vrot.lane.b32.xlu0 %v251, 40
    %v598 = vpop.permute.xlu0 %597
    %599 = vrot.lane.b32.xlu0 %v252, 40
    %v600 = vpop.permute.xlu0 %599
    %601 = vrot.lane.b32.xlu0 %v253, 40
    %v602 = vpop.permute.xlu0 %601
    %603 = vrot.lane.b32.xlu0 %v254, 40
    %v604 = vpop.permute.xlu0 %603
    %605 = vrot.lane.b32.xlu0 %v255, 40
    %v606 = vpop.permute.xlu0 %605
    %607 = vrot.lane.b32.xlu0 %v256, 40
    %v608 = vpop.permute.xlu0 %607
    %609 = vrot.lane.b32.xlu0 %v257, 40
    %v610 = vpop.permute.xlu0 %609
    %643 = vrot.lane.b32.xlu0 %v259, 48
    %v644 = vpop.permute.xlu0 %643
    %645 = vrot.lane.b32.xlu0 %v260, 48
    %v646 = vpop.permute.xlu0 %645
    %647 = vrot.lane.b32.xlu0 %v261, 48
    %v648 = vpop.permute.xlu0 %647
    %649 = vrot.lane.b32.xlu0 %v262, 48
    %v650 = vpop.permute.xlu0 %649
    %651 = vrot.lane.b32.xlu0 %v263, 48
    %v652 = vpop.permute.xlu0 %651
    %653 = vrot.lane.b32.xlu0 %v264, 48
    %v654 = vpop.permute.xlu0 %653
    %655 = vrot.lane.b32.xlu0 %v265, 48
    %v656 = vpop.permute.xlu0 %655
    %657 = vrot.lane.b32.xlu0 %v266, 48
    %v658 = vpop.permute.xlu0 %657
    %659 = vrot.lane.b32.xlu0 %v267, 48
    %v660 = vpop.permute.xlu0 %659
    %661 = vrot.lane.b32.xlu0 %v268, 48
    %v662 = vpop.permute.xlu0 %661
    %663 = vrot.lane.b32.xlu0 %v269, 48
    %v664 = vpop.permute.xlu0 %663
    %665 = vrot.lane.b32.xlu0 %v270, 48
    %v666 = vpop.permute.xlu0 %665
    %667 = vrot.lane.b32.xlu0 %v271, 48
    %v668 = vpop.permute.xlu0 %667
    %669 = vrot.lane.b32.xlu0 %v272, 48
    %v670 = vpop.permute.xlu0 %669
    %671 = vrot.lane.b32.xlu0 %v273, 48
    %v672 = vpop.permute.xlu0 %671
    %673 = vrot.lane.b32.xlu0 %v274, 48
    %v674 = vpop.permute.xlu0 %673
    %707 = vrot.lane.b32.xlu0 %v275, 56
    %v708 = vpop.permute.xlu0 %707
    %709 = vrot.lane.b32.xlu0 %v276, 56
    %v710 = vpop.permute.xlu0 %709
    %711 = vrot.lane.b32.xlu0 %v277, 56
    %v712 = vpop.permute.xlu0 %711
    %713 = vrot.lane.b32.xlu0 %v278, 56
    %v714 = vpop.permute.xlu0 %713
    %715 = vrot.lane.b32.xlu0 %v279, 56
    %v716 = vpop.permute.xlu0 %715
    %717 = vrot.lane.b32.xlu0 %v280, 56
    %v718 = vpop.permute.xlu0 %717
    %719 = vrot.lane.b32.xlu0 %v281, 56
    %v720 = vpop.permute.xlu0 %719
    %721 = vrot.lane.b32.xlu0 %v282, 56
    %v722 = vpop.permute.xlu0 %721
    %723 = vrot.lane.b32.xlu0 %v283, 56
    %v724 = vpop.permute.xlu0 %723
    %725 = vrot.lane.b32.xlu0 %v284, 56
    %v726 = vpop.permute.xlu0 %725
    %727 = vrot.lane.b32.xlu0 %v285, 56
    %v728 = vpop.permute.xlu0 %727
    %729 = vrot.lane.b32.xlu0 %v286, 56
    %v730 = vpop.permute.xlu0 %729
    %731 = vrot.lane.b32.xlu0 %v287, 56
    %v732 = vpop.permute.xlu0 %731
    %733 = vrot.lane.b32.xlu0 %v288, 56
    %v734 = vpop.permute.xlu0 %733
    %735 = vrot.lane.b32.xlu0 %v289, 56
    %v736 = vpop.permute.xlu0 %735
    %737 = vrot.lane.b32.xlu0 %v290, 56
    %v738 = vpop.permute.xlu0 %737
    %771 = vrot.lane.b32.xlu0 %v291, 64
    %v772 = vpop.permute.xlu0 %771
    %773 = vrot.lane.b32.xlu0 %v292, 64
    %v774 = vpop.permute.xlu0 %773
    %775 = vrot.lane.b32.xlu0 %v293, 64
    %v776 = vpop.permute.xlu0 %775
    %777 = vrot.lane.b32.xlu0 %v294, 64
    %v778 = vpop.permute.xlu0 %777
    %779 = vrot.lane.b32.xlu0 %v295, 64
    %v780 = vpop.permute.xlu0 %779
    %781 = vrot.lane.b32.xlu0 %v296, 64
    %v782 = vpop.permute.xlu0 %781
    %783 = vrot.lane.b32.xlu0 %v297, 64
    %v784 = vpop.permute.xlu0 %783
    %785 = vrot.lane.b32.xlu0 %v298, 64
    %v786 = vpop.permute.xlu0 %785
    %787 = vrot.lane.b32.xlu0 %v299, 64
    %v788 = vpop.permute.xlu0 %787
    %789 = vrot.lane.b32.xlu0 %v300, 64
    %v790 = vpop.permute.xlu0 %789
    %791 = vrot.lane.b32.xlu0 %v301, 64
    %v792 = vpop.permute.xlu0 %791
    %793 = vrot.lane.b32.xlu0 %v302, 64
    %v794 = vpop.permute.xlu0 %793
    %795 = vrot.lane.b32.xlu0 %v303, 64
    %v796 = vpop.permute.xlu0 %795
    %797 = vrot.lane.b32.xlu0 %v304, 64
    %v798 = vpop.permute.xlu0 %797
    %799 = vrot.lane.b32.xlu0 %v305, 64
    %v800 = vpop.permute.xlu0 %799
    %801 = vrot.lane.b32.xlu0 %v306, 64
    %v802 = vpop.permute.xlu0 %801
    %v819 = vsel %vm45, %v162, %v324
    %v820 = vsel %vm45, %v163, %v326
    %v821 = vsel %vm45, %v164, %v328
    %v822 = vsel %vm45, %v165, %v330
    %v823 = vsel %vm45, %v166, %v332
    %v824 = vsel %vm45, %v167, %v334
    %v825 = vsel %vm45, %v168, %v336
    %v826 = vsel %vm45, %v169, %v338
    %v827 = vsel %vm45, %v170, %v340
    %v828 = vsel %vm45, %v171, %v342
    %v829 = vsel %vm45, %v172, %v344
    %v830 = vsel %vm45, %v173, %v346
    %v831 = vsel %vm45, %v174, %v348
    %v832 = vsel %vm45, %v175, %v350
    %v833 = vsel %vm45, %v176, %v352
    %v834 = vsel %vm45, %v177, %v354
    %v835 = vsel %vm87, %v819, %v388
    %v836 = vsel %vm87, %v820, %v390
    %v837 = vsel %vm87, %v821, %v392
    %v838 = vsel %vm87, %v822, %v394
    %v839 = vsel %vm87, %v823, %v396
    %v840 = vsel %vm87, %v824, %v398
    %v841 = vsel %vm87, %v825, %v400
    %v842 = vsel %vm87, %v826, %v402
    %v843 = vsel %vm87, %v827, %v404
    %v844 = vsel %vm87, %v828, %v406
    %v845 = vsel %vm87, %v829, %v408
    %v846 = vsel %vm87, %v830, %v410
    %v847 = vsel %vm87, %v831, %v412
    %v848 = vsel %vm87, %v832, %v414
    %v849 = vsel %vm87, %v833, %v416
    %v850 = vsel %vm87, %v834, %v418
    %vm851 = vcmask 195584
    %v852 = vsel %vm851, %v835, %v452
    %v853 = vsel %vm851, %v836, %v454
    %v854 = vsel %vm851, %v837, %v456
    %v855 = vsel %vm851, %v838, %v458
    %v856 = vsel %vm851, %v839, %v460
    %v857 = vsel %vm851, %v840, %v462
    %v858 = vsel %vm851, %v841, %v464
    %v859 = vsel %vm851, %v842, %v466
    %v860 = vsel %vm851, %v843, %v468
    %v861 = vsel %vm851, %v844, %v470
    %v862 = vsel %vm851, %v845, %v472
    %v863 = vsel %vm851, %v846, %v474
    %v864 = vsel %vm851, %v847, %v476
    %v865 = vsel %vm851, %v848, %v478
    %v866 = vsel %vm851, %v849, %v480
    %v867 = vsel %vm851, %v850, %v482
    %vm868 = vcmask 261120
    %v869 = vsel %vm868, %v852, %v516
    %v870 = vsel %vm868, %v853, %v518
    %v871 = vsel %vm868, %v854, %v520
    %v872 = vsel %vm868, %v855, %v522
    %v873 = vsel %vm868, %v856, %v524
    %v874 = vsel %vm868, %v857, %v526
    %v875 = vsel %vm868, %v858, %v528
    %v876 = vsel %vm868, %v859, %v530
    %v877 = vsel %vm868, %v860, %v532
    %v878 = vsel %vm868, %v861, %v534
    %v879 = vsel %vm868, %v862, %v536
    %v880 = vsel %vm868, %v863, %v538
    %v881 = vsel %vm868, %v864, %v540
    %v882 = vsel %vm868, %v865, %v542
    %v883 = vsel %vm868, %v866, %v544
    %v884 = vsel %vm868, %v867, %v546
    %vm885 = vcmask 326656
    %v886 = vsel %vm885, %v869, %v580
    %v887 = vsel %vm885, %v870, %v582
    %v888 = vsel %vm885, %v871, %v584
    %v889 = vsel %vm885, %v872, %v586
    %v890 = vsel %vm885, %v873, %v588
    %v891 = vsel %vm885, %v874, %v590
    %v892 = vsel %vm885, %v875, %v592
    %v893 = vsel %vm885, %v876, %v594
    %v894 = vsel %vm885, %v877, %v596
    %v895 = vsel %vm885, %v878, %v598
    %v896 = vsel %vm885, %v879, %v600
    %v897 = vsel %vm885, %v880, %v602
    %v898 = vsel %vm885, %v881, %v604
    %v899 = vsel %vm885, %v882, %v606
    %v900 = vsel %vm885, %v883, %v608
    %v901 = vsel %vm885, %v884, %v610
    %vm902 = vcmask 392192
    %v903 = vsel %vm902, %v886, %v644
    %v904 = vsel %vm902, %v887, %v646
    %v905 = vsel %vm902, %v888, %v648
    %v906 = vsel %vm902, %v889, %v650
    %v907 = vsel %vm902, %v890, %v652
    %v908 = vsel %vm902, %v891, %v654
    %v909 = vsel %vm902, %v892, %v656
    %v910 = vsel %vm902, %v893, %v658
    %v911 = vsel %vm902, %v894, %v660
    %v912 = vsel %vm902, %v895, %v662
    %v913 = vsel %vm902, %v896, %v664
    %v914 = vsel %vm902, %v897, %v666
    %v915 = vsel %vm902, %v898, %v668
    %v916 = vsel %vm902, %v899, %v670
    %v917 = vsel %vm902, %v900, %v672
    %v918 = vsel %vm902, %v901, %v674
    %vm919 = vcmask 457728
    %v920 = vsel %vm919, %v903, %v708
    %v921 = vsel %vm919, %v904, %v710
    %v922 = vsel %vm919, %v905, %v712
    %v923 = vsel %vm919, %v906, %v714
    %v924 = vsel %vm919, %v907, %v716
    %v925 = vsel %vm919, %v908, %v718
    %v926 = vsel %vm919, %v909, %v720
    %v927 = vsel %vm919, %v910, %v722
    %v928 = vsel %vm919, %v911, %v724
    %v929 = vsel %vm919, %v912, %v726
    %v930 = vsel %vm919, %v913, %v728
    %v931 = vsel %vm919, %v914, %v730
    %v932 = vsel %vm919, %v915, %v732
    %v933 = vsel %vm919, %v916, %v734
    %v934 = vsel %vm919, %v917, %v736
    %v935 = vsel %vm919, %v918, %v738
    %vm936 = vcmask 523264
    %v937 = vsel %vm936, %v920, %v772
    %v938 = vsel %vm936, %v921, %v774
    %v939 = vsel %vm936, %v922, %v776
    %v940 = vsel %vm936, %v923, %v778
    %v941 = vsel %vm936, %v924, %v780
    %v942 = vsel %vm936, %v925, %v782
    %v943 = vsel %vm936, %v926, %v784
    %v944 = vsel %vm936, %v927, %v786
    %v945 = vsel %vm936, %v928, %v788
    %v946 = vsel %vm936, %v929, %v790
    %v947 = vsel %vm936, %v930, %v792
    %v948 = vsel %vm936, %v931, %v794
    %v949 = vsel %vm936, %v932, %v796
    %v950 = vsel %vm936, %v933, %v798
    %v951 = vsel %vm936, %v934, %v800
    %v952 = vsel %vm936, %v935, %v802
    %v953 = vld [vmem:[%s1] sm:$0xff]
    %v954 = vld [vmem:[%s1 + $0x8] sm:$0xff]
    %v955 = vld [vmem:[%s1 + $0x10] sm:$0xff]
    %v956 = vld [vmem:[%s1 + $0x18] sm:$0xff]
    %v957 = vld [vmem:[%s1 + $0x20] sm:$0xff]
    %v958 = vld [vmem:[%s1 + $0x28] sm:$0xff]
    %v959 = vld [vmem:[%s1 + $0x30] sm:$0xff]
    %v960 = vld [vmem:[%s1 + $0x38] sm:$0xff]
    %v961 = vld [vmem:[%s1 + $0x40] sm:$0xff]
    %v962 = vld [vmem:[%s2] sm:$0x1]
    %v964 = vlaneseq
    %v965 = vshrl.u32 %v964, 7
    %v966 = vsub.s32 0, %v965
    %v967 = vrot.slane %v962, %v966
    %vm969 = vcmask 588800
    %v971 = vsel %vm969, %v937, 0
    %v974 = vsel %vm969, %v938, 0
    %v977 = vsel %vm969, %v939, 0
    %v980 = vsel %vm969, %v940, 0
    %v983 = vsel %vm969, %v941, 0
    %v986 = vsel %vm969, %v942, 0
    %v989 = vsel %vm969, %v943, 0
    %v992 = vsel %vm969, %v944, 0
    %v995 = vsel %vm969, %v945, 0
    %v998 = vsel %vm969, %v946, 0
    %v1001 = vsel %vm969, %v947, 0
    %v1004 = vsel %vm969, %v948, 0
    %v1007 = vsel %vm969, %v949, 0
    %v1010 = vsel %vm969, %v950, 0
    %v1013 = vsel %vm969, %v951, 0
    %v1016 = vsel %vm969, %v952, 0
    %1018 = vmatprep.subr.mxu0 0.0
    %1019 = vmatpush1.msra.mxu0 0.0
    %1020 = vmatprep.subr.mxu0 0.0
    %1021 = vmatpush1.msra.mxu0 0.0
    %1022 = vmatprep.subr.mxu0 0.0
    %1023 = vmatpush1.msra.mxu0 0.0
    %1024 = vmatprep.subr.mxu0 0.0
    %1025 = vmatpush1.msra.mxu0 0.0
    %1026 = vmatprep.subr.mxu0 0.0
    %1027 = vmatpush1.msra.mxu0 0.0
    %1028 = vmatprep.subr.mxu0 0.0
    %1029 = vmatpush1.msra.mxu0 0.0
    %1030 = vmatprep.subr.mxu0 0.0
    %1031 = vmatpush1.msra.mxu0 0.0
    %1032 = vmatprep.subr.mxu0 0.0
    %1033 = vmatpush1.msra.mxu0 %v961
    %1034 = vmatprep.subr.mxu0 0.0
    %1035 = vmatpush1.msra.mxu0 %v960
    %1036 = vmatprep.subr.mxu0 0.0
    %1037 = vmatpush1.msra.mxu0 %v959
    %1038 = vmatprep.subr.mxu0 0.0
    %1039 = vmatpush1.msra.mxu0 %v958
    %1040 = vmatprep.subr.mxu0 0.0
    %1041 = vmatpush1.msra.mxu0 %v957
    %1042 = vmatprep.subr.mxu0 0.0
    %1043 = vmatpush1.msra.mxu0 %v956
    %1044 = vmatprep.subr.mxu0 0.0
    %1045 = vmatpush1.msra.mxu0 %v955
    %1046 = vmatprep.subr.mxu0 0.0
    %1047 = vmatpush1.msra.mxu0 %v954
    %1048 = vmatprep.subr.mxu0 0.0
    %1049 = vmatpush1.msra.mxu0 %v953
    %1050 = vmatprep.subr.mxu0 0.0
    %1051 = vmatpush2.msra.mxu0 0.0
    %1052 = vmatprep.subr.mxu0 0.0
    %1053 = vmatpush2.msra.mxu0 0.0
    %1054 = vmatprep.subr.mxu0 0.0
    %1055 = vmatpush2.msra.mxu0 0.0
    %1056 = vmatprep.subr.mxu0 0.0
    %1057 = vmatpush2.msra.mxu0 0.0
    %1058 = vmatprep.subr.mxu0 0.0
    %1059 = vmatpush2.msra.mxu0 0.0
    %1060 = vmatprep.subr.mxu0 0.0
    %1061 = vmatpush2.msra.mxu0 0.0
    %1062 = vmatprep.subr.mxu0 0.0
    %1063 = vmatpush2.msra.mxu0 0.0
    %1064 = vmatprep.subr.mxu0 0.0
    %1065 = vmatpush2.msra.mxu0 0.0
    %1066 = vmatprep.subr.mxu0 0.0
    %1067 = vmatpush2.msra.mxu0 0.0
    %1068 = vmatprep.subr.mxu0 0.0
    %1069 = vmatpush2.msra.mxu0 0.0
    %1070 = vmatprep.subr.mxu0 0.0
    %1071 = vmatpush2.msra.mxu0 0.0
    %1072 = vmatprep.subr.mxu0 0.0
    %1073 = vmatpush2.msra.mxu0 0.0
    %1074 = vmatprep.subr.mxu0 0.0
    %1075 = vmatpush2.msra.mxu0 0.0
    %1076 = vmatprep.subr.mxu0 0.0
    %1077 = vmatpush2.msra.mxu0 0.0
    %1078 = vmatprep.subr.mxu0 0.0
    %1079 = vmatpush2.msra.mxu0 0.0
    %1080 = vmatprep.subr.mxu0 0.0
    %1081 = vmatpush2.msra.mxu0 0.0
    %1082 = vmatprep.mubr.f32.mxu0 0.0
    %1083 = vmatmul.mubr.f32.gmra.mxu0 %v971
    %v1084 = vpop.f32.mrf.mxu0
    %v1085 = vadd.f32 %v967, %v1084
    %v1086 = vpop.f32.mrf.mxu0
    %1087 = vmatprep.mubr.f32.mxu0 0.0
    %1088 = vmatmul.mubr.f32.gmra.mxu0 %v974
    %v1089 = vpop.f32.mrf.mxu0
    %v1090 = vadd.f32 %v967, %v1089
    %v1091 = vpop.f32.mrf.mxu0
    %1092 = vmatprep.mubr.f32.mxu0 0.0
    %1093 = vmatmul.mubr.f32.gmra.mxu0 %v977
    %v1094 = vpop.f32.mrf.mxu0
    %v1095 = vadd.f32 %v967, %v1094
    %v1096 = vpop.f32.mrf.mxu0
    %1097 = vmatprep.mubr.f32.mxu0 0.0
    %1098 = vmatmul.mubr.f32.gmra.mxu0 %v980
    %v1099 = vpop.f32.mrf.mxu0
    %v1100 = vadd.f32 %v967, %v1099
    %v1101 = vpop.f32.mrf.mxu0
    %1102 = vmatprep.mubr.f32.mxu0 0.0
    %1103 = vmatmul.mubr.f32.gmra.mxu0 %v983
    %v1104 = vpop.f32.mrf.mxu0
    %v1105 = vadd.f32 %v967, %v1104
    %v1106 = vpop.f32.mrf.mxu0
    %1107 = vmatprep.mubr.f32.mxu0 0.0
    %1108 = vmatmul.mubr.f32.gmra.mxu0 %v986
    %v1109 = vpop.f32.mrf.mxu0
    %v1110 = vadd.f32 %v967, %v1109
    %v1111 = vpop.f32.mrf.mxu0
    %1112 = vmatprep.mubr.f32.mxu0 0.0
    %1113 = vmatmul.mubr.f32.gmra.mxu0 %v989
    %v1114 = vpop.f32.mrf.mxu0
    %v1115 = vadd.f32 %v967, %v1114
    %v1116 = vpop.f32.mrf.mxu0
    %1117 = vmatprep.mubr.f32.mxu0 0.0
    %1118 = vmatmul.mubr.f32.gmra.mxu0 %v992
    %v1119 = vpop.f32.mrf.mxu0
    %v1120 = vadd.f32 %v967, %v1119
    %v1121 = vpop.f32.mrf.mxu0
    %1122 = vmatprep.mubr.f32.mxu0 0.0
    %1123 = vmatmul.mubr.f32.gmra.mxu0 %v995
    %v1124 = vpop.f32.mrf.mxu0
    %v1125 = vadd.f32 %v967, %v1124
    %v1126 = vpop.f32.mrf.mxu0
    %1127 = vmatprep.mubr.f32.mxu0 0.0
    %1128 = vmatmul.mubr.f32.gmra.mxu0 %v998
    %v1129 = vpop.f32.mrf.mxu0
    %v1130 = vadd.f32 %v967, %v1129
    %v1131 = vpop.f32.mrf.mxu0
    %1132 = vmatprep.mubr.f32.mxu0 0.0
    %1133 = vmatmul.mubr.f32.gmra.mxu0 %v1001
    %v1134 = vpop.f32.mrf.mxu0
    %v1135 = vadd.f32 %v967, %v1134
    %v1136 = vpop.f32.mrf.mxu0
    %1137 = vmatprep.mubr.f32.mxu0 0.0
    %1138 = vmatmul.mubr.f32.gmra.mxu0 %v1004
    %v1139 = vpop.f32.mrf.mxu0
    %v1140 = vadd.f32 %v967, %v1139
    %v1141 = vpop.f32.mrf.mxu0
    %1142 = vmatprep.mubr.f32.mxu0 0.0
    %1143 = vmatmul.mubr.f32.gmra.mxu0 %v1007
    %v1144 = vpop.f32.mrf.mxu0
    %v1145 = vadd.f32 %v967, %v1144
    %v1146 = vpop.f32.mrf.mxu0
    %1147 = vmatprep.mubr.f32.mxu0 0.0
    %1148 = vmatmul.mubr.f32.gmra.mxu0 %v1010
    %v1149 = vpop.f32.mrf.mxu0
    %v1150 = vadd.f32 %v967, %v1149
    %v1151 = vpop.f32.mrf.mxu0
    %1152 = vmatprep.mubr.f32.mxu0 0.0
    %1153 = vmatmul.mubr.f32.gmra.mxu0 %v1013
    %v1154 = vpop.f32.mrf.mxu0
    %v1155 = vadd.f32 %v967, %v1154
    %v1156 = vpop.f32.mrf.mxu0
    %1157 = vmatprep.mubr.f32.mxu0 0.0
    %1158 = vmatmul.mubr.f32.gmra.mxu0 %v1016
    %v1159 = vpop.f32.mrf.mxu0
    %v1160 = vadd.f32 %v967, %v1159
    %v1161 = vpop.f32.mrf.mxu0
    %1162 = vdwg.mxu0
    %v1163 = vmax.f32 %v1085, 0.0
    %v1164 = vmax.f32 %v1090, 0.0
    %v1165 = vmax.f32 %v1095, 0.0
    %v1166 = vmax.f32 %v1100, 0.0
    %v1167 = vmax.f32 %v1105, 0.0
    %v1168 = vmax.f32 %v1110, 0.0
    %v1169 = vmax.f32 %v1115, 0.0
    %v1170 = vmax.f32 %v1120, 0.0
    %v1171 = vmax.f32 %v1125, 0.0
    %v1172 = vmax.f32 %v1130, 0.0
    %v1173 = vmax.f32 %v1135, 0.0
    %v1174 = vmax.f32 %v1140, 0.0
    %v1175 = vmax.f32 %v1145, 0.0
    %v1176 = vmax.f32 %v1150, 0.0
    %v1177 = vmax.f32 %v1155, 0.0
    %v1178 = vmax.f32 %v1160, 0.0
    %s1179 = scalar_lea.vmem [#allocation3], 16
    %1180 = vst.msk [vmem:[%s1179 + $0x1] sm:$0xff] %vm87, %v1163
    %1181 = vst.msk [vmem:[%s1179 + $0x11] sm:$0xff] %vm87, %v1164
    %1182 = vst.msk [vmem:[%s1179 + $0x21] sm:$0xff] %vm87, %v1165
    %1183 = vst.msk [vmem:[%s1179 + $0x31] sm:$0xff] %vm87, %v1166
    %1184 = vst.msk [vmem:[%s1179 + $0x41] sm:$0xff] %vm87, %v1167
    %1185 = vst.msk [vmem:[%s1179 + $0x51] sm:$0xff] %vm87, %v1168
    %1186 = vst.msk [vmem:[%s1179 + $0x61] sm:$0xff] %vm87, %v1169
    %1187 = vst.msk [vmem:[%s1179 + $0x71] sm:$0xff] %vm87, %v1170
    %1188 = vst.msk [vmem:[%s1179 + $0xa1] sm:$0xff] %vm87, %v1171
    %1189 = vst.msk [vmem:[%s1179 + $0xb1] sm:$0xff] %vm87, %v1172
    %1190 = vst.msk [vmem:[%s1179 + $0xc1] sm:$0xff] %vm87, %v1173
    %1191 = vst.msk [vmem:[%s1179 + $0xd1] sm:$0xff] %vm87, %v1174
    %1192 = vst.msk [vmem:[%s1179 + $0xe1] sm:$0xff] %vm87, %v1175
    %1193 = vst.msk [vmem:[%s1179 + $0xf1] sm:$0xff] %vm87, %v1176
    %1194 = vst.msk [vmem:[%s1179 + $0x101] sm:$0xff] %vm87, %v1177
    %1195 = vst.msk [vmem:[%s1179 + $0x111] sm:$0xff] %vm87, %v1178
    %v1196 = vld [vmem:[#allocation3] sm:$0xff]
    %v1197 = vld [vmem:[#allocation3 + $0x10] sm:$0xff]
    %v1198 = vld [vmem:[#allocation3 + $0x20] sm:$0xff]
    %v1199 = vld [vmem:[#allocation3 + $0x30] sm:$0xff]
    %v1200 = vld [vmem:[#allocation3 + $0x40] sm:$0xff]
    %v1201 = vld [vmem:[#allocation3 + $0x50] sm:$0xff]
    %v1202 = vld [vmem:[#allocation3 + $0x60] sm:$0xff]
    %v1203 = vld [vmem:[#allocation3 + $0x70] sm:$0xff]
    %v1204 = vld [vmem:[#allocation3 + $0xa0] sm:$0xff]
    %v1205 = vld [vmem:[#allocation3 + $0xb0] sm:$0xff]
    %v1206 = vld [vmem:[#allocation3 + $0xc0] sm:$0xff]
    %v1207 = vld [vmem:[#allocation3 + $0xd0] sm:$0xff]
    %v1208 = vld [vmem:[#allocation3 + $0xe0] sm:$0xff]
    %v1209 = vld [vmem:[#allocation3 + $0xf0] sm:$0xff]
    %v1210 = vld [vmem:[#allocation3 + $0x100] sm:$0xff]
    %v1211 = vld [vmem:[#allocation3 + $0x110] sm:$0xff]
    %v1212 = vld [vmem:[#allocation3 + $0x1] sm:$0xff]
    %v1213 = vld [vmem:[#allocation3 + $0x11] sm:$0xff]
    %v1214 = vld [vmem:[#allocation3 + $0x21] sm:$0xff]
    %v1215 = vld [vmem:[#allocation3 + $0x31] sm:$0xff]
    %v1216 = vld [vmem:[#allocation3 + $0x41] sm:$0xff]
    %v1217 = vld [vmem:[#allocation3 + $0x51] sm:$0xff]
    %v1218 = vld [vmem:[#allocation3 + $0x61] sm:$0xff]
    %v1219 = vld [vmem:[#allocation3 + $0x71] sm:$0xff]
    %v1220 = vld [vmem:[#allocation3 + $0xa1] sm:$0xff]
    %v1221 = vld [vmem:[#allocation3 + $0xb1] sm:$0xff]
    %v1222 = vld [vmem:[#allocation3 + $0xc1] sm:$0xff]
    %v1223 = vld [vmem:[#allocation3 + $0xd1] sm:$0xff]
    %v1224 = vld [vmem:[#allocation3 + $0xe1] sm:$0xff]
    %v1225 = vld [vmem:[#allocation3 + $0xf1] sm:$0xff]
    %v1226 = vld [vmem:[#allocation3 + $0x101] sm:$0xff]
    %v1227 = vld [vmem:[#allocation3 + $0x111] sm:$0xff]
    %v1228 = vld [vmem:[#allocation3 + $0x2] sm:$0xff]
    %v1229 = vld [vmem:[#allocation3 + $0x12] sm:$0xff]
    %v1230 = vld [vmem:[#allocation3 + $0x22] sm:$0xff]
    %v1231 = vld [vmem:[#allocation3 + $0x32] sm:$0xff]
    %v1232 = vld [vmem:[#allocation3 + $0x42] sm:$0xff]
    %v1233 = vld [vmem:[#allocation3 + $0x52] sm:$0xff]
    %v1234 = vld [vmem:[#allocation3 + $0x62] sm:$0xff]
    %v1235 = vld [vmem:[#allocation3 + $0x72] sm:$0xff]
    %v1236 = vld [vmem:[#allocation3 + $0xa2] sm:$0xff]
    %v1237 = vld [vmem:[#allocation3 + $0xb2] sm:$0xff]
    %v1238 = vld [vmem:[#allocation3 + $0xc2] sm:$0xff]
    %v1239 = vld [vmem:[#allocation3 + $0xd2] sm:$0xff]
    %v1240 = vld [vmem:[#allocation3 + $0xe2] sm:$0xff]
    %v1241 = vld [vmem:[#allocation3 + $0xf2] sm:$0xff]
    %v1242 = vld [vmem:[#allocation3 + $0x102] sm:$0xff]
    %v1243 = vld [vmem:[#allocation3 + $0x112] sm:$0xff]
    %v1244 = vld [vmem:[%s1179] sm:$0xff]
    %v1245 = vld [vmem:[%s1179 + $0x10] sm:$0xff]
    %v1246 = vld [vmem:[%s1179 + $0x20] sm:$0xff]
    %v1247 = vld [vmem:[%s1179 + $0x30] sm:$0xff]
    %v1248 = vld [vmem:[%s1179 + $0x40] sm:$0xff]
    %v1249 = vld [vmem:[%s1179 + $0x50] sm:$0xff]
    %v1250 = vld [vmem:[%s1179 + $0x60] sm:$0xff]
    %v1251 = vld [vmem:[%s1179 + $0x70] sm:$0xff]
    %v1252 = vld [vmem:[%s1179 + $0xa0] sm:$0xff]
    %v1253 = vld [vmem:[%s1179 + $0xb0] sm:$0xff]
    %v1254 = vld [vmem:[%s1179 + $0xc0] sm:$0xff]
    %v1255 = vld [vmem:[%s1179 + $0xd0] sm:$0xff]
    %v1256 = vld [vmem:[%s1179 + $0xe0] sm:$0xff]
    %v1257 = vld [vmem:[%s1179 + $0xf0] sm:$0xff]
    %v1258 = vld [vmem:[%s1179 + $0x100] sm:$0xff]
    %v1259 = vld [vmem:[%s1179 + $0x110] sm:$0xff]
    %v1260 = vld [vmem:[%s1179 + $0x1] sm:$0xff]
    %v1261 = vld [vmem:[%s1179 + $0x11] sm:$0xff]
    %v1262 = vld [vmem:[%s1179 + $0x21] sm:$0xff]
    %v1263 = vld [vmem:[%s1179 + $0x31] sm:$0xff]
    %v1264 = vld [vmem:[%s1179 + $0x41] sm:$0xff]
    %v1265 = vld [vmem:[%s1179 + $0x51] sm:$0xff]
    %v1266 = vld [vmem:[%s1179 + $0x61] sm:$0xff]
    %v1267 = vld [vmem:[%s1179 + $0x71] sm:$0xff]
    %v1268 = vld [vmem:[%s1179 + $0xa1] sm:$0xff]
    %v1269 = vld [vmem:[%s1179 + $0xb1] sm:$0xff]
    %v1270 = vld [vmem:[%s1179 + $0xc1] sm:$0xff]
    %v1271 = vld [vmem:[%s1179 + $0xd1] sm:$0xff]
    %v1272 = vld [vmem:[%s1179 + $0xe1] sm:$0xff]
    %v1273 = vld [vmem:[%s1179 + $0xf1] sm:$0xff]
    %v1274 = vld [vmem:[%s1179 + $0x101] sm:$0xff]
    %v1275 = vld [vmem:[%s1179 + $0x111] sm:$0xff]
    %v1276 = vld [vmem:[%s1179 + $0x2] sm:$0xff]
    %v1277 = vld [vmem:[%s1179 + $0x12] sm:$0xff]
    %v1278 = vld [vmem:[%s1179 + $0x22] sm:$0xff]
    %v1279 = vld [vmem:[%s1179 + $0x32] sm:$0xff]
    %v1280 = vld [vmem:[%s1179 + $0x42] sm:$0xff]
    %v1281 = vld [vmem:[%s1179 + $0x52] sm:$0xff]
    %v1282 = vld [vmem:[%s1179 + $0x62] sm:$0xff]
    %v1283 = vld [vmem:[%s1179 + $0x72] sm:$0xff]
    %v1284 = vld [vmem:[%s1179 + $0xa2] sm:$0xff]
    %v1285 = vld [vmem:[%s1179 + $0xb2] sm:$0xff]
    %v1286 = vld [vmem:[%s1179 + $0xc2] sm:$0xff]
    %v1287 = vld [vmem:[%s1179 + $0xd2] sm:$0xff]
    %v1288 = vld [vmem:[%s1179 + $0xe2] sm:$0xff]
    %v1289 = vld [vmem:[%s1179 + $0xf2] sm:$0xff]
    %v1290 = vld [vmem:[%s1179 + $0x102] sm:$0xff]
    %v1291 = vld [vmem:[%s1179 + $0x112] sm:$0xff]
    %s1292 = scalar_lea.vmem [#allocation3], 32
    %v1293 = vld [vmem:[%s1292] sm:$0xff]
    %v1294 = vld [vmem:[%s1292 + $0x10] sm:$0xff]
    %v1295 = vld [vmem:[%s1292 + $0x20] sm:$0xff]
    %v1296 = vld [vmem:[%s1292 + $0x30] sm:$0xff]
    %v1297 = vld [vmem:[%s1292 + $0x40] sm:$0xff]
    %v1298 = vld [vmem:[%s1292 + $0x50] sm:$0xff]
    %v1299 = vld [vmem:[%s1292 + $0x60] sm:$0xff]
    %v1300 = vld [vmem:[%s1292 + $0x70] sm:$0xff]
    %v1301 = vld [vmem:[%s1292 + $0xa0] sm:$0xff]
    %v1302 = vld [vmem:[%s1292 + $0xb0] sm:$0xff]
    %v1303 = vld [vmem:[%s1292 + $0xc0] sm:$0xff]
    %v1304 = vld [vmem:[%s1292 + $0xd0] sm:$0xff]
    %v1305 = vld [vmem:[%s1292 + $0xe0] sm:$0xff]
    %v1306 = vld [vmem:[%s1292 + $0xf0] sm:$0xff]
    %v1307 = vld [vmem:[%s1292 + $0x100] sm:$0xff]
    %v1308 = vld [vmem:[%s1292 + $0x110] sm:$0xff]
    %v1309 = vld [vmem:[%s1292 + $0x1] sm:$0xff]
    %v1310 = vld [vmem:[%s1292 + $0x11] sm:$0xff]
    %v1311 = vld [vmem:[%s1292 + $0x21] sm:$0xff]
    %v1312 = vld [vmem:[%s1292 + $0x31] sm:$0xff]
    %v1313 = vld [vmem:[%s1292 + $0x41] sm:$0xff]
    %v1314 = vld [vmem:[%s1292 + $0x51] sm:$0xff]
    %v1315 = vld [vmem:[%s1292 + $0x61] sm:$0xff]
    %v1316 = vld [vmem:[%s1292 + $0x71] sm:$0xff]
    %v1317 = vld [vmem:[%s1292 + $0xa1] sm:$0xff]
    %v1318 = vld [vmem:[%s1292 + $0xb1] sm:$0xff]
    %v1319 = vld [vmem:[%s1292 + $0xc1] sm:$0xff]
    %v1320 = vld [vmem:[%s1292 + $0xd1] sm:$0xff]
    %v1321 = vld [vmem:[%s1292 + $0xe1] sm:$0xff]
    %v1322 = vld [vmem:[%s1292 + $0xf1] sm:$0xff]
    %v1323 = vld [vmem:[%s1292 + $0x101] sm:$0xff]
    %v1324 = vld [vmem:[%s1292 + $0x111] sm:$0xff]
    %v1325 = vld [vmem:[%s1292 + $0x2] sm:$0xff]
    %v1326 = vld [vmem:[%s1292 + $0x12] sm:$0xff]
    %v1327 = vld [vmem:[%s1292 + $0x22] sm:$0xff]
    %v1328 = vld [vmem:[%s1292 + $0x32] sm:$0xff]
    %v1329 = vld [vmem:[%s1292 + $0x42] sm:$0xff]
    %v1330 = vld [vmem:[%s1292 + $0x52] sm:$0xff]
    %v1331 = vld [vmem:[%s1292 + $0x62] sm:$0xff]
    %v1332 = vld [vmem:[%s1292 + $0x72] sm:$0xff]
    %v1333 = vld [vmem:[%s1292 + $0xa2] sm:$0xff]
    %v1334 = vld [vmem:[%s1292 + $0xb2] sm:$0xff]
    %v1335 = vld [vmem:[%s1292 + $0xc2] sm:$0xff]
    %v1336 = vld [vmem:[%s1292 + $0xd2] sm:$0xff]
    %v1337 = vld [vmem:[%s1292 + $0xe2] sm:$0xff]
    %v1338 = vld [vmem:[%s1292 + $0xf2] sm:$0xff]
    %v1339 = vld [vmem:[%s1292 + $0x102] sm:$0xff]
    %v1340 = vld [vmem:[%s1292 + $0x112] sm:$0xff]
    %1357 = vrot.lane.b32.xlu0 %v1212, 16
    %v1358 = vpop.permute.xlu0 %1357
    %1359 = vrot.lane.b32.xlu0 %v1213, 16
    %v1360 = vpop.permute.xlu0 %1359
    %1361 = vrot.lane.b32.xlu0 %v1214, 16
    %v1362 = vpop.permute.xlu0 %1361
    %1363 = vrot.lane.b32.xlu0 %v1215, 16
    %v1364 = vpop.permute.xlu0 %1363
    %1365 = vrot.lane.b32.xlu0 %v1216, 16
    %v1366 = vpop.permute.xlu0 %1365
    %1367 = vrot.lane.b32.xlu0 %v1217, 16
    %v1368 = vpop.permute.xlu0 %1367
    %1369 = vrot.lane.b32.xlu0 %v1218, 16
    %v1370 = vpop.permute.xlu0 %1369
    %1371 = vrot.lane.b32.xlu0 %v1219, 16
    %v1372 = vpop.permute.xlu0 %1371
    %1373 = vrot.lane.b32.xlu0 %v1220, 16
    %v1374 = vpop.permute.xlu0 %1373
    %1375 = vrot.lane.b32.xlu0 %v1221, 16
    %v1376 = vpop.permute.xlu0 %1375
    %1377 = vrot.lane.b32.xlu0 %v1222, 16
    %v1378 = vpop.permute.xlu0 %1377
    %1379 = vrot.lane.b32.xlu0 %v1223, 16
    %v1380 = vpop.permute.xlu0 %1379
    %1381 = vrot.lane.b32.xlu0 %v1224, 16
    %v1382 = vpop.permute.xlu0 %1381
    %1383 = vrot.lane.b32.xlu0 %v1225, 16
    %v1384 = vpop.permute.xlu0 %1383
    %1385 = vrot.lane.b32.xlu0 %v1226, 16
    %v1386 = vpop.permute.xlu0 %1385
    %1387 = vrot.lane.b32.xlu0 %v1227, 16
    %v1388 = vpop.permute.xlu0 %1387
    %1421 = vrot.lane.b32.xlu0 %v1228, 32
    %v1422 = vpop.permute.xlu0 %1421
    %1423 = vrot.lane.b32.xlu0 %v1229, 32
    %v1424 = vpop.permute.xlu0 %1423
    %1425 = vrot.lane.b32.xlu0 %v1230, 32
    %v1426 = vpop.permute.xlu0 %1425
    %1427 = vrot.lane.b32.xlu0 %v1231, 32
    %v1428 = vpop.permute.xlu0 %1427
    %1429 = vrot.lane.b32.xlu0 %v1232, 32
    %v1430 = vpop.permute.xlu0 %1429
    %1431 = vrot.lane.b32.xlu0 %v1233, 32
    %v1432 = vpop.permute.xlu0 %1431
    %1433 = vrot.lane.b32.xlu0 %v1234, 32
    %v1434 = vpop.permute.xlu0 %1433
    %1435 = vrot.lane.b32.xlu0 %v1235, 32
    %v1436 = vpop.permute.xlu0 %1435
    %1437 = vrot.lane.b32.xlu0 %v1236, 32
    %v1438 = vpop.permute.xlu0 %1437
    %1439 = vrot.lane.b32.xlu0 %v1237, 32
    %v1440 = vpop.permute.xlu0 %1439
    %1441 = vrot.lane.b32.xlu0 %v1238, 32
    %v1442 = vpop.permute.xlu0 %1441
    %1443 = vrot.lane.b32.xlu0 %v1239, 32
    %v1444 = vpop.permute.xlu0 %1443
    %1445 = vrot.lane.b32.xlu0 %v1240, 32
    %v1446 = vpop.permute.xlu0 %1445
    %1447 = vrot.lane.b32.xlu0 %v1241, 32
    %v1448 = vpop.permute.xlu0 %1447
    %1449 = vrot.lane.b32.xlu0 %v1242, 32
    %v1450 = vpop.permute.xlu0 %1449
    %1451 = vrot.lane.b32.xlu0 %v1243, 32
    %v1452 = vpop.permute.xlu0 %1451
    %1485 = vrot.lane.b32.xlu0 %v1244, 48
    %v1486 = vpop.permute.xlu0 %1485
    %1487 = vrot.lane.b32.xlu0 %v1245, 48
    %v1488 = vpop.permute.xlu0 %1487
    %1489 = vrot.lane.b32.xlu0 %v1246, 48
    %v1490 = vpop.permute.xlu0 %1489
    %1491 = vrot.lane.b32.xlu0 %v1247, 48
    %v1492 = vpop.permute.xlu0 %1491
    %1493 = vrot.lane.b32.xlu0 %v1248, 48
    %v1494 = vpop.permute.xlu0 %1493
    %1495 = vrot.lane.b32.xlu0 %v1249, 48
    %v1496 = vpop.permute.xlu0 %1495
    %1497 = vrot.lane.b32.xlu0 %v1250, 48
    %v1498 = vpop.permute.xlu0 %1497
    %1499 = vrot.lane.b32.xlu0 %v1251, 48
    %v1500 = vpop.permute.xlu0 %1499
    %1501 = vrot.lane.b32.xlu0 %v1252, 48
    %v1502 = vpop.permute.xlu0 %1501
    %1503 = vrot.lane.b32.xlu0 %v1253, 48
    %v1504 = vpop.permute.xlu0 %1503
    %1505 = vrot.lane.b32.xlu0 %v1254, 48
    %v1506 = vpop.permute.xlu0 %1505
    %1507 = vrot.lane.b32.xlu0 %v1255, 48
    %v1508 = vpop.permute.xlu0 %1507
    %1509 = vrot.lane.b32.xlu0 %v1256, 48
    %v1510 = vpop.permute.xlu0 %1509
    %1511 = vrot.lane.b32.xlu0 %v1257, 48
    %v1512 = vpop.permute.xlu0 %1511
    %1513 = vrot.lane.b32.xlu0 %v1258, 48
    %v1514 = vpop.permute.xlu0 %1513
    %1515 = vrot.lane.b32.xlu0 %v1259, 48
    %v1516 = vpop.permute.xlu0 %1515
    %1549 = vrot.lane.b32.xlu0 %v1260, 64
    %v1550 = vpop.permute.xlu0 %1549
    %1551 = vrot.lane.b32.xlu0 %v1261, 64
    %v1552 = vpop.permute.xlu0 %1551
    %1553 = vrot.lane.b32.xlu0 %v1262, 64
    %v1554 = vpop.permute.xlu0 %1553
    %1555 = vrot.lane.b32.xlu0 %v1263, 64
    %v1556 = vpop.permute.xlu0 %1555
    %1557 = vrot.lane.b32.xlu0 %v1264, 64
    %v1558 = vpop.permute.xlu0 %1557
    %1559 = vrot.lane.b32.xlu0 %v1265, 64
    %v1560 = vpop.permute.xlu0 %1559
    %1561 = vrot.lane.b32.xlu0 %v1266, 64
    %v1562 = vpop.permute.xlu0 %1561
    %1563 = vrot.lane.b32.xlu0 %v1267, 64
    %v1564 = vpop.permute.xlu0 %1563
    %1565 = vrot.lane.b32.xlu0 %v1268, 64
    %v1566 = vpop.permute.xlu0 %1565
    %1567 = vrot.lane.b32.xlu0 %v1269, 64
    %v1568 = vpop.permute.xlu0 %1567
    %1569 = vrot.lane.b32.xlu0 %v1270, 64
    %v1570 = vpop.permute.xlu0 %1569
    %1571 = vrot.lane.b32.xlu0 %v1271, 64
    %v1572 = vpop.permute.xlu0 %1571
    %1573 = vrot.lane.b32.xlu0 %v1272, 64
    %v1574 = vpop.permute.xlu0 %1573
    %1575 = vrot.lane.b32.xlu0 %v1273, 64
    %v1576 = vpop.permute.xlu0 %1575
    %1577 = vrot.lane.b32.xlu0 %v1274, 64
    %v1578 = vpop.permute.xlu0 %1577
    %1579 = vrot.lane.b32.xlu0 %v1275, 64
    %v1580 = vpop.permute.xlu0 %1579
    %1613 = vrot.lane.b32.xlu0 %v1276, 80
    %v1614 = vpop.permute.xlu0 %1613
    %1615 = vrot.lane.b32.xlu0 %v1277, 80
    %v1616 = vpop.permute.xlu0 %1615
    %1617 = vrot.lane.b32.xlu0 %v1278, 80
    %v1618 = vpop.permute.xlu0 %1617
    %1619 = vrot.lane.b32.xlu0 %v1279, 80
    %v1620 = vpop.permute.xlu0 %1619
    %1621 = vrot.lane.b32.xlu0 %v1280, 80
    %v1622 = vpop.permute.xlu0 %1621
    %1623 = vrot.lane.b32.xlu0 %v1281, 80
    %v1624 = vpop.permute.xlu0 %1623
    %1625 = vrot.lane.b32.xlu0 %v1282, 80
    %v1626 = vpop.permute.xlu0 %1625
    %1627 = vrot.lane.b32.xlu0 %v1283, 80
    %v1628 = vpop.permute.xlu0 %1627
    %1629 = vrot.lane.b32.xlu0 %v1284, 80
    %v1630 = vpop.permute.xlu0 %1629
    %1631 = vrot.lane.b32.xlu0 %v1285, 80
    %v1632 = vpop.permute.xlu0 %1631
    %1633 = vrot.lane.b32.xlu0 %v1286, 80
    %v1634 = vpop.permute.xlu0 %1633
    %1635 = vrot.lane.b32.xlu0 %v1287, 80
    %v1636 = vpop.permute.xlu0 %1635
    %1637 = vrot.lane.b32.xlu0 %v1288, 80
    %v1638 = vpop.permute.xlu0 %1637
    %1639 = vrot.lane.b32.xlu0 %v1289, 80
    %v1640 = vpop.permute.xlu0 %1639
    %1641 = vrot.lane.b32.xlu0 %v1290, 80
    %v1642 = vpop.permute.xlu0 %1641
    %1643 = vrot.lane.b32.xlu0 %v1291, 80
    %v1644 = vpop.permute.xlu0 %1643
    %1677 = vrot.lane.b32.xlu0 %v1293, 96
    %v1678 = vpop.permute.xlu0 %1677
    %1679 = vrot.lane.b32.xlu0 %v1294, 96
    %v1680 = vpop.permute.xlu0 %1679
    %1681 = vrot.lane.b32.xlu0 %v1295, 96
    %v1682 = vpop.permute.xlu0 %1681
    %1683 = vrot.lane.b32.xlu0 %v1296, 96
    %v1684 = vpop.permute.xlu0 %1683
    %1685 = vrot.lane.b32.xlu0 %v1297, 96
    %v1686 = vpop.permute.xlu0 %1685
    %1687 = vrot.lane.b32.xlu0 %v1298, 96
    %v1688 = vpop.permute.xlu0 %1687
    %1689 = vrot.lane.b32.xlu0 %v1299, 96
    %v1690 = vpop.permute.xlu0 %1689
    %1691 = vrot.lane.b32.xlu0 %v1300, 96
    %v1692 = vpop.permute.xlu0 %1691
    %1693 = vrot.lane.b32.xlu0 %v1301, 96
    %v1694 = vpop.permute.xlu0 %1693
    %1695 = vrot.lane.b32.xlu0 %v1302, 96
    %v1696 = vpop.permute.xlu0 %1695
    %1697 = vrot.lane.b32.xlu0 %v1303, 96
    %v1698 = vpop.permute.xlu0 %1697
    %1699 = vrot.lane.b32.xlu0 %v1304, 96
    %v1700 = vpop.permute.xlu0 %1699
    %1701 = vrot.lane.b32.xlu0 %v1305, 96
    %v1702 = vpop.permute.xlu0 %1701
    %1703 = vrot.lane.b32.xlu0 %v1306, 96
    %v1704 = vpop.permute.xlu0 %1703
    %1705 = vrot.lane.b32.xlu0 %v1307, 96
    %v1706 = vpop.permute.xlu0 %1705
    %1707 = vrot.lane.b32.xlu0 %v1308, 96
    %v1708 = vpop.permute.xlu0 %1707
    %1741 = vrot.lane.b32.xlu0 %v1309, 112
    %v1742 = vpop.permute.xlu0 %1741
    %1743 = vrot.lane.b32.xlu0 %v1310, 112
    %v1744 = vpop.permute.xlu0 %1743
    %1745 = vrot.lane.b32.xlu0 %v1311, 112
    %v1746 = vpop.permute.xlu0 %1745
    %1747 = vrot.lane.b32.xlu0 %v1312, 112
    %v1748 = vpop.permute.xlu0 %1747
    %1749 = vrot.lane.b32.xlu0 %v1313, 112
    %v1750 = vpop.permute.xlu0 %1749
    %1751 = vrot.lane.b32.xlu0 %v1314, 112
    %v1752 = vpop.permute.xlu0 %1751
    %1753 = vrot.lane.b32.xlu0 %v1315, 112
    %v1754 = vpop.permute.xlu0 %1753
    %1755 = vrot.lane.b32.xlu0 %v1316, 112
    %v1756 = vpop.permute.xlu0 %1755
    %1757 = vrot.lane.b32.xlu0 %v1317, 112
    %v1758 = vpop.permute.xlu0 %1757
    %1759 = vrot.lane.b32.xlu0 %v1318, 112
    %v1760 = vpop.permute.xlu0 %1759
    %1761 = vrot.lane.b32.xlu0 %v1319, 112
    %v1762 = vpop.permute.xlu0 %1761
    %1763 = vrot.lane.b32.xlu0 %v1320, 112
    %v1764 = vpop.permute.xlu0 %1763
    %1765 = vrot.lane.b32.xlu0 %v1321, 112
    %v1766 = vpop.permute.xlu0 %1765
    %1767 = vrot.lane.b32.xlu0 %v1322, 112
    %v1768 = vpop.permute.xlu0 %1767
    %1769 = vrot.lane.b32.xlu0 %v1323, 112
    %v1770 = vpop.permute.xlu0 %1769
    %1771 = vrot.lane.b32.xlu0 %v1324, 112
    %v1772 = vpop.permute.xlu0 %1771
    %v1789 = vsel %vm87, %v1196, %v1358
    %v1790 = vsel %vm87, %v1197, %v1360
    %v1791 = vsel %vm87, %v1198, %v1362
    %v1792 = vsel %vm87, %v1199, %v1364
    %v1793 = vsel %vm87, %v1200, %v1366
    %v1794 = vsel %vm87, %v1201, %v1368
    %v1795 = vsel %vm87, %v1202, %v1370
    %v1796 = vsel %vm87, %v1203, %v1372
    %v1797 = vsel %vm87, %v1204, %v1374
    %v1798 = vsel %vm87, %v1205, %v1376
    %v1799 = vsel %vm87, %v1206, %v1378
    %v1800 = vsel %vm87, %v1207, %v1380
    %v1801 = vsel %vm87, %v1208, %v1382
    %v1802 = vsel %vm87, %v1209, %v1384
    %v1803 = vsel %vm87, %v1210, %v1386
    %v1804 = vsel %vm87, %v1211, %v1388
    %v1805 = vsel %vm868, %v1789, %v1422
    %v1806 = vsel %vm868, %v1790, %v1424
    %v1807 = vsel %vm868, %v1791, %v1426
    %v1808 = vsel %vm868, %v1792, %v1428
    %v1809 = vsel %vm868, %v1793, %v1430
    %v1810 = vsel %vm868, %v1794, %v1432
    %v1811 = vsel %vm868, %v1795, %v1434
    %v1812 = vsel %vm868, %v1796, %v1436
    %v1813 = vsel %vm868, %v1797, %v1438
    %v1814 = vsel %vm868, %v1798, %v1440
    %v1815 = vsel %vm868, %v1799, %v1442
    %v1816 = vsel %vm868, %v1800, %v1444
    %v1817 = vsel %vm868, %v1801, %v1446
    %v1818 = vsel %vm868, %v1802, %v1448
    %v1819 = vsel %vm868, %v1803, %v1450
    %v1820 = vsel %vm868, %v1804, %v1452
    %v1821 = vsel %vm902, %v1805, %v1486
    %v1822 = vsel %vm902, %v1806, %v1488
    %v1823 = vsel %vm902, %v1807, %v1490
    %v1824 = vsel %vm902, %v1808, %v1492
    %v1825 = vsel %vm902, %v1809, %v1494
    %v1826 = vsel %vm902, %v1810, %v1496
    %v1827 = vsel %vm902, %v1811, %v1498
    %v1828 = vsel %vm902, %v1812, %v1500
    %v1829 = vsel %vm902, %v1813, %v1502
    %v1830 = vsel %vm902, %v1814, %v1504
    %v1831 = vsel %vm902, %v1815, %v1506
    %v1832 = vsel %vm902, %v1816, %v1508
    %v1833 = vsel %vm902, %v1817, %v1510
    %v1834 = vsel %vm902, %v1818, %v1512
    %v1835 = vsel %vm902, %v1819, %v1514
    %v1836 = vsel %vm902, %v1820, %v1516
    %v1837 = vsel %vm936, %v1821, %v1550
    %v1838 = vsel %vm936, %v1822, %v1552
    %v1839 = vsel %vm936, %v1823, %v1554
    %v1840 = vsel %vm936, %v1824, %v1556
    %v1841 = vsel %vm936, %v1825, %v1558
    %v1842 = vsel %vm936, %v1826, %v1560
    %v1843 = vsel %vm936, %v1827, %v1562
    %v1844 = vsel %vm936, %v1828, %v1564
    %v1845 = vsel %vm936, %v1829, %v1566
    %v1846 = vsel %vm936, %v1830, %v1568
    %v1847 = vsel %vm936, %v1831, %v1570
    %v1848 = vsel %vm936, %v1832, %v1572
    %v1849 = vsel %vm936, %v1833, %v1574
    %v1850 = vsel %vm936, %v1834, %v1576
    %v1851 = vsel %vm936, %v1835, %v1578
    %v1852 = vsel %vm936, %v1836, %v1580
    %vm1853 = vcmask 654336
    %v1854 = vsel %vm1853, %v1837, %v1614
    %v1855 = vsel %vm1853, %v1838, %v1616
    %v1856 = vsel %vm1853, %v1839, %v1618
    %v1857 = vsel %vm1853, %v1840, %v1620
    %v1858 = vsel %vm1853, %v1841, %v1622
    %v1859 = vsel %vm1853, %v1842, %v1624
    %v1860 = vsel %vm1853, %v1843, %v1626
    %v1861 = vsel %vm1853, %v1844, %v1628
    %v1862 = vsel %vm1853, %v1845, %v1630
    %v1863 = vsel %vm1853, %v1846, %v1632
    %v1864 = vsel %vm1853, %v1847, %v1634
    %v1865 = vsel %vm1853, %v1848, %v1636
    %v1866 = vsel %vm1853, %v1849, %v1638
    %v1867 = vsel %vm1853, %v1850, %v1640
    %v1868 = vsel %vm1853, %v1851, %v1642
    %v1869 = vsel %vm1853, %v1852, %v1644
    %vm1870 = vcmask 785408
    %v1871 = vsel %vm1870, %v1854, %v1678
    %v1872 = vsel %vm1870, %v1855, %v1680
    %v1873 = vsel %vm1870, %v1856, %v1682
    %v1874 = vsel %vm1870, %v1857, %v1684
    %v1875 = vsel %vm1870, %v1858, %v1686
    %v1876 = vsel %vm1870, %v1859, %v1688
    %v1877 = vsel %vm1870, %v1860, %v1690
    %v1878 = vsel %vm1870, %v1861, %v1692
    %v1879 = vsel %vm1870, %v1862, %v1694
    %v1880 = vsel %vm1870, %v1863, %v1696
    %v1881 = vsel %vm1870, %v1864, %v1698
    %v1882 = vsel %vm1870, %v1865, %v1700
    %v1883 = vsel %vm1870, %v1866, %v1702
    %v1884 = vsel %vm1870, %v1867, %v1704
    %v1885 = vsel %vm1870, %v1868, %v1706
    %v1886 = vsel %vm1870, %v1869, %v1708
    %vm1887 = vcmask 916480
    %v1888 = vsel %vm1887, %v1871, %v1742
    %v1889 = vsel %vm1887, %v1872, %v1744
    %v1890 = vsel %vm1887, %v1873, %v1746
    %v1891 = vsel %vm1887, %v1874, %v1748
    %v1892 = vsel %vm1887, %v1875, %v1750
    %v1893 = vsel %vm1887, %v1876, %v1752
    %v1894 = vsel %vm1887, %v1877, %v1754
    %v1895 = vsel %vm1887, %v1878, %v1756
    %v1896 = vsel %vm1887, %v1879, %v1758
    %v1897 = vsel %vm1887, %v1880, %v1760
    %v1898 = vsel %vm1887, %v1881, %v1762
    %v1899 = vsel %vm1887, %v1882, %v1764
    %v1900 = vsel %vm1887, %v1883, %v1766
    %v1901 = vsel %vm1887, %v1884, %v1768
    %v1902 = vsel %vm1887, %v1885, %v1770
    %v1903 = vsel %vm1887, %v1886, %v1772
    %v1904 = vld [vmem:[%s3] sm:$0xff]
    %v1905 = vld [vmem:[%s3 + $0x8] sm:$0xff]
    %v1906 = vld [vmem:[%s3 + $0x10] sm:$0xff]
    %v1907 = vld [vmem:[%s3 + $0x18] sm:$0xff]
    %v1908 = vld [vmem:[%s3 + $0x20] sm:$0xff]
    %v1909 = vld [vmem:[%s3 + $0x28] sm:$0xff]
    %v1910 = vld [vmem:[%s3 + $0x30] sm:$0xff]
    %v1911 = vld [vmem:[%s3 + $0x38] sm:$0xff]
    %v1912 = vld [vmem:[%s3 + $0x40] sm:$0xff]
    %v1913 = vld [vmem:[%s3 + $0x48] sm:$0xff]
    %v1914 = vld [vmem:[%s3 + $0x50] sm:$0xff]
    %v1915 = vld [vmem:[%s3 + $0x58] sm:$0xff]
    %v1916 = vld [vmem:[%s3 + $0x60] sm:$0xff]
    %v1917 = vld [vmem:[%s3 + $0x68] sm:$0xff]
    %v1918 = vld [vmem:[%s3 + $0x70] sm:$0xff]
    %v1919 = vld [vmem:[%s3 + $0x78] sm:$0xff]
    %v1920 = vld [vmem:[%s3 + $0x80] sm:$0xff]
    %v1921 = vld [vmem:[%s3 + $0x88] sm:$0xff]
    %v1922 = vld [vmem:[%s4] sm:$0x1]
    %v1924 = vlaneseq
    %v1925 = vshrl.u32 %v1924, 7
    %v1926 = vsub.s32 0, %v1925
    %v1927 = vrot.slane %v1922, %v1926
    %v1930 = vsel %vm87, %v1325, 0
    %v1933 = vsel %vm87, %v1326, 0
    %v1936 = vsel %vm87, %v1327, 0
    %v1939 = vsel %vm87, %v1328, 0
    %v1942 = vsel %vm87, %v1329, 0
    %v1945 = vsel %vm87, %v1330, 0
    %v1948 = vsel %vm87, %v1331, 0
    %v1951 = vsel %vm87, %v1332, 0
    %v1954 = vsel %vm87, %v1333, 0
    %v1957 = vsel %vm87, %v1334, 0
    %v1960 = vsel %vm87, %v1335, 0
    %v1963 = vsel %vm87, %v1336, 0
    %v1966 = vsel %vm87, %v1337, 0
    %v1969 = vsel %vm87, %v1338, 0
    %v1972 = vsel %vm87, %v1339, 0
    %v1975 = vsel %vm87, %v1340, 0
    %1977 = vmatprep.subr.mxu0 0.0
    %1978 = vmatpush1.msra.mxu0 %v1919
    %1979 = vmatprep.subr.mxu0 0.0
    %1980 = vmatpush1.msra.mxu0 %v1918
    %1981 = vmatprep.subr.mxu0 0.0
    %1982 = vmatpush1.msra.mxu0 %v1917
    %1983 = vmatprep.subr.mxu0 0.0
    %1984 = vmatpush1.msra.mxu0 %v1916
    %1985 = vmatprep.subr.mxu0 0.0
    %1986 = vmatpush1.msra.mxu0 %v1915
    %1987 = vmatprep.subr.mxu0 0.0
    %1988 = vmatpush1.msra.mxu0 %v1914
    %1989 = vmatprep.subr.mxu0 0.0
    %1990 = vmatpush1.msra.mxu0 %v1913
    %1991 = vmatprep.subr.mxu0 0.0
    %1992 = vmatpush1.msra.mxu0 %v1912
    %1993 = vmatprep.subr.mxu0 0.0
    %1994 = vmatpush1.msra.mxu0 %v1911
    %1995 = vmatprep.subr.mxu0 0.0
    %1996 = vmatpush1.msra.mxu0 %v1910
    %1997 = vmatprep.subr.mxu0 0.0
    %1998 = vmatpush1.msra.mxu0 %v1909
    %1999 = vmatprep.subr.mxu0 0.0
    %2000 = vmatpush1.msra.mxu0 %v1908
    %2001 = vmatprep.subr.mxu0 0.0
    %2002 = vmatpush1.msra.mxu0 %v1907
    %2003 = vmatprep.subr.mxu0 0.0
    %2004 = vmatpush1.msra.mxu0 %v1906
    %2005 = vmatprep.subr.mxu0 0.0
    %2006 = vmatpush1.msra.mxu0 %v1905
    %2007 = vmatprep.subr.mxu0 0.0
    %2008 = vmatpush1.msra.mxu0 %v1904
    %2009 = vmatprep.subr.mxu0 0.0
    %2010 = vmatpush2.msra.mxu0 0.0
    %2011 = vmatprep.subr.mxu0 0.0
    %2012 = vmatpush2.msra.mxu0 0.0
    %2013 = vmatprep.subr.mxu0 0.0
    %2014 = vmatpush2.msra.mxu0 0.0
    %2015 = vmatprep.subr.mxu0 0.0
    %2016 = vmatpush2.msra.mxu0 0.0
    %2017 = vmatprep.subr.mxu0 0.0
    %2018 = vmatpush2.msra.mxu0 0.0
    %2019 = vmatprep.subr.mxu0 0.0
    %2020 = vmatpush2.msra.mxu0 0.0
    %2021 = vmatprep.subr.mxu0 0.0
    %2022 = vmatpush2.msra.mxu0 0.0
    %2023 = vmatprep.subr.mxu0 0.0
    %2024 = vmatpush2.msra.mxu0 0.0
    %2025 = vmatprep.subr.mxu0 0.0
    %2026 = vmatpush2.msra.mxu0 0.0
    %2027 = vmatprep.subr.mxu0 0.0
    %2028 = vmatpush2.msra.mxu0 0.0
    %2029 = vmatprep.subr.mxu0 0.0
    %2030 = vmatpush2.msra.mxu0 0.0
    %2031 = vmatprep.subr.mxu0 0.0
    %2032 = vmatpush2.msra.mxu0 0.0
    %2033 = vmatprep.subr.mxu0 0.0
    %2034 = vmatpush2.msra.mxu0 0.0
    %2035 = vmatprep.subr.mxu0 0.0
    %2036 = vmatpush2.msra.mxu0 0.0
    %2037 = vmatprep.subr.mxu0 0.0
    %2038 = vmatpush2.msra.mxu0 %v1921
    %2039 = vmatprep.subr.mxu0 0.0
    %2040 = vmatpush2.msra.mxu0 %v1920
    %2041 = vmatprep.mubr.f32.mxu0 %v1930
    %2042 = vmatmul.mubr.f32.gmra.mxu0 %v1888
    %v2043 = vpop.f32.mrf.mxu0
    %v2044 = vadd.f32 %v1927, %v2043
    %v2045 = vpop.f32.mrf.mxu0
    %2046 = vmatprep.mubr.f32.mxu0 %v1933
    %2047 = vmatmul.mubr.f32.gmra.mxu0 %v1889
    %v2048 = vpop.f32.mrf.mxu0
    %v2049 = vadd.f32 %v1927, %v2048
    %v2050 = vpop.f32.mrf.mxu0
    %2051 = vmatprep.mubr.f32.mxu0 %v1936
    %2052 = vmatmul.mubr.f32.gmra.mxu0 %v1890
    %v2053 = vpop.f32.mrf.mxu0
    %v2054 = vadd.f32 %v1927, %v2053
    %v2055 = vpop.f32.mrf.mxu0
    %2056 = vmatprep.mubr.f32.mxu0 %v1939
    %2057 = vmatmul.mubr.f32.gmra.mxu0 %v1891
    %v2058 = vpop.f32.mrf.mxu0
    %v2059 = vadd.f32 %v1927, %v2058
    %v2060 = vpop.f32.mrf.mxu0
    %2061 = vmatprep.mubr.f32.mxu0 %v1942
    %2062 = vmatmul.mubr.f32.gmra.mxu0 %v1892
    %v2063 = vpop.f32.mrf.mxu0
    %v2064 = vadd.f32 %v1927, %v2063
    %v2065 = vpop.f32.mrf.mxu0
    %2066 = vmatprep.mubr.f32.mxu0 %v1945
    %2067 = vmatmul.mubr.f32.gmra.mxu0 %v1893
    %v2068 = vpop.f32.mrf.mxu0
    %v2069 = vadd.f32 %v1927, %v2068
    %v2070 = vpop.f32.mrf.mxu0
    %2071 = vmatprep.mubr.f32.mxu0 %v1948
    %2072 = vmatmul.mubr.f32.gmra.mxu0 %v1894
    %v2073 = vpop.f32.mrf.mxu0
    %v2074 = vadd.f32 %v1927, %v2073
    %v2075 = vpop.f32.mrf.mxu0
    %2076 = vmatprep.mubr.f32.mxu0 %v1951
    %2077 = vmatmul.mubr.f32.gmra.mxu0 %v1895
    %v2078 = vpop.f32.mrf.mxu0
    %v2079 = vadd.f32 %v1927, %v2078
    %v2080 = vpop.f32.mrf.mxu0
    %2081 = vmatprep.mubr.f32.mxu0 %v1954
    %2082 = vmatmul.mubr.f32.gmra.mxu0 %v1896
    %v2083 = vpop.f32.mrf.mxu0
    %v2084 = vadd.f32 %v1927, %v2083
    %v2085 = vpop.f32.mrf.mxu0
    %2086 = vmatprep.mubr.f32.mxu0 %v1957
    %2087 = vmatmul.mubr.f32.gmra.mxu0 %v1897
    %v2088 = vpop.f32.mrf.mxu0
    %v2089 = vadd.f32 %v1927, %v2088
    %v2090 = vpop.f32.mrf.mxu0
    %2091 = vmatprep.mubr.f32.mxu0 %v1960
    %2092 = vmatmul.mubr.f32.gmra.mxu0 %v1898
    %v2093 = vpop.f32.mrf.mxu0
    %v2094 = vadd.f32 %v1927, %v2093
    %v2095 = vpop.f32.mrf.mxu0
    %2096 = vmatprep.mubr.f32.mxu0 %v1963
    %2097 = vmatmul.mubr.f32.gmra.mxu0 %v1899
    %v2098 = vpop.f32.mrf.mxu0
    %v2099 = vadd.f32 %v1927, %v2098
    %v2100 = vpop.f32.mrf.mxu0
    %2101 = vmatprep.mubr.f32.mxu0 %v1966
    %2102 = vmatmul.mubr.f32.gmra.mxu0 %v1900
    %v2103 = vpop.f32.mrf.mxu0
    %v2104 = vadd.f32 %v1927, %v2103
    %v2105 = vpop.f32.mrf.mxu0
    %2106 = vmatprep.mubr.f32.mxu0 %v1969
    %2107 = vmatmul.mubr.f32.gmra.mxu0 %v1901
    %v2108 = vpop.f32.mrf.mxu0
    %v2109 = vadd.f32 %v1927, %v2108
    %v2110 = vpop.f32.mrf.mxu0
    %2111 = vmatprep.mubr.f32.mxu0 %v1972
    %2112 = vmatmul.mubr.f32.gmra.mxu0 %v1902
    %v2113 = vpop.f32.mrf.mxu0
    %v2114 = vadd.f32 %v1927, %v2113
    %v2115 = vpop.f32.mrf.mxu0
    %2116 = vmatprep.mubr.f32.mxu0 %v1975
    %2117 = vmatmul.mubr.f32.gmra.mxu0 %v1903
    %v2118 = vpop.f32.mrf.mxu0
    %v2119 = vadd.f32 %v1927, %v2118
    %v2120 = vpop.f32.mrf.mxu0
    %2121 = vdwg.mxu0
    %v2122 = vmax.f32 %v2044, 0.0
    %v2123 = vmax.f32 %v2049, 0.0
    %v2124 = vmax.f32 %v2054, 0.0
    %v2125 = vmax.f32 %v2059, 0.0
    %v2126 = vmax.f32 %v2064, 0.0
    %v2127 = vmax.f32 %v2069, 0.0
    %v2128 = vmax.f32 %v2074, 0.0
    %v2129 = vmax.f32 %v2079, 0.0
    %v2130 = vmax.f32 %v2084, 0.0
    %v2131 = vmax.f32 %v2089, 0.0
    %v2132 = vmax.f32 %v2094, 0.0
    %v2133 = vmax.f32 %v2099, 0.0
    %v2134 = vmax.f32 %v2104, 0.0
    %v2135 = vmax.f32 %v2109, 0.0
    %v2136 = vmax.f32 %v2114, 0.0
    %v2137 = vmax.f32 %v2119, 0.0
    %2138 = vst.msk [vmem:[%s1179 + $0x1] sm:$0xff] %vm87, %v2122
    %2139 = vst.msk [vmem:[%s1179 + $0x11] sm:$0xff] %vm87, %v2123
    %2140 = vst.msk [vmem:[%s1179 + $0x21] sm:$0xff] %vm87, %v2124
    %2141 = vst.msk [vmem:[%s1179 + $0x31] sm:$0xff] %vm87, %v2125
    %2142 = vst.msk [vmem:[%s1179 + $0x41] sm:$0xff] %vm87, %v2126
    %2143 = vst.msk [vmem:[%s1179 + $0x51] sm:$0xff] %vm87, %v2127
    %2144 = vst.msk [vmem:[%s1179 + $0x61] sm:$0xff] %vm87, %v2128
    %2145 = vst.msk [vmem:[%s1179 + $0x71] sm:$0xff] %vm87, %v2129
    %2146 = vst.msk [vmem:[%s1179 + $0xa1] sm:$0xff] %vm87, %v2130
    %2147 = vst.msk [vmem:[%s1179 + $0xb1] sm:$0xff] %vm87, %v2131
    %2148 = vst.msk [vmem:[%s1179 + $0xc1] sm:$0xff] %vm87, %v2132
    %2149 = vst.msk [vmem:[%s1179 + $0xd1] sm:$0xff] %vm87, %v2133
    %2150 = vst.msk [vmem:[%s1179 + $0xe1] sm:$0xff] %vm87, %v2134
    %2151 = vst.msk [vmem:[%s1179 + $0xf1] sm:$0xff] %vm87, %v2135
    %2152 = vst.msk [vmem:[%s1179 + $0x101] sm:$0xff] %vm87, %v2136
    %2153 = vst.msk [vmem:[%s1179 + $0x111] sm:$0xff] %vm87, %v2137
    %v2154 = vld [vmem:[#allocation3] sm:$0xff]
    %v2155 = vld [vmem:[#allocation3 + $0x10] sm:$0xff]
    %v2156 = vld [vmem:[#allocation3 + $0x20] sm:$0xff]
    %v2157 = vld [vmem:[#allocation3 + $0x30] sm:$0xff]
    %v2158 = vld [vmem:[#allocation3 + $0x40] sm:$0xff]
    %v2159 = vld [vmem:[#allocation3 + $0x50] sm:$0xff]
    %v2160 = vld [vmem:[#allocation3 + $0x60] sm:$0xff]
    %v2161 = vld [vmem:[#allocation3 + $0x70] sm:$0xff]
    %v2162 = vld [vmem:[#allocation3 + $0xa0] sm:$0xff]
    %v2163 = vld [vmem:[#allocation3 + $0xb0] sm:$0xff]
    %v2164 = vld [vmem:[#allocation3 + $0xc0] sm:$0xff]
    %v2165 = vld [vmem:[#allocation3 + $0xd0] sm:$0xff]
    %v2166 = vld [vmem:[#allocation3 + $0xe0] sm:$0xff]
    %v2167 = vld [vmem:[#allocation3 + $0xf0] sm:$0xff]
    %v2168 = vld [vmem:[#allocation3 + $0x100] sm:$0xff]
    %v2169 = vld [vmem:[#allocation3 + $0x110] sm:$0xff]
    %v2170 = vld [vmem:[#allocation3 + $0x1] sm:$0xff]
    %v2171 = vld [vmem:[#allocation3 + $0x11] sm:$0xff]
    %v2172 = vld [vmem:[#allocation3 + $0x21] sm:$0xff]
    %v2173 = vld [vmem:[#allocation3 + $0x31] sm:$0xff]
    %v2174 = vld [vmem:[#allocation3 + $0x41] sm:$0xff]
    %v2175 = vld [vmem:[#allocation3 + $0x51] sm:$0xff]
    %v2176 = vld [vmem:[#allocation3 + $0x61] sm:$0xff]
    %v2177 = vld [vmem:[#allocation3 + $0x71] sm:$0xff]
    %v2178 = vld [vmem:[#allocation3 + $0xa1] sm:$0xff]
    %v2179 = vld [vmem:[#allocation3 + $0xb1] sm:$0xff]
    %v2180 = vld [vmem:[#allocation3 + $0xc1] sm:$0xff]
    %v2181 = vld [vmem:[#allocation3 + $0xd1] sm:$0xff]
    %v2182 = vld [vmem:[#allocation3 + $0xe1] sm:$0xff]
    %v2183 = vld [vmem:[#allocation3 + $0xf1] sm:$0xff]
    %v2184 = vld [vmem:[#allocation3 + $0x101] sm:$0xff]
    %v2185 = vld [vmem:[#allocation3 + $0x111] sm:$0xff]
    %v2186 = vld [vmem:[#allocation3 + $0x2] sm:$0xff]
    %v2187 = vld [vmem:[#allocation3 + $0x12] sm:$0xff]
    %v2188 = vld [vmem:[#allocation3 + $0x22] sm:$0xff]
    %v2189 = vld [vmem:[#allocation3 + $0x32] sm:$0xff]
    %v2190 = vld [vmem:[#allocation3 + $0x42] sm:$0xff]
    %v2191 = vld [vmem:[#allocation3 + $0x52] sm:$0xff]
    %v2192 = vld [vmem:[#allocation3 + $0x62] sm:$0xff]
    %v2193 = vld [vmem:[#allocation3 + $0x72] sm:$0xff]
    %v2194 = vld [vmem:[#allocation3 + $0xa2] sm:$0xff]
    %v2195 = vld [vmem:[#allocation3 + $0xb2] sm:$0xff]
    %v2196 = vld [vmem:[#allocation3 + $0xc2] sm:$0xff]
    %v2197 = vld [vmem:[#allocation3 + $0xd2] sm:$0xff]
    %v2198 = vld [vmem:[#allocation3 + $0xe2] sm:$0xff]
    %v2199 = vld [vmem:[#allocation3 + $0xf2] sm:$0xff]
    %v2200 = vld [vmem:[#allocation3 + $0x102] sm:$0xff]
    %v2201 = vld [vmem:[#allocation3 + $0x112] sm:$0xff]
    %v2202 = vld [vmem:[%s1179] sm:$0xff]
    %v2203 = vld [vmem:[%s1179 + $0x10] sm:$0xff]
    %v2204 = vld [vmem:[%s1179 + $0x20] sm:$0xff]
    %v2205 = vld [vmem:[%s1179 + $0x30] sm:$0xff]
    %v2206 = vld [vmem:[%s1179 + $0x40] sm:$0xff]
    %v2207 = vld [vmem:[%s1179 + $0x50] sm:$0xff]
    %v2208 = vld [vmem:[%s1179 + $0x60] sm:$0xff]
    %v2209 = vld [vmem:[%s1179 + $0x70] sm:$0xff]
    %v2210 = vld [vmem:[%s1179 + $0xa0] sm:$0xff]
    %v2211 = vld [vmem:[%s1179 + $0xb0] sm:$0xff]
    %v2212 = vld [vmem:[%s1179 + $0xc0] sm:$0xff]
    %v2213 = vld [vmem:[%s1179 + $0xd0] sm:$0xff]
    %v2214 = vld [vmem:[%s1179 + $0xe0] sm:$0xff]
    %v2215 = vld [vmem:[%s1179 + $0xf0] sm:$0xff]
    %v2216 = vld [vmem:[%s1179 + $0x100] sm:$0xff]
    %v2217 = vld [vmem:[%s1179 + $0x110] sm:$0xff]
    %v2218 = vld [vmem:[%s1179 + $0x1] sm:$0xff]
    %v2219 = vld [vmem:[%s1179 + $0x11] sm:$0xff]
    %v2220 = vld [vmem:[%s1179 + $0x21] sm:$0xff]
    %v2221 = vld [vmem:[%s1179 + $0x31] sm:$0xff]
    %v2222 = vld [vmem:[%s1179 + $0x41] sm:$0xff]
    %v2223 = vld [vmem:[%s1179 + $0x51] sm:$0xff]
    %v2224 = vld [vmem:[%s1179 + $0x61] sm:$0xff]
    %v2225 = vld [vmem:[%s1179 + $0x71] sm:$0xff]
    %v2226 = vld [vmem:[%s1179 + $0xa1] sm:$0xff]
    %v2227 = vld [vmem:[%s1179 + $0xb1] sm:$0xff]
    %v2228 = vld [vmem:[%s1179 + $0xc1] sm:$0xff]
    %v2229 = vld [vmem:[%s1179 + $0xd1] sm:$0xff]
    %v2230 = vld [vmem:[%s1179 + $0xe1] sm:$0xff]
    %v2231 = vld [vmem:[%s1179 + $0xf1] sm:$0xff]
    %v2232 = vld [vmem:[%s1179 + $0x101] sm:$0xff]
    %v2233 = vld [vmem:[%s1179 + $0x111] sm:$0xff]
    %v2234 = vld [vmem:[%s1179 + $0x2] sm:$0xff]
    %v2235 = vld [vmem:[%s1179 + $0x12] sm:$0xff]
    %v2236 = vld [vmem:[%s1179 + $0x22] sm:$0xff]
    %v2237 = vld [vmem:[%s1179 + $0x32] sm:$0xff]
    %v2238 = vld [vmem:[%s1179 + $0x42] sm:$0xff]
    %v2239 = vld [vmem:[%s1179 + $0x52] sm:$0xff]
    %v2240 = vld [vmem:[%s1179 + $0x62] sm:$0xff]
    %v2241 = vld [vmem:[%s1179 + $0x72] sm:$0xff]
    %v2242 = vld [vmem:[%s1179 + $0xa2] sm:$0xff]
    %v2243 = vld [vmem:[%s1179 + $0xb2] sm:$0xff]
    %v2244 = vld [vmem:[%s1179 + $0xc2] sm:$0xff]
    %v2245 = vld [vmem:[%s1179 + $0xd2] sm:$0xff]
    %v2246 = vld [vmem:[%s1179 + $0xe2] sm:$0xff]
    %v2247 = vld [vmem:[%s1179 + $0xf2] sm:$0xff]
    %v2248 = vld [vmem:[%s1179 + $0x102] sm:$0xff]
    %v2249 = vld [vmem:[%s1179 + $0x112] sm:$0xff]
    %v2250 = vld [vmem:[%s1292] sm:$0xff]
    %v2251 = vld [vmem:[%s1292 + $0x10] sm:$0xff]
    %v2252 = vld [vmem:[%s1292 + $0x20] sm:$0xff]
    %v2253 = vld [vmem:[%s1292 + $0x30] sm:$0xff]
    %v2254 = vld [vmem:[%s1292 + $0x40] sm:$0xff]
    %v2255 = vld [vmem:[%s1292 + $0x50] sm:$0xff]
    %v2256 = vld [vmem:[%s1292 + $0x60] sm:$0xff]
    %v2257 = vld [vmem:[%s1292 + $0x70] sm:$0xff]
    %v2258 = vld [vmem:[%s1292 + $0xa0] sm:$0xff]
    %v2259 = vld [vmem:[%s1292 + $0xb0] sm:$0xff]
    %v2260 = vld [vmem:[%s1292 + $0xc0] sm:$0xff]
    %v2261 = vld [vmem:[%s1292 + $0xd0] sm:$0xff]
    %v2262 = vld [vmem:[%s1292 + $0xe0] sm:$0xff]
    %v2263 = vld [vmem:[%s1292 + $0xf0] sm:$0xff]
    %v2264 = vld [vmem:[%s1292 + $0x100] sm:$0xff]
    %v2265 = vld [vmem:[%s1292 + $0x110] sm:$0xff]
    %v2266 = vld [vmem:[%s1292 + $0x1] sm:$0xff]
    %v2267 = vld [vmem:[%s1292 + $0x11] sm:$0xff]
    %v2268 = vld [vmem:[%s1292 + $0x21] sm:$0xff]
    %v2269 = vld [vmem:[%s1292 + $0x31] sm:$0xff]
    %v2270 = vld [vmem:[%s1292 + $0x41] sm:$0xff]
    %v2271 = vld [vmem:[%s1292 + $0x51] sm:$0xff]
    %v2272 = vld [vmem:[%s1292 + $0x61] sm:$0xff]
    %v2273 = vld [vmem:[%s1292 + $0x71] sm:$0xff]
    %v2274 = vld [vmem:[%s1292 + $0xa1] sm:$0xff]
    %v2275 = vld [vmem:[%s1292 + $0xb1] sm:$0xff]
    %v2276 = vld [vmem:[%s1292 + $0xc1] sm:$0xff]
    %v2277 = vld [vmem:[%s1292 + $0xd1] sm:$0xff]
    %v2278 = vld [vmem:[%s1292 + $0xe1] sm:$0xff]
    %v2279 = vld [vmem:[%s1292 + $0xf1] sm:$0xff]
    %v2280 = vld [vmem:[%s1292 + $0x101] sm:$0xff]
    %v2281 = vld [vmem:[%s1292 + $0x111] sm:$0xff]
    %v2282 = vld [vmem:[%s1292 + $0x2] sm:$0xff]
    %v2283 = vld [vmem:[%s1292 + $0x12] sm:$0xff]
    %v2284 = vld [vmem:[%s1292 + $0x22] sm:$0xff]
    %v2285 = vld [vmem:[%s1292 + $0x32] sm:$0xff]
    %v2286 = vld [vmem:[%s1292 + $0x42] sm:$0xff]
    %v2287 = vld [vmem:[%s1292 + $0x52] sm:$0xff]
    %v2288 = vld [vmem:[%s1292 + $0x62] sm:$0xff]
    %v2289 = vld [vmem:[%s1292 + $0x72] sm:$0xff]
    %v2290 = vld [vmem:[%s1292 + $0xa2] sm:$0xff]
    %v2291 = vld [vmem:[%s1292 + $0xb2] sm:$0xff]
    %v2292 = vld [vmem:[%s1292 + $0xc2] sm:$0xff]
    %v2293 = vld [vmem:[%s1292 + $0xd2] sm:$0xff]
    %v2294 = vld [vmem:[%s1292 + $0xe2] sm:$0xff]
    %v2295 = vld [vmem:[%s1292 + $0xf2] sm:$0xff]
    %v2296 = vld [vmem:[%s1292 + $0x102] sm:$0xff]
    %v2297 = vld [vmem:[%s1292 + $0x112] sm:$0xff]
    %2314 = vrot.lane.b32.xlu0 %v2170, 16
    %v2315 = vpop.permute.xlu0 %2314
    %2316 = vrot.lane.b32.xlu0 %v2171, 16
    %v2317 = vpop.permute.xlu0 %2316
    %2318 = vrot.lane.b32.xlu0 %v2172, 16
    %v2319 = vpop.permute.xlu0 %2318
    %2320 = vrot.lane.b32.xlu0 %v2173, 16
    %v2321 = vpop.permute.xlu0 %2320
    %2322 = vrot.lane.b32.xlu0 %v2174, 16
    %v2323 = vpop.permute.xlu0 %2322
    %2324 = vrot.lane.b32.xlu0 %v2175, 16
    %v2325 = vpop.permute.xlu0 %2324
    %2326 = vrot.lane.b32.xlu0 %v2176, 16
    %v2327 = vpop.permute.xlu0 %2326
    %2328 = vrot.lane.b32.xlu0 %v2177, 16
    %v2329 = vpop.permute.xlu0 %2328
    %2330 = vrot.lane.b32.xlu0 %v2178, 16
    %v2331 = vpop.permute.xlu0 %2330
    %2332 = vrot.lane.b32.xlu0 %v2179, 16
    %v2333 = vpop.permute.xlu0 %2332
    %2334 = vrot.lane.b32.xlu0 %v2180, 16
    %v2335 = vpop.permute.xlu0 %2334
    %2336 = vrot.lane.b32.xlu0 %v2181, 16
    %v2337 = vpop.permute.xlu0 %2336
    %2338 = vrot.lane.b32.xlu0 %v2182, 16
    %v2339 = vpop.permute.xlu0 %2338
    %2340 = vrot.lane.b32.xlu0 %v2183, 16
    %v2341 = vpop.permute.xlu0 %2340
    %2342 = vrot.lane.b32.xlu0 %v2184, 16
    %v2343 = vpop.permute.xlu0 %2342
    %2344 = vrot.lane.b32.xlu0 %v2185, 16
    %v2345 = vpop.permute.xlu0 %2344
    %2378 = vrot.lane.b32.xlu0 %v2186, 32
    %v2379 = vpop.permute.xlu0 %2378
    %2380 = vrot.lane.b32.xlu0 %v2187, 32
    %v2381 = vpop.permute.xlu0 %2380
    %2382 = vrot.lane.b32.xlu0 %v2188, 32
    %v2383 = vpop.permute.xlu0 %2382
    %2384 = vrot.lane.b32.xlu0 %v2189, 32
    %v2385 = vpop.permute.xlu0 %2384
    %2386 = vrot.lane.b32.xlu0 %v2190, 32
    %v2387 = vpop.permute.xlu0 %2386
    %2388 = vrot.lane.b32.xlu0 %v2191, 32
    %v2389 = vpop.permute.xlu0 %2388
    %2390 = vrot.lane.b32.xlu0 %v2192, 32
    %v2391 = vpop.permute.xlu0 %2390
    %2392 = vrot.lane.b32.xlu0 %v2193, 32
    %v2393 = vpop.permute.xlu0 %2392
    %2394 = vrot.lane.b32.xlu0 %v2194, 32
    %v2395 = vpop.permute.xlu0 %2394
    %2396 = vrot.lane.b32.xlu0 %v2195, 32
    %v2397 = vpop.permute.xlu0 %2396
    %2398 = vrot.lane.b32.xlu0 %v2196, 32
    %v2399 = vpop.permute.xlu0 %2398
    %2400 = vrot.lane.b32.xlu0 %v2197, 32
    %v2401 = vpop.permute.xlu0 %2400
    %2402 = vrot.lane.b32.xlu0 %v2198, 32
    %v2403 = vpop.permute.xlu0 %2402
    %2404 = vrot.lane.b32.xlu0 %v2199, 32
    %v2405 = vpop.permute.xlu0 %2404
    %2406 = vrot.lane.b32.xlu0 %v2200, 32
    %v2407 = vpop.permute.xlu0 %2406
    %2408 = vrot.lane.b32.xlu0 %v2201, 32
    %v2409 = vpop.permute.xlu0 %2408
    %2442 = vrot.lane.b32.xlu0 %v2202, 48
    %v2443 = vpop.permute.xlu0 %2442
    %2444 = vrot.lane.b32.xlu0 %v2203, 48
    %v2445 = vpop.permute.xlu0 %2444
    %2446 = vrot.lane.b32.xlu0 %v2204, 48
    %v2447 = vpop.permute.xlu0 %2446
    %2448 = vrot.lane.b32.xlu0 %v2205, 48
    %v2449 = vpop.permute.xlu0 %2448
    %2450 = vrot.lane.b32.xlu0 %v2206, 48
    %v2451 = vpop.permute.xlu0 %2450
    %2452 = vrot.lane.b32.xlu0 %v2207, 48
    %v2453 = vpop.permute.xlu0 %2452
    %2454 = vrot.lane.b32.xlu0 %v2208, 48
    %v2455 = vpop.permute.xlu0 %2454
    %2456 = vrot.lane.b32.xlu0 %v2209, 48
    %v2457 = vpop.permute.xlu0 %2456
    %2458 = vrot.lane.b32.xlu0 %v2210, 48
    %v2459 = vpop.permute.xlu0 %2458
    %2460 = vrot.lane.b32.xlu0 %v2211, 48
    %v2461 = vpop.permute.xlu0 %2460
    %2462 = vrot.lane.b32.xlu0 %v2212, 48
    %v2463 = vpop.permute.xlu0 %2462
    %2464 = vrot.lane.b32.xlu0 %v2213, 48
    %v2465 = vpop.permute.xlu0 %2464
    %2466 = vrot.lane.b32.xlu0 %v2214, 48
    %v2467 = vpop.permute.xlu0 %2466
    %2468 = vrot.lane.b32.xlu0 %v2215, 48
    %v2469 = vpop.permute.xlu0 %2468
    %2470 = vrot.lane.b32.xlu0 %v2216, 48
    %v2471 = vpop.permute.xlu0 %2470
    %2472 = vrot.lane.b32.xlu0 %v2217, 48
    %v2473 = vpop.permute.xlu0 %2472
    %2506 = vrot.lane.b32.xlu0 %v2218, 64
    %v2507 = vpop.permute.xlu0 %2506
    %2508 = vrot.lane.b32.xlu0 %v2219, 64
    %v2509 = vpop.permute.xlu0 %2508
    %2510 = vrot.lane.b32.xlu0 %v2220, 64
    %v2511 = vpop.permute.xlu0 %2510
    %2512 = vrot.lane.b32.xlu0 %v2221, 64
    %v2513 = vpop.permute.xlu0 %2512
    %2514 = vrot.lane.b32.xlu0 %v2222, 64
    %v2515 = vpop.permute.xlu0 %2514
    %2516 = vrot.lane.b32.xlu0 %v2223, 64
    %v2517 = vpop.permute.xlu0 %2516
    %2518 = vrot.lane.b32.xlu0 %v2224, 64
    %v2519 = vpop.permute.xlu0 %2518
    %2520 = vrot.lane.b32.xlu0 %v2225, 64
    %v2521 = vpop.permute.xlu0 %2520
    %2522 = vrot.lane.b32.xlu0 %v2226, 64
    %v2523 = vpop.permute.xlu0 %2522
    %2524 = vrot.lane.b32.xlu0 %v2227, 64
    %v2525 = vpop.permute.xlu0 %2524
    %2526 = vrot.lane.b32.xlu0 %v2228, 64
    %v2527 = vpop.permute.xlu0 %2526
    %2528 = vrot.lane.b32.xlu0 %v2229, 64
    %v2529 = vpop.permute.xlu0 %2528
    %2530 = vrot.lane.b32.xlu0 %v2230, 64
    %v2531 = vpop.permute.xlu0 %2530
    %2532 = vrot.lane.b32.xlu0 %v2231, 64
    %v2533 = vpop.permute.xlu0 %2532
    %2534 = vrot.lane.b32.xlu0 %v2232, 64
    %v2535 = vpop.permute.xlu0 %2534
    %2536 = vrot.lane.b32.xlu0 %v2233, 64
    %v2537 = vpop.permute.xlu0 %2536
    %2570 = vrot.lane.b32.xlu0 %v2234, 80
    %v2571 = vpop.permute.xlu0 %2570
    %2572 = vrot.lane.b32.xlu0 %v2235, 80
    %v2573 = vpop.permute.xlu0 %2572
    %2574 = vrot.lane.b32.xlu0 %v2236, 80
    %v2575 = vpop.permute.xlu0 %2574
    %2576 = vrot.lane.b32.xlu0 %v2237, 80
    %v2577 = vpop.permute.xlu0 %2576
    %2578 = vrot.lane.b32.xlu0 %v2238, 80
    %v2579 = vpop.permute.xlu0 %2578
    %2580 = vrot.lane.b32.xlu0 %v2239, 80
    %v2581 = vpop.permute.xlu0 %2580
    %2582 = vrot.lane.b32.xlu0 %v2240, 80
    %v2583 = vpop.permute.xlu0 %2582
    %2584 = vrot.lane.b32.xlu0 %v2241, 80
    %v2585 = vpop.permute.xlu0 %2584
    %2586 = vrot.lane.b32.xlu0 %v2242, 80
    %v2587 = vpop.permute.xlu0 %2586
    %2588 = vrot.lane.b32.xlu0 %v2243, 80
    %v2589 = vpop.permute.xlu0 %2588
    %2590 = vrot.lane.b32.xlu0 %v2244, 80
    %v2591 = vpop.permute.xlu0 %2590
    %2592 = vrot.lane.b32.xlu0 %v2245, 80
    %v2593 = vpop.permute.xlu0 %2592
    %2594 = vrot.lane.b32.xlu0 %v2246, 80
    %v2595 = vpop.permute.xlu0 %2594
    %2596 = vrot.lane.b32.xlu0 %v2247, 80
    %v2597 = vpop.permute.xlu0 %2596
    %2598 = vrot.lane.b32.xlu0 %v2248, 80
    %v2599 = vpop.permute.xlu0 %2598
    %2600 = vrot.lane.b32.xlu0 %v2249, 80
    %v2601 = vpop.permute.xlu0 %2600
    %2634 = vrot.lane.b32.xlu0 %v2250, 96
    %v2635 = vpop.permute.xlu0 %2634
    %2636 = vrot.lane.b32.xlu0 %v2251, 96
    %v2637 = vpop.permute.xlu0 %2636
    %2638 = vrot.lane.b32.xlu0 %v2252, 96
    %v2639 = vpop.permute.xlu0 %2638
    %2640 = vrot.lane.b32.xlu0 %v2253, 96
    %v2641 = vpop.permute.xlu0 %2640
    %2642 = vrot.lane.b32.xlu0 %v2254, 96
    %v2643 = vpop.permute.xlu0 %2642
    %2644 = vrot.lane.b32.xlu0 %v2255, 96
    %v2645 = vpop.permute.xlu0 %2644
    %2646 = vrot.lane.b32.xlu0 %v2256, 96
    %v2647 = vpop.permute.xlu0 %2646
    %2648 = vrot.lane.b32.xlu0 %v2257, 96
    %v2649 = vpop.permute.xlu0 %2648
    %2650 = vrot.lane.b32.xlu0 %v2258, 96
    %v2651 = vpop.permute.xlu0 %2650
    %2652 = vrot.lane.b32.xlu0 %v2259, 96
    %v2653 = vpop.permute.xlu0 %2652
    %2654 = vrot.lane.b32.xlu0 %v2260, 96
    %v2655 = vpop.permute.xlu0 %2654
    %2656 = vrot.lane.b32.xlu0 %v2261, 96
    %v2657 = vpop.permute.xlu0 %2656
    %2658 = vrot.lane.b32.xlu0 %v2262, 96
    %v2659 = vpop.permute.xlu0 %2658
    %2660 = vrot.lane.b32.xlu0 %v2263, 96
    %v2661 = vpop.permute.xlu0 %2660
    %2662 = vrot.lane.b32.xlu0 %v2264, 96
    %v2663 = vpop.permute.xlu0 %2662
    %2664 = vrot.lane.b32.xlu0 %v2265, 96
    %v2665 = vpop.permute.xlu0 %2664
    %2698 = vrot.lane.b32.xlu0 %v2266, 112
    %v2699 = vpop.permute.xlu0 %2698
    %2700 = vrot.lane.b32.xlu0 %v2267, 112
    %v2701 = vpop.permute.xlu0 %2700
    %2702 = vrot.lane.b32.xlu0 %v2268, 112
    %v2703 = vpop.permute.xlu0 %2702
    %2704 = vrot.lane.b32.xlu0 %v2269, 112
    %v2705 = vpop.permute.xlu0 %2704
    %2706 = vrot.lane.b32.xlu0 %v2270, 112
    %v2707 = vpop.permute.xlu0 %2706
    %2708 = vrot.lane.b32.xlu0 %v2271, 112
    %v2709 = vpop.permute.xlu0 %2708
    %2710 = vrot.lane.b32.xlu0 %v2272, 112
    %v2711 = vpop.permute.xlu0 %2710
    %2712 = vrot.lane.b32.xlu0 %v2273, 112
    %v2713 = vpop.permute.xlu0 %2712
    %2714 = vrot.lane.b32.xlu0 %v2274, 112
    %v2715 = vpop.permute.xlu0 %2714
    %2716 = vrot.lane.b32.xlu0 %v2275, 112
    %v2717 = vpop.permute.xlu0 %2716
    %2718 = vrot.lane.b32.xlu0 %v2276, 112
    %v2719 = vpop.permute.xlu0 %2718
    %2720 = vrot.lane.b32.xlu0 %v2277, 112
    %v2721 = vpop.permute.xlu0 %2720
    %2722 = vrot.lane.b32.xlu0 %v2278, 112
    %v2723 = vpop.permute.xlu0 %2722
    %2724 = vrot.lane.b32.xlu0 %v2279, 112
    %v2725 = vpop.permute.xlu0 %2724
    %2726 = vrot.lane.b32.xlu0 %v2280, 112
    %v2727 = vpop.permute.xlu0 %2726
    %2728 = vrot.lane.b32.xlu0 %v2281, 112
    %v2729 = vpop.permute.xlu0 %2728
    %v2746 = vsel %vm87, %v2154, %v2315
    %v2747 = vsel %vm87, %v2155, %v2317
    %v2748 = vsel %vm87, %v2156, %v2319
    %v2749 = vsel %vm87, %v2157, %v2321
    %v2750 = vsel %vm87, %v2158, %v2323
    %v2751 = vsel %vm87, %v2159, %v2325
    %v2752 = vsel %vm87, %v2160, %v2327
    %v2753 = vsel %vm87, %v2161, %v2329
    %v2754 = vsel %vm87, %v2162, %v2331
    %v2755 = vsel %vm87, %v2163, %v2333
    %v2756 = vsel %vm87, %v2164, %v2335
    %v2757 = vsel %vm87, %v2165, %v2337
    %v2758 = vsel %vm87, %v2166, %v2339
    %v2759 = vsel %vm87, %v2167, %v2341
    %v2760 = vsel %vm87, %v2168, %v2343
    %v2761 = vsel %vm87, %v2169, %v2345
    %v2762 = vsel %vm868, %v2746, %v2379
    %v2763 = vsel %vm868, %v2747, %v2381
    %v2764 = vsel %vm868, %v2748, %v2383
    %v2765 = vsel %vm868, %v2749, %v2385
    %v2766 = vsel %vm868, %v2750, %v2387
    %v2767 = vsel %vm868, %v2751, %v2389
    %v2768 = vsel %vm868, %v2752, %v2391
    %v2769 = vsel %vm868, %v2753, %v2393
    %v2770 = vsel %vm868, %v2754, %v2395
    %v2771 = vsel %vm868, %v2755, %v2397
    %v2772 = vsel %vm868, %v2756, %v2399
    %v2773 = vsel %vm868, %v2757, %v2401
    %v2774 = vsel %vm868, %v2758, %v2403
    %v2775 = vsel %vm868, %v2759, %v2405
    %v2776 = vsel %vm868, %v2760, %v2407
    %v2777 = vsel %vm868, %v2761, %v2409
    %v2778 = vsel %vm902, %v2762, %v2443
    %v2779 = vsel %vm902, %v2763, %v2445
    %v2780 = vsel %vm902, %v2764, %v2447
    %v2781 = vsel %vm902, %v2765, %v2449
    %v2782 = vsel %vm902, %v2766, %v2451
    %v2783 = vsel %vm902, %v2767, %v2453
    %v2784 = vsel %vm902, %v2768, %v2455
    %v2785 = vsel %vm902, %v2769, %v2457
    %v2786 = vsel %vm902, %v2770, %v2459
    %v2787 = vsel %vm902, %v2771, %v2461
    %v2788 = vsel %vm902, %v2772, %v2463
    %v2789 = vsel %vm902, %v2773, %v2465
    %v2790 = vsel %vm902, %v2774, %v2467
    %v2791 = vsel %vm902, %v2775, %v2469
    %v2792 = vsel %vm902, %v2776, %v2471
    %v2793 = vsel %vm902, %v2777, %v2473
    %v2794 = vsel %vm936, %v2778, %v2507
    %v2795 = vsel %vm936, %v2779, %v2509
    %v2796 = vsel %vm936, %v2780, %v2511
    %v2797 = vsel %vm936, %v2781, %v2513
    %v2798 = vsel %vm936, %v2782, %v2515
    %v2799 = vsel %vm936, %v2783, %v2517
    %v2800 = vsel %vm936, %v2784, %v2519
    %v2801 = vsel %vm936, %v2785, %v2521
    %v2802 = vsel %vm936, %v2786, %v2523
    %v2803 = vsel %vm936, %v2787, %v2525
    %v2804 = vsel %vm936, %v2788, %v2527
    %v2805 = vsel %vm936, %v2789, %v2529
    %v2806 = vsel %vm936, %v2790, %v2531
    %v2807 = vsel %vm936, %v2791, %v2533
    %v2808 = vsel %vm936, %v2792, %v2535
    %v2809 = vsel %vm936, %v2793, %v2537
    %v2810 = vsel %vm1853, %v2794, %v2571
    %v2811 = vsel %vm1853, %v2795, %v2573
    %v2812 = vsel %vm1853, %v2796, %v2575
    %v2813 = vsel %vm1853, %v2797, %v2577
    %v2814 = vsel %vm1853, %v2798, %v2579
    %v2815 = vsel %vm1853, %v2799, %v2581
    %v2816 = vsel %vm1853, %v2800, %v2583
    %v2817 = vsel %vm1853, %v2801, %v2585
    %v2818 = vsel %vm1853, %v2802, %v2587
    %v2819 = vsel %vm1853, %v2803, %v2589
    %v2820 = vsel %vm1853, %v2804, %v2591
    %v2821 = vsel %vm1853, %v2805, %v2593
    %v2822 = vsel %vm1853, %v2806, %v2595
    %v2823 = vsel %vm1853, %v2807, %v2597
    %v2824 = vsel %vm1853, %v2808, %v2599
    %v2825 = vsel %vm1853, %v2809, %v2601
    %v2826 = vsel %vm1870, %v2810, %v2635
    %v2827 = vsel %vm1870, %v2811, %v2637
    %v2828 = vsel %vm1870, %v2812, %v2639
    %v2829 = vsel %vm1870, %v2813, %v2641
    %v2830 = vsel %vm1870, %v2814, %v2643
    %v2831 = vsel %vm1870, %v2815, %v2645
    %v2832 = vsel %vm1870, %v2816, %v2647
    %v2833 = vsel %vm1870, %v2817, %v2649
    %v2834 = vsel %vm1870, %v2818, %v2651
    %v2835 = vsel %vm1870, %v2819, %v2653
    %v2836 = vsel %vm1870, %v2820, %v2655
    %v2837 = vsel %vm1870, %v2821, %v2657
    %v2838 = vsel %vm1870, %v2822, %v2659
    %v2839 = vsel %vm1870, %v2823, %v2661
    %v2840 = vsel %vm1870, %v2824, %v2663
    %v2841 = vsel %vm1870, %v2825, %v2665
    %v2842 = vsel %vm1887, %v2826, %v2699
    %v2843 = vsel %vm1887, %v2827, %v2701
    %v2844 = vsel %vm1887, %v2828, %v2703
    %v2845 = vsel %vm1887, %v2829, %v2705
    %v2846 = vsel %vm1887, %v2830, %v2707
    %v2847 = vsel %vm1887, %v2831, %v2709
    %v2848 = vsel %vm1887, %v2832, %v2711
    %v2849 = vsel %vm1887, %v2833, %v2713
    %v2850 = vsel %vm1887, %v2834, %v2715
    %v2851 = vsel %vm1887, %v2835, %v2717
    %v2852 = vsel %vm1887, %v2836, %v2719
    %v2853 = vsel %vm1887, %v2837, %v2721
    %v2854 = vsel %vm1887, %v2838, %v2723
    %v2855 = vsel %vm1887, %v2839, %v2725
    %v2856 = vsel %vm1887, %v2840, %v2727
    %v2857 = vsel %vm1887, %v2841, %v2729
    %v2858 = vld [vmem:[%s5] sm:$0xff]
    %v2859 = vld [vmem:[%s5 + $0x8] sm:$0xff]
    %v2860 = vld [vmem:[%s5 + $0x10] sm:$0xff]
    %v2861 = vld [vmem:[%s5 + $0x18] sm:$0xff]
    %v2862 = vld [vmem:[%s5 + $0x20] sm:$0xff]
    %v2863 = vld [vmem:[%s5 + $0x28] sm:$0xff]
    %v2864 = vld [vmem:[%s5 + $0x30] sm:$0xff]
    %v2865 = vld [vmem:[%s5 + $0x38] sm:$0xff]
    %v2866 = vld [vmem:[%s5 + $0x40] sm:$0xff]
    %v2867 = vld [vmem:[%s5 + $0x48] sm:$0xff]
    %v2868 = vld [vmem:[%s5 + $0x50] sm:$0xff]
    %v2869 = vld [vmem:[%s5 + $0x58] sm:$0xff]
    %v2870 = vld [vmem:[%s5 + $0x60] sm:$0xff]
    %v2871 = vld [vmem:[%s5 + $0x68] sm:$0xff]
    %v2872 = vld [vmem:[%s5 + $0x70] sm:$0xff]
    %v2873 = vld [vmem:[%s5 + $0x78] sm:$0xff]
    %v2874 = vld [vmem:[%s5 + $0x80] sm:$0xff]
    %v2875 = vld [vmem:[%s5 + $0x88] sm:$0xff]
    %v2876 = vld [vmem:[%s6] sm:$0x1]
    %v2878 = vlaneseq
    %v2879 = vshrl.u32 %v2878, 7
    %v2880 = vsub.s32 0, %v2879
    %v2881 = vrot.slane %v2876, %v2880
    %v2884 = vsel %vm87, %v2282, 0
    %v2887 = vsel %vm87, %v2283, 0
    %v2890 = vsel %vm87, %v2284, 0
    %v2893 = vsel %vm87, %v2285, 0
    %v2896 = vsel %vm87, %v2286, 0
    %v2899 = vsel %vm87, %v2287, 0
    %v2902 = vsel %vm87, %v2288, 0
    %v2905 = vsel %vm87, %v2289, 0
    %v2908 = vsel %vm87, %v2290, 0
    %v2911 = vsel %vm87, %v2291, 0
    %v2914 = vsel %vm87, %v2292, 0
    %v2917 = vsel %vm87, %v2293, 0
    %v2920 = vsel %vm87, %v2294, 0
    %v2923 = vsel %vm87, %v2295, 0
    %v2926 = vsel %vm87, %v2296, 0
    %v2929 = vsel %vm87, %v2297, 0
    %2931 = vmatprep.subr.mxu0 0.0
    %2932 = vmatpush1.msra.mxu0 %v2873
    %2933 = vmatprep.subr.mxu0 0.0
    %2934 = vmatpush1.msra.mxu0 %v2872
    %2935 = vmatprep.subr.mxu0 0.0
    %2936 = vmatpush1.msra.mxu0 %v2871
    %2937 = vmatprep.subr.mxu0 0.0
    %2938 = vmatpush1.msra.mxu0 %v2870
    %2939 = vmatprep.subr.mxu0 0.0
    %2940 = vmatpush1.msra.mxu0 %v2869
    %2941 = vmatprep.subr.mxu0 0.0
    %2942 = vmatpush1.msra.mxu0 %v2868
    %2943 = vmatprep.subr.mxu0 0.0
    %2944 = vmatpush1.msra.mxu0 %v2867
    %2945 = vmatprep.subr.mxu0 0.0
    %2946 = vmatpush1.msra.mxu0 %v2866
    %2947 = vmatprep.subr.mxu0 0.0
    %2948 = vmatpush1.msra.mxu0 %v2865
    %2949 = vmatprep.subr.mxu0 0.0
    %2950 = vmatpush1.msra.mxu0 %v2864
    %2951 = vmatprep.subr.mxu0 0.0
    %2952 = vmatpush1.msra.mxu0 %v2863
    %2953 = vmatprep.subr.mxu0 0.0
    %2954 = vmatpush1.msra.mxu0 %v2862
    %2955 = vmatprep.subr.mxu0 0.0
    %2956 = vmatpush1.msra.mxu0 %v2861
    %2957 = vmatprep.subr.mxu0 0.0
    %2958 = vmatpush1.msra.mxu0 %v2860
    %2959 = vmatprep.subr.mxu0 0.0
    %2960 = vmatpush1.msra.mxu0 %v2859
    %2961 = vmatprep.subr.mxu0 0.0
    %2962 = vmatpush1.msra.mxu0 %v2858
    %2963 = vmatprep.subr.mxu0 0.0
    %2964 = vmatpush2.msra.mxu0 0.0
    %2965 = vmatprep.subr.mxu0 0.0
    %2966 = vmatpush2.msra.mxu0 0.0
    %2967 = vmatprep.subr.mxu0 0.0
    %2968 = vmatpush2.msra.mxu0 0.0
    %2969 = vmatprep.subr.mxu0 0.0
    %2970 = vmatpush2.msra.mxu0 0.0
    %2971 = vmatprep.subr.mxu0 0.0
    %2972 = vmatpush2.msra.mxu0 0.0
    %2973 = vmatprep.subr.mxu0 0.0
    %2974 = vmatpush2.msra.mxu0 0.0
    %2975 = vmatprep.subr.mxu0 0.0
    %2976 = vmatpush2.msra.mxu0 0.0
    %2977 = vmatprep.subr.mxu0 0.0
    %2978 = vmatpush2.msra.mxu0 0.0
    %2979 = vmatprep.subr.mxu0 0.0
    %2980 = vmatpush2.msra.mxu0 0.0
    %2981 = vmatprep.subr.mxu0 0.0
    %2982 = vmatpush2.msra.mxu0 0.0
    %2983 = vmatprep.subr.mxu0 0.0
    %2984 = vmatpush2.msra.mxu0 0.0
    %2985 = vmatprep.subr.mxu0 0.0
    %2986 = vmatpush2.msra.mxu0 0.0
    %2987 = vmatprep.subr.mxu0 0.0
    %2988 = vmatpush2.msra.mxu0 0.0
    %2989 = vmatprep.subr.mxu0 0.0
    %2990 = vmatpush2.msra.mxu0 0.0
    %2991 = vmatprep.subr.mxu0 0.0
    %2992 = vmatpush2.msra.mxu0 %v2875
    %2993 = vmatprep.subr.mxu0 0.0
    %2994 = vmatpush2.msra.mxu0 %v2874
    %2995 = vmatprep.mubr.f32.mxu0 %v2884
    %2996 = vmatmul.mubr.f32.gmra.mxu0 %v2842
    %v2997 = vpop.f32.mrf.mxu0
    %v2998 = vadd.f32 %v2881, %v2997
    %v2999 = vpop.f32.mrf.mxu0
    %3000 = vmatprep.mubr.f32.mxu0 %v2887
    %3001 = vmatmul.mubr.f32.gmra.mxu0 %v2843
    %v3002 = vpop.f32.mrf.mxu0
    %v3003 = vadd.f32 %v2881, %v3002
    %v3004 = vpop.f32.mrf.mxu0
    %3005 = vmatprep.mubr.f32.mxu0 %v2890
    %3006 = vmatmul.mubr.f32.gmra.mxu0 %v2844
    %v3007 = vpop.f32.mrf.mxu0
    %v3008 = vadd.f32 %v2881, %v3007
    %v3009 = vpop.f32.mrf.mxu0
    %3010 = vmatprep.mubr.f32.mxu0 %v2893
    %3011 = vmatmul.mubr.f32.gmra.mxu0 %v2845
    %v3012 = vpop.f32.mrf.mxu0
    %v3013 = vadd.f32 %v2881, %v3012
    %v3014 = vpop.f32.mrf.mxu0
    %3015 = vmatprep.mubr.f32.mxu0 %v2896
    %3016 = vmatmul.mubr.f32.gmra.mxu0 %v2846
    %v3017 = vpop.f32.mrf.mxu0
    %v3018 = vadd.f32 %v2881, %v3017
    %v3019 = vpop.f32.mrf.mxu0
    %3020 = vmatprep.mubr.f32.mxu0 %v2899
    %3021 = vmatmul.mubr.f32.gmra.mxu0 %v2847
    %v3022 = vpop.f32.mrf.mxu0
    %v3023 = vadd.f32 %v2881, %v3022
    %v3024 = vpop.f32.mrf.mxu0
    %3025 = vmatprep.mubr.f32.mxu0 %v2902
    %3026 = vmatmul.mubr.f32.gmra.mxu0 %v2848
    %v3027 = vpop.f32.mrf.mxu0
    %v3028 = vadd.f32 %v2881, %v3027
    %v3029 = vpop.f32.mrf.mxu0
    %3030 = vmatprep.mubr.f32.mxu0 %v2905
    %3031 = vmatmul.mubr.f32.gmra.mxu0 %v2849
    %v3032 = vpop.f32.mrf.mxu0
    %v3033 = vpop.f32.mrf.mxu0
    %3034 = vmatprep.mubr.f32.mxu0 %v2908
    %3035 = vmatmul.mubr.f32.gmra.mxu0 %v2850
    %v3036 = vpop.f32.mrf.mxu0
    %v3037 = vadd.f32 %v2881, %v3036
    %v3038 = vpop.f32.mrf.mxu0
    %3039 = vmatprep.mubr.f32.mxu0 %v2911
    %3040 = vmatmul.mubr.f32.gmra.mxu0 %v2851
    %v3041 = vpop.f32.mrf.mxu0
    %v3042 = vadd.f32 %v2881, %v3041
    %v3043 = vpop.f32.mrf.mxu0
    %3044 = vmatprep.mubr.f32.mxu0 %v2914
    %3045 = vmatmul.mubr.f32.gmra.mxu0 %v2852
    %v3046 = vpop.f32.mrf.mxu0
    %v3047 = vadd.f32 %v2881, %v3046
    %v3048 = vpop.f32.mrf.mxu0
    %3049 = vmatprep.mubr.f32.mxu0 %v2917
    %3050 = vmatmul.mubr.f32.gmra.mxu0 %v2853
    %v3051 = vpop.f32.mrf.mxu0
    %v3052 = vadd.f32 %v2881, %v3051
    %v3053 = vpop.f32.mrf.mxu0
    %3054 = vmatprep.mubr.f32.mxu0 %v2920
    %3055 = vmatmul.mubr.f32.gmra.mxu0 %v2854
    %v3056 = vpop.f32.mrf.mxu0
    %v3057 = vadd.f32 %v2881, %v3056
    %v3058 = vpop.f32.mrf.mxu0
    %3059 = vmatprep.mubr.f32.mxu0 %v2923
    %3060 = vmatmul.mubr.f32.gmra.mxu0 %v2855
    %v3061 = vpop.f32.mrf.mxu0
    %v3062 = vadd.f32 %v2881, %v3061
    %v3063 = vpop.f32.mrf.mxu0
    %3064 = vmatprep.mubr.f32.mxu0 %v2926
    %3065 = vmatmul.mubr.f32.gmra.mxu0 %v2856
    %v3066 = vpop.f32.mrf.mxu0
    %v3067 = vadd.f32 %v2881, %v3066
    %v3068 = vpop.f32.mrf.mxu0
    %3069 = vmatprep.mubr.f32.mxu0 %v2929
    %3070 = vmatmul.mubr.f32.gmra.mxu0 %v2857
    %v3071 = vpop.f32.mrf.mxu0
    %v3072 = vpop.f32.mrf.mxu0
    %3073 = vdwg.mxu0
    %v3074 = vmax.f32 %v2998, 0.0
    %v3075 = vmax.f32 %v3003, 0.0
    %v3076 = vmax.f32 %v3008, 0.0
    %v3077 = vmax.f32 %v3013, 0.0
    %v3078 = vmax.f32 %v3018, 0.0
    %v3079 = vmax.f32 %v3023, 0.0
    %v3080 = vmax.f32 %v3028, 0.0
    %v3081 = vmax.f32 %v3037, 0.0
    %v3082 = vmax.f32 %v3042, 0.0
    %v3083 = vmax.f32 %v3047, 0.0
    %v3084 = vmax.f32 %v3052, 0.0
    %v3085 = vmax.f32 %v3057, 0.0
    %v3086 = vmax.f32 %v3062, 0.0
    %v3087 = vmax.f32 %v3067, 0.0
    %vm3088 = vcmask 59392
    %v3089 = vsel %vm3088, %v3074, -inf
    %v3090 = vsel %vm3088, %v3075, -inf
    %v3091 = vsel %vm3088, %v3076, -inf
    %v3092 = vmax.f32 %v3089, %v3091
    %v3093 = vmax.f32 %v3092, %v3090
    %v3094 = vrot.slane %v3093, 4
    %v3095 = vmax.f32 %v3093, %v3094
    %v3096 = vrot.slane %v3095, 2
    %v3097 = vmax.f32 %v3095, %v3096
    %v3098 = vrot.slane %v3097, 1
    %v3099 = vmax.f32 %v3097, %v3098
    %v3100 = vsel %vm3088, %v3081, -inf
    %v3101 = vsel %vm3088, %v3082, -inf
    %v3102 = vsel %vm3088, %v3083, -inf
    %v3103 = vmax.f32 %v3100, %v3102
    %v3104 = vmax.f32 %v3103, %v3101
    %v3105 = vrot.slane %v3104, 4
    %v3106 = vmax.f32 %v3104, %v3105
    %v3107 = vrot.slane %v3106, 2
    %v3108 = vmax.f32 %v3106, %v3107
    %v3109 = vrot.slane %v3108, 1
    %v3110 = vmax.f32 %v3108, %v3109
    %vm3111 = vcmask 61442
    %v3112 = vsel %vm3111, %v3074, -inf
    %v3113 = vsel %vm3111, %v3075, -inf
    %v3114 = vsel %vm3111, %v3076, -inf
    %v3115 = vmax.f32 %v3112, %v3114
    %v3116 = vmax.f32 %v3115, %v3113
    %v3117 = vrot.slane %v3116, 4
    %v3118 = vmax.f32 %v3116, %v3117
    %v3119 = vrot.slane %v3118, 2
    %v3120 = vmax.f32 %v3118, %v3119
    %v3121 = vrot.slane %v3120, 1
    %v3122 = vmax.f32 %v3120, %v3121
    %v3123 = vsel %vm3111, %v3081, -inf
    %v3124 = vsel %vm3111, %v3082, -inf
    %v3125 = vsel %vm3111, %v3083, -inf
    %v3126 = vmax.f32 %v3123, %v3125
    %v3127 = vmax.f32 %v3126, %v3124
    %v3128 = vrot.slane %v3127, 4
    %v3129 = vmax.f32 %v3127, %v3128
    %v3130 = vrot.slane %v3129, 2
    %v3131 = vmax.f32 %v3129, %v3130
    %v3132 = vrot.slane %v3131, 1
    %v3133 = vmax.f32 %v3131, %v3132
    %vm3134 = vcmask 63492
    %v3135 = vsel %vm3134, %v3074, -inf
    %v3136 = vsel %vm3134, %v3075, -inf
    %v3137 = vsel %vm3134, %v3076, -inf
    %v3138 = vmax.f32 %v3135, %v3137
    %v3139 = vmax.f32 %v3138, %v3136
    %v3140 = vrot.slane %v3139, 4
    %v3141 = vmax.f32 %v3139, %v3140
    %v3142 = vrot.slane %v3141, 2
    %v3143 = vmax.f32 %v3141, %v3142
    %v3144 = vrot.slane %v3143, 1
    %v3145 = vmax.f32 %v3143, %v3144
    %v3146 = vsel %vm3134, %v3081, -inf
    %v3147 = vsel %vm3134, %v3082, -inf
    %v3148 = vsel %vm3134, %v3083, -inf
    %v3149 = vmax.f32 %v3146, %v3148
    %v3150 = vmax.f32 %v3149, %v3147
    %v3151 = vrot.slane %v3150, 4
    %v3152 = vmax.f32 %v3150, %v3151
    %v3153 = vrot.slane %v3152, 2
    %v3154 = vmax.f32 %v3152, %v3153
    %v3155 = vrot.slane %v3154, 1
    %v3156 = vmax.f32 %v3154, %v3155
    %v3157 = vsel %vm3088, %v3077, -inf
    %v3158 = vsel %vm3088, %v3078, -inf
    %v3159 = vmax.f32 %v3091, %v3158
    %v3160 = vmax.f32 %v3159, %v3157
    %v3161 = vrot.slane %v3160, 4
    %v3162 = vmax.f32 %v3160, %v3161
    %v3163 = vrot.slane %v3162, 2
    %v3164 = vmax.f32 %v3162, %v3163
    %v3165 = vrot.slane %v3164, 1
    %v3166 = vmax.f32 %v3164, %v3165
    %v3167 = vsel %vm3088, %v3084, -inf
    %v3168 = vsel %vm3088, %v3085, -inf
    %v3169 = vmax.f32 %v3102, %v3168
    %v3170 = vmax.f32 %v3169, %v3167
    %v3171 = vrot.slane %v3170, 4
    %v3172 = vmax.f32 %v3170, %v3171
    %v3173 = vrot.slane %v3172, 2
    %v3174 = vmax.f32 %v3172, %v3173
    %v3175 = vrot.slane %v3174, 1
    %v3176 = vmax.f32 %v3174, %v3175
    %v3177 = vsel %vm3111, %v3077, -inf
    %v3178 = vsel %vm3111, %v3078, -inf
    %v3179 = vmax.f32 %v3114, %v3178
    %v3180 = vmax.f32 %v3179, %v3177
    %v3181 = vrot.slane %v3180, 4
    %v3182 = vmax.f32 %v3180, %v3181
    %v3183 = vrot.slane %v3182, 2
    %v3184 = vmax.f32 %v3182, %v3183
    %v3185 = vrot.slane %v3184, 1
    %v3186 = vmax.f32 %v3184, %v3185
    %v3187 = vsel %vm3111, %v3084, -inf
    %v3188 = vsel %vm3111, %v3085, -inf
    %v3189 = vmax.f32 %v3125, %v3188
    %v3190 = vmax.f32 %v3189, %v3187
    %v3191 = vrot.slane %v3190, 4
    %v3192 = vmax.f32 %v3190, %v3191
    %v3193 = vrot.slane %v3192, 2
    %v3194 = vmax.f32 %v3192, %v3193
    %v3195 = vrot.slane %v3194, 1
    %v3196 = vmax.f32 %v3194, %v3195
    %v3197 = vsel %vm3134, %v3077, -inf
    %v3198 = vsel %vm3134, %v3078, -inf
    %v3199 = vmax.f32 %v3137, %v3198
    %v3200 = vmax.f32 %v3199, %v3197
    %v3201 = vrot.slane %v3200, 4
    %v3202 = vmax.f32 %v3200, %v3201
    %v3203 = vrot.slane %v3202, 2
    %v3204 = vmax.f32 %v3202, %v3203
    %v3205 = vrot.slane %v3204, 1
    %v3206 = vmax.f32 %v3204, %v3205
    %v3207 = vsel %vm3134, %v3084, -inf
    %v3208 = vsel %vm3134, %v3085, -inf
    %v3209 = vmax.f32 %v3148, %v3208
    %v3210 = vmax.f32 %v3209, %v3207
    %v3211 = vrot.slane %v3210, 4
    %v3212 = vmax.f32 %v3210, %v3211
    %v3213 = vrot.slane %v3212, 2
    %v3214 = vmax.f32 %v3212, %v3213
    %v3215 = vrot.slane %v3214, 1
    %v3216 = vmax.f32 %v3214, %v3215
    %v3217 = vsel %vm3088, %v3079, -inf
    %v3218 = vsel %vm3088, %v3080, -inf
    %v3219 = vmax.f32 %v3158, %v3218
    %v3220 = vmax.f32 %v3219, %v3217
    %v3221 = vrot.slane %v3220, 4
    %v3222 = vmax.f32 %v3220, %v3221
    %v3223 = vrot.slane %v3222, 2
    %v3224 = vmax.f32 %v3222, %v3223
    %v3225 = vrot.slane %v3224, 1
    %v3226 = vmax.f32 %v3224, %v3225
    %v3227 = vsel %vm3088, %v3086, -inf
    %v3228 = vsel %vm3088, %v3087, -inf
    %v3229 = vmax.f32 %v3168, %v3228
    %v3230 = vmax.f32 %v3229, %v3227
    %v3231 = vrot.slane %v3230, 4
    %v3232 = vmax.f32 %v3230, %v3231
    %v3233 = vrot.slane %v3232, 2
    %v3234 = vmax.f32 %v3232, %v3233
    %v3235 = vrot.slane %v3234, 1
    %v3236 = vmax.f32 %v3234, %v3235
    %v3237 = vsel %vm3111, %v3079, -inf
    %v3238 = vsel %vm3111, %v3080, -inf
    %v3239 = vmax.f32 %v3178, %v3238
    %v3240 = vmax.f32 %v3239, %v3237
    %v3241 = vrot.slane %v3240, 4
    %v3242 = vmax.f32 %v3240, %v3241
    %v3243 = vrot.slane %v3242, 2
    %v3244 = vmax.f32 %v3242, %v3243
    %v3245 = vrot.slane %v3244, 1
    %v3246 = vmax.f32 %v3244, %v3245
    %v3247 = vsel %vm3111, %v3086, -inf
    %v3248 = vsel %vm3111, %v3087, -inf
    %v3249 = vmax.f32 %v3188, %v3248
    %v3250 = vmax.f32 %v3249, %v3247
    %v3251 = vrot.slane %v3250, 4
    %v3252 = vmax.f32 %v3250, %v3251
    %v3253 = vrot.slane %v3252, 2
    %v3254 = vmax.f32 %v3252, %v3253
    %v3255 = vrot.slane %v3254, 1
    %v3256 = vmax.f32 %v3254, %v3255
    %v3257 = vsel %vm3134, %v3079, -inf
    %v3258 = vsel %vm3134, %v3080, -inf
    %v3259 = vmax.f32 %v3198, %v3258
    %v3260 = vmax.f32 %v3259, %v3257
    %v3261 = vrot.slane %v3260, 4
    %v3262 = vmax.f32 %v3260, %v3261
    %v3263 = vrot.slane %v3262, 2
    %v3264 = vmax.f32 %v3262, %v3263
    %v3265 = vrot.slane %v3264, 1
    %v3266 = vmax.f32 %v3264, %v3265
    %v3267 = vsel %vm3134, %v3086, -inf
    %v3268 = vsel %vm3134, %v3087, -inf
    %v3269 = vmax.f32 %v3208, %v3268
    %v3270 = vmax.f32 %v3269, %v3267
    %v3271 = vrot.slane %v3270, 4
    %v3272 = vmax.f32 %v3270, %v3271
    %v3273 = vrot.slane %v3272, 2
    %v3274 = vmax.f32 %v3272, %v3273
    %v3275 = vrot.slane %v3274, 1
    %v3276 = vmax.f32 %v3274, %v3275
    %vm3279 = vcmask 1041409
    %v3280 = vsel %vm3279, %v3110, %v3099
    %v3284 = vsel %vm3279, %v3133, %v3122
    %3285 = vrot.lane.b32.xlu0 %v3284, 8
    %v3286 = vpop.permute.xlu0 %3285
    %v3290 = vsel %vm3279, %v3156, %v3145
    %3291 = vrot.lane.b32.xlu0 %v3290, 16
    %v3292 = vpop.permute.xlu0 %3291
    %v3296 = vsel %vm3279, %v3176, %v3166
    %3297 = vrot.lane.b32.xlu0 %v3296, 24
    %v3298 = vpop.permute.xlu0 %3297
    %v3302 = vsel %vm3279, %v3196, %v3186
    %3303 = vrot.lane.b32.xlu0 %v3302, 32
    %v3304 = vpop.permute.xlu0 %3303
    %v3308 = vsel %vm3279, %v3216, %v3206
    %3309 = vrot.lane.b32.xlu0 %v3308, 40
    %v3310 = vpop.permute.xlu0 %3309
    %v3314 = vsel %vm3279, %v3236, %v3226
    %3315 = vrot.lane.b32.xlu0 %v3314, 48
    %v3316 = vpop.permute.xlu0 %3315
    %v3320 = vsel %vm3279, %v3256, %v3246
    %3321 = vrot.lane.b32.xlu0 %v3320, 56
    %v3322 = vpop.permute.xlu0 %3321
    %v3326 = vsel %vm3279, %v3276, %v3266
    %3327 = vrot.lane.b32.xlu0 %v3326, 64
    %v3328 = vpop.permute.xlu0 %3327
    %v3330 = vsel %vm45, %v3280, %v3286
    %v3331 = vsel %vm87, %v3330, %v3292
    %v3332 = vsel %vm851, %v3331, %v3298
    %v3333 = vsel %vm868, %v3332, %v3304
    %v3334 = vsel %vm885, %v3333, %v3310
    %v3335 = vsel %vm902, %v3334, %v3316
    %v3336 = vsel %vm919, %v3335, %v3322
    %v3337 = vsel %vm936, %v3336, %v3328
    %v3338 = vld [vmem:[%s7] sm:$0xff]
    %v3339 = vld [vmem:[%s7 + $0x8] sm:$0xff]
    %v3340 = vld [vmem:[%s7 + $0x10] sm:$0xff]
    %v3341 = vld [vmem:[%s7 + $0x18] sm:$0xff]
    %v3342 = vld [vmem:[%s7 + $0x20] sm:$0xff]
    %v3343 = vld [vmem:[%s7 + $0x28] sm:$0xff]
    %v3344 = vld [vmem:[%s7 + $0x30] sm:$0xff]
    %v3345 = vld [vmem:[%s7 + $0x38] sm:$0xff]
    %v3346 = vld [vmem:[%s7 + $0x40] sm:$0xff]
    %v3347 = vld [vmem:[%s8] sm:$0x1]
    %v3349 = vlaneseq
    %v3350 = vshrl.u32 %v3349, 7
    %v3351 = vsub.s32 0, %v3350
    %v3352 = vrot.slane %v3347, %v3351
    %v3355 = vsel %vm969, %v3337, 0
    %3357 = vmatprep.subr.mxu0 0.0
    %3358 = vmatpush1.msra.mxu0 0.0
    %3359 = vmatprep.subr.mxu0 0.0
    %3360 = vmatpush1.msra.mxu0 0.0
    %3361 = vmatprep.subr.mxu0 0.0
    %3362 = vmatpush1.msra.mxu0 0.0
    %3363 = vmatprep.subr.mxu0 0.0
    %3364 = vmatpush1.msra.mxu0 0.0
    %3365 = vmatprep.subr.mxu0 0.0
    %3366 = vmatpush1.msra.mxu0 0.0
    %3367 = vmatprep.subr.mxu0 0.0
    %3368 = vmatpush1.msra.mxu0 0.0
    %3369 = vmatprep.subr.mxu0 0.0
    %3370 = vmatpush1.msra.mxu0 0.0
    %3371 = vmatprep.subr.mxu0 0.0
    %3372 = vmatpush1.msra.mxu0 %v3346
    %3373 = vmatprep.subr.mxu0 0.0
    %3374 = vmatpush1.msra.mxu0 %v3345
    %3375 = vmatprep.subr.mxu0 0.0
    %3376 = vmatpush1.msra.mxu0 %v3344
    %3377 = vmatprep.subr.mxu0 0.0
    %3378 = vmatpush1.msra.mxu0 %v3343
    %3379 = vmatprep.subr.mxu0 0.0
    %3380 = vmatpush1.msra.mxu0 %v3342
    %3381 = vmatprep.subr.mxu0 0.0
    %3382 = vmatpush1.msra.mxu0 %v3341
    %3383 = vmatprep.subr.mxu0 0.0
    %3384 = vmatpush1.msra.mxu0 %v3340
    %3385 = vmatprep.subr.mxu0 0.0
    %3386 = vmatpush1.msra.mxu0 %v3339
    %3387 = vmatprep.subr.mxu0 0.0
    %3388 = vmatpush1.msra.mxu0 %v3338
    %3389 = vmatprep.subr.mxu0 0.0
    %3390 = vmatpush2.msra.mxu0 0.0
    %3391 = vmatprep.subr.mxu0 0.0
    %3392 = vmatpush2.msra.mxu0 0.0
    %3393 = vmatprep.subr.mxu0 0.0
    %3394 = vmatpush2.msra.mxu0 0.0
    %3395 = vmatprep.subr.mxu0 0.0
    %3396 = vmatpush2.msra.mxu0 0.0
    %3397 = vmatprep.subr.mxu0 0.0
    %3398 = vmatpush2.msra.mxu0 0.0
    %3399 = vmatprep.subr.mxu0 0.0
    %3400 = vmatpush2.msra.mxu0 0.0
    %3401 = vmatprep.subr.mxu0 0.0
    %3402 = vmatpush2.msra.mxu0 0.0
    %3403 = vmatprep.subr.mxu0 0.0
    %3404 = vmatpush2.msra.mxu0 0.0
    %3405 = vmatprep.subr.mxu0 0.0
    %3406 = vmatpush2.msra.mxu0 0.0
    %3407 = vmatprep.subr.mxu0 0.0
    %3408 = vmatpush2.msra.mxu0 0.0
    %3409 = vmatprep.subr.mxu0 0.0
    %3410 = vmatpush2.msra.mxu0 0.0
    %3411 = vmatprep.subr.mxu0 0.0
    %3412 = vmatpush2.msra.mxu0 0.0
    %3413 = vmatprep.subr.mxu0 0.0
    %3414 = vmatpush2.msra.mxu0 0.0
    %3415 = vmatprep.subr.mxu0 0.0
    %3416 = vmatpush2.msra.mxu0 0.0
    %3417 = vmatprep.subr.mxu0 0.0
    %3418 = vmatpush2.msra.mxu0 0.0
    %3419 = vmatprep.subr.mxu0 0.0
    %3420 = vmatpush2.msra.mxu0 0.0
    %3421 = vmatprep.mubr.f32.mxu0 0.0
    %3422 = vmatmul.mubr.f32.gmra.mxu0 %v3355
    %v3423 = vpop.f32.mrf.mxu0
    %v3424 = vadd.f32 %v3352, %v3423
    %v3425 = vpop.f32.mrf.mxu0
    %3426 = vdwg.mxu0
    %v3427 = vmax.f32 %v3424, 0.0
    %v3428 = vld [vmem:[%s9] sm:$0xff]
    %v3429 = vld [vmem:[%s9 + $0x8] sm:$0xff]
    %v3430 = vld [vmem:[%s9 + $0x10] sm:$0xff]
    %v3431 = vld [vmem:[%s9 + $0x18] sm:$0xff]
    %v3432 = vld [vmem:[%s10] sm:$0x1]
    %v3434 = vlaneseq
    %v3435 = vshrl.u32 %v3434, 7
    %v3436 = vsub.s32 0, %v3435
    %v3437 = vrot.slane %v3432, %v3436
    %v3440 = vsel %vm868, %v3427, 0
    %3442 = vmatprep.subr.mxu0 0.0
    %3443 = vmatpush1.msra.mxu0 0.0
    %3444 = vmatprep.subr.mxu0 0.0
    %3445 = vmatpush1.msra.mxu0 0.0
    %3446 = vmatprep.subr.mxu0 0.0
    %3447 = vmatpush1.msra.mxu0 0.0
    %3448 = vmatprep.subr.mxu0 0.0
    %3449 = vmatpush1.msra.mxu0 0.0
    %3450 = vmatprep.subr.mxu0 0.0
    %3451 = vmatpush1.msra.mxu0 0.0
    %3452 = vmatprep.subr.mxu0 0.0
    %3453 = vmatpush1.msra.mxu0 0.0
    %3454 = vmatprep.subr.mxu0 0.0
    %3455 = vmatpush1.msra.mxu0 0.0
    %3456 = vmatprep.subr.mxu0 0.0
    %3457 = vmatpush1.msra.mxu0 0.0
    %3458 = vmatprep.subr.mxu0 0.0
    %3459 = vmatpush1.msra.mxu0 0.0
    %3460 = vmatprep.subr.mxu0 0.0
    %3461 = vmatpush1.msra.mxu0 0.0
    %3462 = vmatprep.subr.mxu0 0.0
    %3463 = vmatpush1.msra.mxu0 0.0
    %3464 = vmatprep.subr.mxu0 0.0
    %3465 = vmatpush1.msra.mxu0 0.0
    %3466 = vmatprep.subr.mxu0 0.0
    %3467 = vmatpush1.msra.mxu0 %v3431
    %3468 = vmatprep.subr.mxu0 0.0
    %3469 = vmatpush1.msra.mxu0 %v3430
    %3470 = vmatprep.subr.mxu0 0.0
    %3471 = vmatpush1.msra.mxu0 %v3429
    %3472 = vmatprep.subr.mxu0 0.0
    %3473 = vmatpush1.msra.mxu0 %v3428
    %3474 = vmatprep.subr.mxu0 0.0
    %3475 = vmatpush2.msra.mxu0 0.0
    %3476 = vmatprep.subr.mxu0 0.0
    %3477 = vmatpush2.msra.mxu0 0.0
    %3478 = vmatprep.subr.mxu0 0.0
    %3479 = vmatpush2.msra.mxu0 0.0
    %3480 = vmatprep.subr.mxu0 0.0
    %3481 = vmatpush2.msra.mxu0 0.0
    %3482 = vmatprep.subr.mxu0 0.0
    %3483 = vmatpush2.msra.mxu0 0.0
    %3484 = vmatprep.subr.mxu0 0.0
    %3485 = vmatpush2.msra.mxu0 0.0
    %3486 = vmatprep.subr.mxu0 0.0
    %3487 = vmatpush2.msra.mxu0 0.0
    %3488 = vmatprep.subr.mxu0 0.0
    %3489 = vmatpush2.msra.mxu0 0.0
    %3490 = vmatprep.subr.mxu0 0.0
    %3491 = vmatpush2.msra.mxu0 0.0
    %3492 = vmatprep.subr.mxu0 0.0
    %3493 = vmatpush2.msra.mxu0 0.0
    %3494 = vmatprep.subr.mxu0 0.0
    %3495 = vmatpush2.msra.mxu0 0.0
    %3496 = vmatprep.subr.mxu0 0.0
    %3497 = vmatpush2.msra.mxu0 0.0
    %3498 = vmatprep.subr.mxu0 0.0
    %3499 = vmatpush2.msra.mxu0 0.0
    %3500 = vmatprep.subr.mxu0 0.0
    %3501 = vmatpush2.msra.mxu0 0.0
    %3502 = vmatprep.subr.mxu0 0.0
    %3503 = vmatpush2.msra.mxu0 0.0
    %3504 = vmatprep.subr.mxu0 0.0
    %3505 = vmatpush2.msra.mxu0 0.0
    %3506 = vmatprep.mubr.f32.mxu0 0.0
    %3507 = vmatmul.mubr.f32.gmra.mxu0 %v3440
    %v3508 = vpop.f32.mrf.mxu0
    %v3509 = vadd.f32 %v3437, %v3508
    %v3510 = vpop.f32.mrf.mxu0
    %3511 = vdwg.mxu0
    %v3512 = vmax.f32 %v3509, 0.0
    %v3513 = vld [vmem:[%s11] sm:$0xff]
    %v3514 = vld [vmem:[%s11 + $0x8] sm:$0xff]
    %v3515 = vld [vmem:[%s11 + $0x10] sm:$0xff]
    %v3516 = vld [vmem:[%s11 + $0x18] sm:$0xff]
    %v3517 = vld [vmem:[%s12] sm:$0x1]
    %v3519 = vlaneseq
    %v3520 = vshrl.u32 %v3519, 7
    %v3521 = vsub.s32 0, %v3520
    %v3522 = vrot.slane %v3517, %v3521
    %v3525 = vsel %vm868, %v3512, 0
    %3527 = vmatprep.subr.mxu0 0.0
    %3528 = vmatpush1.msra.mxu0 0.0
    %3529 = vmatprep.subr.mxu0 0.0
    %3530 = vmatpush1.msra.mxu0 0.0
    %3531 = vmatprep.subr.mxu0 0.0
    %3532 = vmatpush1.msra.mxu0 0.0
    %3533 = vmatprep.subr.mxu0 0.0
    %3534 = vmatpush1.msra.mxu0 0.0
    %3535 = vmatprep.subr.mxu0 0.0
    %3536 = vmatpush1.msra.mxu0 0.0
    %3537 = vmatprep.subr.mxu0 0.0
    %3538 = vmatpush1.msra.mxu0 0.0
    %3539 = vmatprep.subr.mxu0 0.0
    %3540 = vmatpush1.msra.mxu0 0.0
    %3541 = vmatprep.subr.mxu0 0.0
    %3542 = vmatpush1.msra.mxu0 0.0
    %3543 = vmatprep.subr.mxu0 0.0
    %3544 = vmatpush1.msra.mxu0 0.0
    %3545 = vmatprep.subr.mxu0 0.0
    %3546 = vmatpush1.msra.mxu0 0.0
    %3547 = vmatprep.subr.mxu0 0.0
    %3548 = vmatpush1.msra.mxu0 0.0
    %3549 = vmatprep.subr.mxu0 0.0
    %3550 = vmatpush1.msra.mxu0 0.0
    %3551 = vmatprep.subr.mxu0 0.0
    %3552 = vmatpush1.msra.mxu0 %v3516
    %3553 = vmatprep.subr.mxu0 0.0
    %3554 = vmatpush1.msra.mxu0 %v3515
    %3555 = vmatprep.subr.mxu0 0.0
    %3556 = vmatpush1.msra.mxu0 %v3514
    %3557 = vmatprep.subr.mxu0 0.0
    %3558 = vmatpush1.msra.mxu0 %v3513
    %3559 = vmatprep.subr.mxu0 0.0
    %3560 = vmatpush2.msra.mxu0 0.0
    %3561 = vmatprep.subr.mxu0 0.0
    %3562 = vmatpush2.msra.mxu0 0.0
    %3563 = vmatprep.subr.mxu0 0.0
    %3564 = vmatpush2.msra.mxu0 0.0
    %3565 = vmatprep.subr.mxu0 0.0
    %3566 = vmatpush2.msra.mxu0 0.0
    %3567 = vmatprep.subr.mxu0 0.0
    %3568 = vmatpush2.msra.mxu0 0.0
    %3569 = vmatprep.subr.mxu0 0.0
    %3570 = vmatpush2.msra.mxu0 0.0
    %3571 = vmatprep.subr.mxu0 0.0
    %3572 = vmatpush2.msra.mxu0 0.0
    %3573 = vmatprep.subr.mxu0 0.0
    %3574 = vmatpush2.msra.mxu0 0.0
    %3575 = vmatprep.subr.mxu0 0.0
    %3576 = vmatpush2.msra.mxu0 0.0
    %3577 = vmatprep.subr.mxu0 0.0
    %3578 = vmatpush2.msra.mxu0 0.0
    %3579 = vmatprep.subr.mxu0 0.0
    %3580 = vmatpush2.msra.mxu0 0.0
    %3581 = vmatprep.subr.mxu0 0.0
    %3582 = vmatpush2.msra.mxu0 0.0
    %3583 = vmatprep.subr.mxu0 0.0
    %3584 = vmatpush2.msra.mxu0 0.0
    %3585 = vmatprep.subr.mxu0 0.0
    %3586 = vmatpush2.msra.mxu0 0.0
    %3587 = vmatprep.subr.mxu0 0.0
    %3588 = vmatpush2.msra.mxu0 0.0
    %3589 = vmatprep.subr.mxu0 0.0
    %3590 = vmatpush2.msra.mxu0 0.0
    %3591 = vmatprep.mubr.f32.mxu0 0.0
    %3592 = vmatmul.mubr.f32.gmra.mxu0 %v3525
    %v3593 = vpop.f32.mrf.mxu0
    %v3594 = vadd.f32 %v3522, %v3593
    %v3595 = vpop.f32.mrf.mxu0
    %3596 = vdwg.mxu0
    %vm3597 = vcmask 74752
    %3598 = vst.msk [vmem:[#allocation4] sm:$0x3] %vm3597, %v3594
    // Predicated region
    $region54: #{server_model_forward.1} parent=1 // pred_check
      _
    $region55: #{server_model_forward.1} parent=1 // pred_check_branch
      %3600 = sbr.rel (0) target = $region57
    $region56: #{server_model_forward.1} parent=1 // pred_region
      %s3602 = ssub.s32 32, 32
      %3603 = vsyncadd [#allocation5], %s3602
      %s3605 = sshll.u32 [#allocation4], 4
      %s3606 = int_to_ptr.vmem [resolvable:$true] %s3605
      %3608 = dma.vmem_to_hbm [thread:$0]  %s3606, 32, %s13, [#allocation5]
    $region57: #{server_model_forward.1} parent=1 // pred_fallthru
      _
    // Predicated region
    $region58: #{server_model_forward.1} parent=1 // pred_check
      _
    $region59: #{server_model_forward.1} parent=1 // pred_check_branch
      %3610 = sbr.rel (0) target = $region61
    $region60: #{server_model_forward.1} parent=1 // pred_region
      %3611 = dma.done [#allocation5], 32
    $region61: #{server_model_forward.1} parent=1 // pred_fallthru
      _
    %3612 = vsyncpa [#allocation5], 1

</llo_original>
